<compile_context>
chip_gen: v6e
topology: v6e:2x2x1
jax: 0.10.0
libtpu: 0.0.40
codegen_flags: <defaults>
</compile_context>

<pallas_src>
import functools

import jax
import jax.numpy as jnp
from jax.experimental import pallas as pl
from jax.experimental.pallas import tpu as pltpu


STEM_C = 32       # stem conv output channels (EfficientNet-B0 stem width)
BACKBONE_OUT = 3  # per-image logits so that 13 images -> 39 features
ANN_HIDDEN = 97   # H39_97_ANN hidden width
ANN_OUT = 3       # assumed ANN output width


def _round_up(x, m):
    return (x + m - 1) // m * m


def _ceil_div(a, b):
    return -(-a // b)


# ----------------------------------------------------------------------------
# Kernel 1: fused stem conv (3x3 / stride 2 / pad 1) + SiLU + global-avg-pool.
#
# Input x2[b, f, s] is the space-to-depth (block 2) view of the zero-padded
# image: f = (dr, dc, cin) in [0,12), s = p*Q + q flattened spatial.  Output
# pixel (ho, wo) = sum over 4 shifts (sh, sw) of
#   W_shift[(sh,sw)]^T @ x2[:, (ho+sh)*Q + (wo+sw)]
# so each shift is a contiguous lane slice of length MMp starting at sh*Q+sw.
# Invalid flat positions (wo == Wo, or >= Ho*Q) are zeroed by the GAP mask,
# which also carries the 1/(Ho*Wo) averaging factor.
# ----------------------------------------------------------------------------
def _conv_silu_gap_kernel(x_ref, w_ref, b_ref, m_ref, o_ref, *, imgb, q, mmp):
    offs = (0, 1, q, q + 1)                       # (sh, sw) -> sh*Q + sw
    mask = m_ref[...]                             # (1, MMp) f32 = valid/(Ho*Wo)
    bias = b_ref[...]                             # (Cout, 1) f32
    for i in range(imgb):                         # static unroll over the group
        xi = x_ref[i]                             # (12, Spad) bf16 in VMEM
        acc = jnp.dot(w_ref[0], xi[:, offs[0]:offs[0] + mmp],
                      preferred_element_type=jnp.float32)
        for k in range(1, 4):
            acc = acc + jnp.dot(w_ref[k], xi[:, offs[k]:offs[k] + mmp],
                                preferred_element_type=jnp.float32)
        acc = acc + bias                          # (Cout, MMp) f32
        act = acc * jax.nn.sigmoid(acc)           # SiLU on the EUP
        # masked GAP: single lane-reduce per image (VPU accumulate + one XLU op)
        pooled = jnp.sum(act * mask, axis=1, keepdims=True)   # (Cout, 1)
        o_ref[i] = jnp.broadcast_to(pooled, o_ref.shape[1:])


def conv_silu_gap(x2, w4t, conv_b, mask, *, imgb, q, mmp):
    """x2: (B_pad, 12, Spad) bf16 -> pooled (B_pad, Cout, 8) f32 (col 0 valid)."""
    b_pad, feat, spad = x2.shape
    cout = w4t.shape[1]
    n_groups = b_pad // imgb
    return pl.pallas_call(
        functools.partial(_conv_silu_gap_kernel, imgb=imgb, q=q, mmp=mmp),
        out_shape=jax.ShapeDtypeStruct((b_pad, cout, 8), jnp.float32),
        grid=(n_groups,),
        in_specs=[
            pl.BlockSpec((imgb, feat, spad), lambda g: (g, 0, 0)),
            pl.BlockSpec((4, cout, feat), lambda g: (0, 0, 0)),
            pl.BlockSpec((cout, 1), lambda g: (0, 0)),
            pl.BlockSpec((1, mmp), lambda g: (0, 0)),
        ],
        out_specs=pl.BlockSpec((imgb, cout, 8), lambda g: (g, 0, 0)),
        compiler_params=pltpu.CompilerParams(
            dimension_semantics=("parallel",)),
    )(x2, w4t, conv_b, mask)


# ----------------------------------------------------------------------------
# Kernel 2: fused tail -- backbone head (32->3) + view(-1, 39) + ANN
# (39->97->3), collapsed into one 2-layer MLP via weight folding (see
# init_params).
# ----------------------------------------------------------------------------
def _tail_mlp_kernel(x_ref, w1_ref, b1_ref, w2_ref, b2_ref, o_ref):
    h = jnp.dot(x_ref[...], w1_ref[...], preferred_element_type=jnp.float32)
    h = jnp.maximum(h + b1_ref[...], 0.0)
    o = jnp.dot(h, w2_ref[...], preferred_element_type=jnp.float32)
    o_ref[...] = (o + b2_ref[...]).astype(o_ref.dtype)


def tail_mlp(x, w1, b1, w2, b2):
    m, k = x.shape
    h = w1.shape[1]
    o = w2.shape[1]
    return pl.pallas_call(
        _tail_mlp_kernel,
        out_shape=jax.ShapeDtypeStruct((m, o), jnp.float32),
        grid=(1,),
        in_specs=[
            pl.BlockSpec((m, k), lambda i: (0, 0)),
            pl.BlockSpec((k, h), lambda i: (0, 0)),
            pl.BlockSpec((1, h), lambda i: (0, 0)),
            pl.BlockSpec((h, o), lambda i: (0, 0)),
            pl.BlockSpec((1, o), lambda i: (0, 0)),
        ],
        out_specs=pl.BlockSpec((m, o), lambda i: (0, 0)),
        compiler_params=pltpu.CompilerParams(
            dimension_semantics=("arbitrary",)),
    )(x, w1, b1.reshape(1, h), w2, b2.reshape(1, o))


# ----------------------------------------------------------------------------
# Weight folding (done ONCE at init, not per forward call).
# ----------------------------------------------------------------------------
def _fold_conv_weights(w):
    """(Cout, Cin, 3, 3) -> (4, Cout, 12) bf16 per s2d shift, f = (dr, dc, cin)."""
    wt = jnp.transpose(w, (2, 3, 1, 0))           # (kh, kw, cin, cout)
    z = jnp.zeros_like(wt[0, 0])

    def s(a00, a01, a10, a11):                    # [dr][dc] -> (2, 2, cin, cout)
        return jnp.stack([jnp.stack([a00, a01]), jnp.stack([a10, a11])])

    shifts = jnp.stack([
        s(wt[0, 0], wt[0, 1], wt[1, 0], wt[1, 1]),   # (sh,sw)=(0,0): kh=dr, kw=dc
        s(wt[0, 2], z,        wt[1, 2], z       ),   # (0,1): kw=2, kh=dr, dc=0
        s(wt[2, 0], wt[2, 1], z,        z       ),   # (1,0): kh=2, kw=dc, dr=0
        s(wt[2, 2], z,        z,        z       ),   # (1,1): kh=kw=2, dr=dc=0
    ])                                               # (4, 2, 2, cin, cout)
    w4 = shifts.reshape(4, 4 * w.shape[1], w.shape[0])   # (4, 12, cout)
    return jnp.transpose(w4, (0, 2, 1)).astype(jnp.bfloat16)   # (4, cout, 12)


def init_params(key):
    ks = jax.random.split(key, 8)
    p = {}
    # stem conv: PyTorch layout (Cout, Cin, KH, KW) = (32, 3, 3, 3)
    p["conv_w"] = jax.random.normal(ks[0], (STEM_C, 3, 3, 3), jnp.float32) * 0.1
    p["conv_b"] = jax.random.normal(ks[1], (STEM_C,), jnp.float32) * 0.01
    # backbone classifier head: 32 -> 3
    p["head_w"] = jax.random.normal(ks[2], (STEM_C, BACKBONE_OUT), jnp.float32) * 0.1
    p["head_b"] = jax.random.normal(ks[3], (BACKBONE_OUT,), jnp.float32) * 0.01
    # ANN: 39 -> 97 -> 3
    p["ann_w1"] = jax.random.normal(ks[4], (39, ANN_HIDDEN), jnp.float32) * 0.1
    p["ann_b1"] = jax.random.normal(ks[5], (ANN_HIDDEN,), jnp.float32) * 0.01
    p["ann_w2"] = jax.random.normal(ks[6], (ANN_HIDDEN, ANN_OUT), jnp.float32) * 0.1
    p["ann_b2"] = jax.random.normal(ks[7], (ANN_OUT,), jnp.float32) * 0.01

    # --- cached foldings (precomputed once per parameter set) ----------------
    # head matmul + 13-image regrouping folded into the ANN's first layer:
    #   W1c[j*32:(j+1)*32] = head_w @ W1[3j:3j+3];  b1c = tile(head_b,13)@W1 + b1
    w1_r = p["ann_w1"].reshape(13, BACKBONE_OUT, ANN_HIDDEN)
    p["tail_w1"] = jnp.einsum("ch,jhk->jck", p["head_w"], w1_r).reshape(
        13 * STEM_C, ANN_HIDDEN)
    p["tail_b1"] = jnp.tile(p["head_b"], 13) @ p["ann_w1"] + p["ann_b1"]
    # stride-2 conv weights rearranged per space-to-depth shift
    p["conv_w4t"] = _fold_conv_weights(p["conv_w"])
    return p


# ----------------------------------------------------------------------------
# Forward
# ----------------------------------------------------------------------------
def heffann_forward(params, x_nchw):
    """x_nchw: (B, 3, H, W) float32; B must be a multiple of 13, H/W even."""
    B, C, H, W = x_nchw.shape
    if B % 13 != 0:
        raise ValueError("x: Tensor, batch_size must be multiple of 13")
    if H % 2 or W % 2:
        raise ValueError("H and W must be even (stride-2 stem conv)")

    Ho, Wo = H // 2, W // 2
    P, Q = Ho + 1, Wo + 1
    MMp = _round_up(Ho * Q, 128)                 # matmul lane width per image
    Spad = _round_up(Q + 1 + MMp, 128)           # flat-spatial length (padded)

    # images per grid step: enough lanes of real work per step (v5e/v6e),
    # always >= 2 grid blocks so v7x megacore keeps both TensorCores busy.
    imgb = max(1, min(_ceil_div(2048, MMp), _ceil_div(B, 2)))
    n_groups = _ceil_div(B, imgb)
    b_pad = n_groups * imgb

    # --- prep: pad + space-to-depth permute + flatten + bf16 cast (raw bytes,
    #     no 9x im2col expansion; single fused copy chain in XLA) -------------
    xp = jnp.pad(x_nchw, ((0, b_pad - B), (0, 0), (1, 1), (1, 1)))
    x2 = xp.reshape(b_pad, C, P, 2, Q, 2).transpose(0, 3, 5, 1, 2, 4)
    x2 = x2.reshape(b_pad, 4 * C, P * Q)
    x2 = jnp.pad(x2, ((0, 0), (0, 0), (0, Spad - P * Q))).astype(jnp.bfloat16)

    # GAP mask folded with the 1/(Ho*Wo) averaging factor
    j = jnp.arange(MMp)
    mask_row = ((j < Ho * Q) & (j % Q < Wo)).astype(jnp.float32) / (Ho * Wo)
    mask_row = mask_row.reshape(1, MMp)

    pooled8 = conv_silu_gap(x2, params["conv_w4t"],
                            params["conv_b"].reshape(STEM_C, 1),
                            mask_row, imgb=imgb, q=Q, mmp=MMp)     # Pallas
    pooled = pooled8[:B, :, 0]                                     # (B, 32)

    # --- tail: head(32->3) + view(-1,39) + ANN(39->97->3), one kernel --------
    grouped = pooled.reshape(-1, 13 * STEM_C)                      # (B/13, 416)
    out = tail_mlp(grouped, params["tail_w1"], params["tail_b1"],
                   params["ann_w2"], params["ann_b2"])             # Pallas
    return out


# Pure-JAX reference (f32) for a tolerance check of the bf16 Pallas path.
def heffann_reference(params, x_nchw):
    conv = jax.lax.conv_general_dilated(
        x_nchw, params["conv_w"], window_strides=(2, 2),
        padding=((1, 1), (1, 1)),
        dimension_numbers=("NCHW", "OIHW", "NCHW"))
    conv = conv + params["conv_b"][None, :, None, None]
    act = conv * jax.nn.sigmoid(conv)
    pooled = jnp.mean(act, axis=(2, 3))                       # (B, 32)
    head = pooled @ params["head_w"] + params["head_b"]       # (B, 3)
    feats = head.reshape(-1, 39)
    h = jnp.maximum(feats @ params["ann_w1"] + params["ann_b1"], 0.0)
    return h @ params["ann_w2"] + params["ann_b2"]


if __name__ == "__main__":
    key = jax.random.PRNGKey(0)
    pkey, xkey = jax.random.split(key)
    params = init_params(pkey)

    # batch must be a multiple of 13; reduced spatial size 32 instead of 224.
    x = jax.random.normal(xkey, (13, 3, 32, 32), jnp.float32)

    fwd = jax.jit(heffann_forward)
    out = jax.block_until_ready(fwd(params, x))
    assert out.shape == (1, ANN_OUT), out.shape
    assert bool(jnp.all(jnp.isfinite(out)))

    # bf16-tolerant correctness check against the pure-JAX f32 reference
    ref = heffann_reference(params, x)
    assert bool(jnp.allclose(out, ref, atol=5e-2, rtol=5e-2)), (out, ref)

    print("KERNEL_OK")
</pallas_src>

<mosaic_0001>
module attributes {stable_mosaic.version = 11 : i64} {
  func.func @_conv_silu_gap_kernel(%arg0: i32, %arg1: memref<6x12x512xbf16, #tpu.memory_space<vmem>>, %arg2: memref<4x32x12xbf16, #tpu.memory_space<vmem>>, %arg3: memref<32x1xf32, #tpu.memory_space<vmem>>, %arg4: memref<1x384xf32, #tpu.memory_space<vmem>>, %arg5: memref<6x32x8xf32, #tpu.memory_space<vmem>>) attributes {dimension_semantics = [#tpu.dimension_semantics<parallel>], iteration_bounds = array<i64: 3>, scalar_prefetch = 0 : i64, scratch_operands = 0 : i64, tpu.core_type = #tpu.core_type<tc>, window_params = [{transform_indices = @transform_0, window_bounds = array<i64: 6, 12, 512>}, {pipeline_mode = #tpu.pipeline_mode<synchronous>, transform_indices = @transform_1, window_bounds = array<i64: 4, 32, 12>}, {pipeline_mode = #tpu.pipeline_mode<synchronous>, transform_indices = @transform_2, window_bounds = array<i64: 32, 1>}, {pipeline_mode = #tpu.pipeline_mode<synchronous>, transform_indices = @transform_3, window_bounds = array<i64: 1, 384>}, {transform_indices = @transform_4, window_bounds = array<i64: 6, 32, 8>}]} {
    %c0 = arith.constant 0 : index
    %c0_0 = arith.constant 0 : index
    %0 = vector.load %arg4[%c0, %c0_0] : memref<1x384xf32, #tpu.memory_space<vmem>>, vector<1x384xf32>
    %c0_1 = arith.constant 0 : index
    %c0_2 = arith.constant 0 : index
    %1 = vector.load %arg3[%c0_1, %c0_2] : memref<32x1xf32, #tpu.memory_space<vmem>>, vector<32x1xf32>
    %c0_3 = arith.constant 0 : index
    %c0_4 = arith.constant 0 : index
    %c0_5 = arith.constant 0 : index
    %2 = vector.load %arg1[%c0_3, %c0_4, %c0_5] : memref<6x12x512xbf16, #tpu.memory_space<vmem>>, vector<1x12x512xbf16>
    %3 = vector.shape_cast %2 : vector<1x12x512xbf16> to vector<12x512xbf16>
    %c0_6 = arith.constant 0 : index
    %c0_7 = arith.constant 0 : index
    %c0_8 = arith.constant 0 : index
    %4 = vector.load %arg2[%c0_6, %c0_7, %c0_8] : memref<4x32x12xbf16, #tpu.memory_space<vmem>>, vector<1x32x12xbf16>
    %5 = vector.shape_cast %4 : vector<1x32x12xbf16> to vector<32x12xbf16>
    %6 = vector.extract_strided_slice %3 {offsets = [0, 0], sizes = [12, 384], strides = [1, 1]} : vector<12x512xbf16> to vector<12x384xbf16>
    %cst = arith.constant dense<0.000000e+00> : vector<32x384xf32>
    %7 = tpu.matmul %5, %6, %cst {dimension_numbers = #tpu.dot_dimension_numbers<[1], [0], [0], [1], [0, 0, 1, 1], [], []>} : vector<32x12xbf16>, vector<12x384xbf16>, vector<32x384xf32> -> vector<32x384xf32>
    %c1 = arith.constant 1 : index
    %c0_9 = arith.constant 0 : index
    %c0_10 = arith.constant 0 : index
    %8 = vector.load %arg2[%c1, %c0_9, %c0_10] : memref<4x32x12xbf16, #tpu.memory_space<vmem>>, vector<1x32x12xbf16>
    %9 = vector.shape_cast %8 : vector<1x32x12xbf16> to vector<32x12xbf16>
    %10 = vector.extract_strided_slice %3 {offsets = [0, 1], sizes = [12, 384], strides = [1, 1]} : vector<12x512xbf16> to vector<12x384xbf16>
    %cst_11 = arith.constant dense<0.000000e+00> : vector<32x384xf32>
    %11 = tpu.matmul %9, %10, %cst_11 {dimension_numbers = #tpu.dot_dimension_numbers<[1], [0], [0], [1], [0, 0, 1, 1], [], []>} : vector<32x12xbf16>, vector<12x384xbf16>, vector<32x384xf32> -> vector<32x384xf32>
    %12 = arith.addf %7, %11 : vector<32x384xf32>
    %c2 = arith.constant 2 : index
    %c0_12 = arith.constant 0 : index
    %c0_13 = arith.constant 0 : index
    %13 = vector.load %arg2[%c2, %c0_12, %c0_13] : memref<4x32x12xbf16, #tpu.memory_space<vmem>>, vector<1x32x12xbf16>
    %14 = vector.shape_cast %13 : vector<1x32x12xbf16> to vector<32x12xbf16>
    %15 = vector.extract_strided_slice %3 {offsets = [0, 17], sizes = [12, 384], strides = [1, 1]} : vector<12x512xbf16> to vector<12x384xbf16>
    %cst_14 = arith.constant dense<0.000000e+00> : vector<32x384xf32>
    %16 = tpu.matmul %14, %15, %cst_14 {dimension_numbers = #tpu.dot_dimension_numbers<[1], [0], [0], [1], [0, 0, 1, 1], [], []>} : vector<32x12xbf16>, vector<12x384xbf16>, vector<32x384xf32> -> vector<32x384xf32>
    %17 = arith.addf %12, %16 : vector<32x384xf32>
    %c3 = arith.constant 3 : index
    %c0_15 = arith.constant 0 : index
    %c0_16 = arith.constant 0 : index
    %18 = vector.load %arg2[%c3, %c0_15, %c0_16] : memref<4x32x12xbf16, #tpu.memory_space<vmem>>, vector<1x32x12xbf16>
    %19 = vector.shape_cast %18 : vector<1x32x12xbf16> to vector<32x12xbf16>
    %20 = vector.extract_strided_slice %3 {offsets = [0, 18], sizes = [12, 384], strides = [1, 1]} : vector<12x512xbf16> to vector<12x384xbf16>
    %cst_17 = arith.constant dense<0.000000e+00> : vector<32x384xf32>
    %21 = tpu.matmul %19, %20, %cst_17 {dimension_numbers = #tpu.dot_dimension_numbers<[1], [0], [0], [1], [0, 0, 1, 1], [], []>} : vector<32x12xbf16>, vector<12x384xbf16>, vector<32x384xf32> -> vector<32x384xf32>
    %22 = arith.addf %17, %21 : vector<32x384xf32>
    %23 = vector.broadcast %1 : vector<32x1xf32> to vector<32x384xf32>
    %24 = arith.addf %22, %23 : vector<32x384xf32>
    %25 = arith.negf %24 : vector<32x384xf32>
    %26 = math.exp %25 : vector<32x384xf32>
    %cst_18 = arith.constant 1.000000e+00 : f32
    %27 = vector.broadcast %cst_18 : f32 to vector<32x384xf32>
    %28 = arith.addf %27, %26 : vector<32x384xf32>
    %29 = arith.divf %27, %28 : vector<32x384xf32>
    %30 = arith.mulf %24, %29 : vector<32x384xf32>
    %31 = vector.broadcast %0 : vector<1x384xf32> to vector<32x384xf32>
    %32 = arith.mulf %30, %31 : vector<32x384xf32>
    %cst_19 = arith.constant dense<0.000000e+00> : vector<32xf32>
    %33 = vector.multi_reduction <add>, %32, %cst_19 [1] : vector<32x384xf32> to vector<32xf32>
    %34 = vector.shape_cast %33 : vector<32xf32> to vector<32x1xf32>
    %35 = vector.shape_cast %34 : vector<32x1xf32> to vector<32x1xf32>
    %36 = vector.broadcast %35 : vector<32x1xf32> to vector<32x8xf32>
    %c0_20 = arith.constant 0 : index
    %c0_21 = arith.constant 0 : index
    %c0_22 = arith.constant 0 : index
    %37 = vector.load %arg5[%c0_20, %c0_21, %c0_22] : memref<6x32x8xf32, #tpu.memory_space<vmem>>, vector<1x32x8xf32>
    %38 = vector.shape_cast %37 : vector<1x32x8xf32> to vector<32x8xf32>
    %39 = vector.shape_cast %36 : vector<32x8xf32> to vector<1x32x8xf32>
    tpu.vector_store %arg5[%c0_20, %c0_21, %c0_22], %39 {strides = array<i32>} : memref<6x32x8xf32, #tpu.memory_space<vmem>>, vector<1x32x8xf32>,
    %c1_23 = arith.constant 1 : index
    %c0_24 = arith.constant 0 : index
    %c0_25 = arith.constant 0 : index
    %40 = vector.load %arg1[%c1_23, %c0_24, %c0_25] : memref<6x12x512xbf16, #tpu.memory_space<vmem>>, vector<1x12x512xbf16>
    %41 = vector.shape_cast %40 : vector<1x12x512xbf16> to vector<12x512xbf16>
    %c0_26 = arith.constant 0 : index
    %c0_27 = arith.constant 0 : index
    %c0_28 = arith.constant 0 : index
    %42 = vector.load %arg2[%c0_26, %c0_27, %c0_28] : memref<4x32x12xbf16, #tpu.memory_space<vmem>>, vector<1x32x12xbf16>
    %43 = vector.shape_cast %42 : vector<1x32x12xbf16> to vector<32x12xbf16>
    %44 = vector.extract_strided_slice %41 {offsets = [0, 0], sizes = [12, 384], strides = [1, 1]} : vector<12x512xbf16> to vector<12x384xbf16>
    %cst_29 = arith.constant dense<0.000000e+00> : vector<32x384xf32>
    %45 = tpu.matmul %43, %44, %cst_29 {dimension_numbers = #tpu.dot_dimension_numbers<[1], [0], [0], [1], [0, 0, 1, 1], [], []>} : vector<32x12xbf16>, vector<12x384xbf16>, vector<32x384xf32> -> vector<32x384xf32>
    %c1_30 = arith.constant 1 : index
    %c0_31 = arith.constant 0 : index
    %c0_32 = arith.constant 0 : index
    %46 = vector.load %arg2[%c1_30, %c0_31, %c0_32] : memref<4x32x12xbf16, #tpu.memory_space<vmem>>, vector<1x32x12xbf16>
    %47 = vector.shape_cast %46 : vector<1x32x12xbf16> to vector<32x12xbf16>
    %48 = vector.extract_strided_slice %41 {offsets = [0, 1], sizes = [12, 384], strides = [1, 1]} : vector<12x512xbf16> to vector<12x384xbf16>
    %cst_33 = arith.constant dense<0.000000e+00> : vector<32x384xf32>
    %49 = tpu.matmul %47, %48, %cst_33 {dimension_numbers = #tpu.dot_dimension_numbers<[1], [0], [0], [1], [0, 0, 1, 1], [], []>} : vector<32x12xbf16>, vector<12x384xbf16>, vector<32x384xf32> -> vector<32x384xf32>
    %50 = arith.addf %45, %49 : vector<32x384xf32>
    %c2_34 = arith.constant 2 : index
    %c0_35 = arith.constant 0 : index
    %c0_36 = arith.constant 0 : index
    %51 = vector.load %arg2[%c2_34, %c0_35, %c0_36] : memref<4x32x12xbf16, #tpu.memory_space<vmem>>, vector<1x32x12xbf16>
    %52 = vector.shape_cast %51 : vector<1x32x12xbf16> to vector<32x12xbf16>
    %53 = vector.extract_strided_slice %41 {offsets = [0, 17], sizes = [12, 384], strides = [1, 1]} : vector<12x512xbf16> to vector<12x384xbf16>
    %cst_37 = arith.constant dense<0.000000e+00> : vector<32x384xf32>
    %54 = tpu.matmul %52, %53, %cst_37 {dimension_numbers = #tpu.dot_dimension_numbers<[1], [0], [0], [1], [0, 0, 1, 1], [], []>} : vector<32x12xbf16>, vector<12x384xbf16>, vector<32x384xf32> -> vector<32x384xf32>
    %55 = arith.addf %50, %54 : vector<32x384xf32>
    %c3_38 = arith.constant 3 : index
    %c0_39 = arith.constant 0 : index
    %c0_40 = arith.constant 0 : index
    %56 = vector.load %arg2[%c3_38, %c0_39, %c0_40] : memref<4x32x12xbf16, #tpu.memory_space<vmem>>, vector<1x32x12xbf16>
    %57 = vector.shape_cast %56 : vector<1x32x12xbf16> to vector<32x12xbf16>
    %58 = vector.extract_strided_slice %41 {offsets = [0, 18], sizes = [12, 384], strides = [1, 1]} : vector<12x512xbf16> to vector<12x384xbf16>
    %cst_41 = arith.constant dense<0.000000e+00> : vector<32x384xf32>
    %59 = tpu.matmul %57, %58, %cst_41 {dimension_numbers = #tpu.dot_dimension_numbers<[1], [0], [0], [1], [0, 0, 1, 1], [], []>} : vector<32x12xbf16>, vector<12x384xbf16>, vector<32x384xf32> -> vector<32x384xf32>
    %60 = arith.addf %55, %59 : vector<32x384xf32>
    %61 = vector.broadcast %1 : vector<32x1xf32> to vector<32x384xf32>
    %62 = arith.addf %60, %61 : vector<32x384xf32>
    %63 = arith.negf %62 : vector<32x384xf32>
    %64 = math.exp %63 : vector<32x384xf32>
    %cst_42 = arith.constant 1.000000e+00 : f32
    %65 = vector.broadcast %cst_42 : f32 to vector<32x384xf32>
    %66 = arith.addf %65, %64 : vector<32x384xf32>
    %67 = arith.divf %65, %66 : vector<32x384xf32>
    %68 = arith.mulf %62, %67 : vector<32x384xf32>
    %69 = vector.broadcast %0 : vector<1x384xf32> to vector<32x384xf32>
    %70 = arith.mulf %68, %69 : vector<32x384xf32>
    %cst_43 = arith.constant dense<0.000000e+00> : vector<32xf32>
    %71 = vector.multi_reduction <add>, %70, %cst_43 [1] : vector<32x384xf32> to vector<32xf32>
    %72 = vector.shape_cast %71 : vector<32xf32> to vector<32x1xf32>
    %73 = vector.shape_cast %72 : vector<32x1xf32> to vector<32x1xf32>
    %74 = vector.broadcast %73 : vector<32x1xf32> to vector<32x8xf32>
    %c1_44 = arith.constant 1 : index
    %c0_45 = arith.constant 0 : index
    %c0_46 = arith.constant 0 : index
    %75 = vector.load %arg5[%c1_44, %c0_45, %c0_46] : memref<6x32x8xf32, #tpu.memory_space<vmem>>, vector<1x32x8xf32>
    %76 = vector.shape_cast %75 : vector<1x32x8xf32> to vector<32x8xf32>
    %77 = vector.shape_cast %74 : vector<32x8xf32> to vector<1x32x8xf32>
    tpu.vector_store %arg5[%c1_44, %c0_45, %c0_46], %77 {strides = array<i32>} : memref<6x32x8xf32, #tpu.memory_space<vmem>>, vector<1x32x8xf32>,
    %c2_47 = arith.constant 2 : index
    %c0_48 = arith.constant 0 : index
    %c0_49 = arith.constant 0 : index
    %78 = vector.load %arg1[%c2_47, %c0_48, %c0_49] : memref<6x12x512xbf16, #tpu.memory_space<vmem>>, vector<1x12x512xbf16>
    %79 = vector.shape_cast %78 : vector<1x12x512xbf16> to vector<12x512xbf16>
    %c0_50 = arith.constant 0 : index
    %c0_51 = arith.constant 0 : index
    %c0_52 = arith.constant 0 : index
    %80 = vector.load %arg2[%c0_50, %c0_51, %c0_52] : memref<4x32x12xbf16, #tpu.memory_space<vmem>>, vector<1x32x12xbf16>
    %81 = vector.shape_cast %80 : vector<1x32x12xbf16> to vector<32x12xbf16>
    %82 = vector.extract_strided_slice %79 {offsets = [0, 0], sizes = [12, 384], strides = [1, 1]} : vector<12x512xbf16> to vector<12x384xbf16>
    %cst_53 = arith.constant dense<0.000000e+00> : vector<32x384xf32>
    %83 = tpu.matmul %81, %82, %cst_53 {dimension_numbers = #tpu.dot_dimension_numbers<[1], [0], [0], [1], [0, 0, 1, 1], [], []>} : vector<32x12xbf16>, vector<12x384xbf16>, vector<32x384xf32> -> vector<32x384xf32>
    %c1_54 = arith.constant 1 : index
    %c0_55 = arith.constant 0 : index
    %c0_56 = arith.constant 0 : index
    %84 = vector.load %arg2[%c1_54, %c0_55, %c0_56] : memref<4x32x12xbf16, #tpu.memory_space<vmem>>, vector<1x32x12xbf16>
    %85 = vector.shape_cast %84 : vector<1x32x12xbf16> to vector<32x12xbf16>
    %86 = vector.extract_strided_slice %79 {offsets = [0, 1], sizes = [12, 384], strides = [1, 1]} : vector<12x512xbf16> to vector<12x384xbf16>
    %cst_57 = arith.constant dense<0.000000e+00> : vector<32x384xf32>
    %87 = tpu.matmul %85, %86, %cst_57 {dimension_numbers = #tpu.dot_dimension_numbers<[1], [0], [0], [1], [0, 0, 1, 1], [], []>} : vector<32x12xbf16>, vector<12x384xbf16>, vector<32x384xf32> -> vector<32x384xf32>
    %88 = arith.addf %83, %87 : vector<32x384xf32>
    %c2_58 = arith.constant 2 : index
    %c0_59 = arith.constant 0 : index
    %c0_60 = arith.constant 0 : index
    %89 = vector.load %arg2[%c2_58, %c0_59, %c0_60] : memref<4x32x12xbf16, #tpu.memory_space<vmem>>, vector<1x32x12xbf16>
    %90 = vector.shape_cast %89 : vector<1x32x12xbf16> to vector<32x12xbf16>
    %91 = vector.extract_strided_slice %79 {offsets = [0, 17], sizes = [12, 384], strides = [1, 1]} : vector<12x512xbf16> to vector<12x384xbf16>
    %cst_61 = arith.constant dense<0.000000e+00> : vector<32x384xf32>
    %92 = tpu.matmul %90, %91, %cst_61 {dimension_numbers = #tpu.dot_dimension_numbers<[1], [0], [0], [1], [0, 0, 1, 1], [], []>} : vector<32x12xbf16>, vector<12x384xbf16>, vector<32x384xf32> -> vector<32x384xf32>
    %93 = arith.addf %88, %92 : vector<32x384xf32>
    %c3_62 = arith.constant 3 : index
    %c0_63 = arith.constant 0 : index
    %c0_64 = arith.constant 0 : index
    %94 = vector.load %arg2[%c3_62, %c0_63, %c0_64] : memref<4x32x12xbf16, #tpu.memory_space<vmem>>, vector<1x32x12xbf16>
    %95 = vector.shape_cast %94 : vector<1x32x12xbf16> to vector<32x12xbf16>
    %96 = vector.extract_strided_slice %79 {offsets = [0, 18], sizes = [12, 384], strides = [1, 1]} : vector<12x512xbf16> to vector<12x384xbf16>
    %cst_65 = arith.constant dense<0.000000e+00> : vector<32x384xf32>
    %97 = tpu.matmul %95, %96, %cst_65 {dimension_numbers = #tpu.dot_dimension_numbers<[1], [0], [0], [1], [0, 0, 1, 1], [], []>} : vector<32x12xbf16>, vector<12x384xbf16>, vector<32x384xf32> -> vector<32x384xf32>
    %98 = arith.addf %93, %97 : vector<32x384xf32>
    %99 = vector.broadcast %1 : vector<32x1xf32> to vector<32x384xf32>
    %100 = arith.addf %98, %99 : vector<32x384xf32>
    %101 = arith.negf %100 : vector<32x384xf32>
    %102 = math.exp %101 : vector<32x384xf32>
    %cst_66 = arith.constant 1.000000e+00 : f32
    %103 = vector.broadcast %cst_66 : f32 to vector<32x384xf32>
    %104 = arith.addf %103, %102 : vector<32x384xf32>
    %105 = arith.divf %103, %104 : vector<32x384xf32>
    %106 = arith.mulf %100, %105 : vector<32x384xf32>
    %107 = vector.broadcast %0 : vector<1x384xf32> to vector<32x384xf32>
    %108 = arith.mulf %106, %107 : vector<32x384xf32>
    %cst_67 = arith.constant dense<0.000000e+00> : vector<32xf32>
    %109 = vector.multi_reduction <add>, %108, %cst_67 [1] : vector<32x384xf32> to vector<32xf32>
    %110 = vector.shape_cast %109 : vector<32xf32> to vector<32x1xf32>
    %111 = vector.shape_cast %110 : vector<32x1xf32> to vector<32x1xf32>
    %112 = vector.broadcast %111 : vector<32x1xf32> to vector<32x8xf32>
    %c2_68 = arith.constant 2 : index
    %c0_69 = arith.constant 0 : index
    %c0_70 = arith.constant 0 : index
    %113 = vector.load %arg5[%c2_68, %c0_69, %c0_70] : memref<6x32x8xf32, #tpu.memory_space<vmem>>, vector<1x32x8xf32>
    %114 = vector.shape_cast %113 : vector<1x32x8xf32> to vector<32x8xf32>
    %115 = vector.shape_cast %112 : vector<32x8xf32> to vector<1x32x8xf32>
    tpu.vector_store %arg5[%c2_68, %c0_69, %c0_70], %115 {strides = array<i32>} : memref<6x32x8xf32, #tpu.memory_space<vmem>>, vector<1x32x8xf32>,
    %c3_71 = arith.constant 3 : index
    %c0_72 = arith.constant 0 : index
    %c0_73 = arith.constant 0 : index
    %116 = vector.load %arg1[%c3_71, %c0_72, %c0_73] : memref<6x12x512xbf16, #tpu.memory_space<vmem>>, vector<1x12x512xbf16>
    %117 = vector.shape_cast %116 : vector<1x12x512xbf16> to vector<12x512xbf16>
    %c0_74 = arith.constant 0 : index
    %c0_75 = arith.constant 0 : index
    %c0_76 = arith.constant 0 : index
    %118 = vector.load %arg2[%c0_74, %c0_75, %c0_76] : memref<4x32x12xbf16, #tpu.memory_space<vmem>>, vector<1x32x12xbf16>
    %119 = vector.shape_cast %118 : vector<1x32x12xbf16> to vector<32x12xbf16>
    %120 = vector.extract_strided_slice %117 {offsets = [0, 0], sizes = [12, 384], strides = [1, 1]} : vector<12x512xbf16> to vector<12x384xbf16>
    %cst_77 = arith.constant dense<0.000000e+00> : vector<32x384xf32>
    %121 = tpu.matmul %119, %120, %cst_77 {dimension_numbers = #tpu.dot_dimension_numbers<[1], [0], [0], [1], [0, 0, 1, 1], [], []>} : vector<32x12xbf16>, vector<12x384xbf16>, vector<32x384xf32> -> vector<32x384xf32>
    %c1_78 = arith.constant 1 : index
    %c0_79 = arith.constant 0 : index
    %c0_80 = arith.constant 0 : index
    %122 = vector.load %arg2[%c1_78, %c0_79, %c0_80] : memref<4x32x12xbf16, #tpu.memory_space<vmem>>, vector<1x32x12xbf16>
    %123 = vector.shape_cast %122 : vector<1x32x12xbf16> to vector<32x12xbf16>
    %124 = vector.extract_strided_slice %117 {offsets = [0, 1], sizes = [12, 384], strides = [1, 1]} : vector<12x512xbf16> to vector<12x384xbf16>
    %cst_81 = arith.constant dense<0.000000e+00> : vector<32x384xf32>
    %125 = tpu.matmul %123, %124, %cst_81 {dimension_numbers = #tpu.dot_dimension_numbers<[1], [0], [0], [1], [0, 0, 1, 1], [], []>} : vector<32x12xbf16>, vector<12x384xbf16>, vector<32x384xf32> -> vector<32x384xf32>
    %126 = arith.addf %121, %125 : vector<32x384xf32>
    %c2_82 = arith.constant 2 : index
    %c0_83 = arith.constant 0 : index
    %c0_84 = arith.constant 0 : index
    %127 = vector.load %arg2[%c2_82, %c0_83, %c0_84] : memref<4x32x12xbf16, #tpu.memory_space<vmem>>, vector<1x32x12xbf16>
    %128 = vector.shape_cast %127 : vector<1x32x12xbf16> to vector<32x12xbf16>
    %129 = vector.extract_strided_slice %117 {offsets = [0, 17], sizes = [12, 384], strides = [1, 1]} : vector<12x512xbf16> to vector<12x384xbf16>
    %cst_85 = arith.constant dense<0.000000e+00> : vector<32x384xf32>
    %130 = tpu.matmul %128, %129, %cst_85 {dimension_numbers = #tpu.dot_dimension_numbers<[1], [0], [0], [1], [0, 0, 1, 1], [], []>} : vector<32x12xbf16>, vector<12x384xbf16>, vector<32x384xf32> -> vector<32x384xf32>
    %131 = arith.addf %126, %130 : vector<32x384xf32>
    %c3_86 = arith.constant 3 : index
    %c0_87 = arith.constant 0 : index
    %c0_88 = arith.constant 0 : index
    %132 = vector.load %arg2[%c3_86, %c0_87, %c0_88] : memref<4x32x12xbf16, #tpu.memory_space<vmem>>, vector<1x32x12xbf16>
    %133 = vector.shape_cast %132 : vector<1x32x12xbf16> to vector<32x12xbf16>
    %134 = vector.extract_strided_slice %117 {offsets = [0, 18], sizes = [12, 384], strides = [1, 1]} : vector<12x512xbf16> to vector<12x384xbf16>
    %cst_89 = arith.constant dense<0.000000e+00> : vector<32x384xf32>
    %135 = tpu.matmul %133, %134, %cst_89 {dimension_numbers = #tpu.dot_dimension_numbers<[1], [0], [0], [1], [0, 0, 1, 1], [], []>} : vector<32x12xbf16>, vector<12x384xbf16>, vector<32x384xf32> -> vector<32x384xf32>
    %136 = arith.addf %131, %135 : vector<32x384xf32>
    %137 = vector.broadcast %1 : vector<32x1xf32> to vector<32x384xf32>
    %138 = arith.addf %136, %137 : vector<32x384xf32>
    %139 = arith.negf %138 : vector<32x384xf32>
    %140 = math.exp %139 : vector<32x384xf32>
    %cst_90 = arith.constant 1.000000e+00 : f32
    %141 = vector.broadcast %cst_90 : f32 to vector<32x384xf32>
    %142 = arith.addf %141, %140 : vector<32x384xf32>
    %143 = arith.divf %141, %142 : vector<32x384xf32>
    %144 = arith.mulf %138, %143 : vector<32x384xf32>
    %145 = vector.broadcast %0 : vector<1x384xf32> to vector<32x384xf32>
    %146 = arith.mulf %144, %145 : vector<32x384xf32>
    %cst_91 = arith.constant dense<0.000000e+00> : vector<32xf32>
    %147 = vector.multi_reduction <add>, %146, %cst_91 [1] : vector<32x384xf32> to vector<32xf32>
    %148 = vector.shape_cast %147 : vector<32xf32> to vector<32x1xf32>
    %149 = vector.shape_cast %148 : vector<32x1xf32> to vector<32x1xf32>
    %150 = vector.broadcast %149 : vector<32x1xf32> to vector<32x8xf32>
    %c3_92 = arith.constant 3 : index
    %c0_93 = arith.constant 0 : index
    %c0_94 = arith.constant 0 : index
    %151 = vector.load %arg5[%c3_92, %c0_93, %c0_94] : memref<6x32x8xf32, #tpu.memory_space<vmem>>, vector<1x32x8xf32>
    %152 = vector.shape_cast %151 : vector<1x32x8xf32> to vector<32x8xf32>
    %153 = vector.shape_cast %150 : vector<32x8xf32> to vector<1x32x8xf32>
    tpu.vector_store %arg5[%c3_92, %c0_93, %c0_94], %153 {strides = array<i32>} : memref<6x32x8xf32, #tpu.memory_space<vmem>>, vector<1x32x8xf32>,
    %c4 = arith.constant 4 : index
    %c0_95 = arith.constant 0 : index
    %c0_96 = arith.constant 0 : index
    %154 = vector.load %arg1[%c4, %c0_95, %c0_96] : memref<6x12x512xbf16, #tpu.memory_space<vmem>>, vector<1x12x512xbf16>
    %155 = vector.shape_cast %154 : vector<1x12x512xbf16> to vector<12x512xbf16>
    %c0_97 = arith.constant 0 : index
    %c0_98 = arith.constant 0 : index
    %c0_99 = arith.constant 0 : index
    %156 = vector.load %arg2[%c0_97, %c0_98, %c0_99] : memref<4x32x12xbf16, #tpu.memory_space<vmem>>, vector<1x32x12xbf16>
    %157 = vector.shape_cast %156 : vector<1x32x12xbf16> to vector<32x12xbf16>
    %158 = vector.extract_strided_slice %155 {offsets = [0, 0], sizes = [12, 384], strides = [1, 1]} : vector<12x512xbf16> to vector<12x384xbf16>
    %cst_100 = arith.constant dense<0.000000e+00> : vector<32x384xf32>
    %159 = tpu.matmul %157, %158, %cst_100 {dimension_numbers = #tpu.dot_dimension_numbers<[1], [0], [0], [1], [0, 0, 1, 1], [], []>} : vector<32x12xbf16>, vector<12x384xbf16>, vector<32x384xf32> -> vector<32x384xf32>
    %c1_101 = arith.constant 1 : index
    %c0_102 = arith.constant 0 : index
    %c0_103 = arith.constant 0 : index
    %160 = vector.load %arg2[%c1_101, %c0_102, %c0_103] : memref<4x32x12xbf16, #tpu.memory_space<vmem>>, vector<1x32x12xbf16>
    %161 = vector.shape_cast %160 : vector<1x32x12xbf16> to vector<32x12xbf16>
    %162 = vector.extract_strided_slice %155 {offsets = [0, 1], sizes = [12, 384], strides = [1, 1]} : vector<12x512xbf16> to vector<12x384xbf16>
    %cst_104 = arith.constant dense<0.000000e+00> : vector<32x384xf32>
    %163 = tpu.matmul %161, %162, %cst_104 {dimension_numbers = #tpu.dot_dimension_numbers<[1], [0], [0], [1], [0, 0, 1, 1], [], []>} : vector<32x12xbf16>, vector<12x384xbf16>, vector<32x384xf32> -> vector<32x384xf32>
    %164 = arith.addf %159, %163 : vector<32x384xf32>
    %c2_105 = arith.constant 2 : index
    %c0_106 = arith.constant 0 : index
    %c0_107 = arith.constant 0 : index
    %165 = vector.load %arg2[%c2_105, %c0_106, %c0_107] : memref<4x32x12xbf16, #tpu.memory_space<vmem>>, vector<1x32x12xbf16>
    %166 = vector.shape_cast %165 : vector<1x32x12xbf16> to vector<32x12xbf16>
    %167 = vector.extract_strided_slice %155 {offsets = [0, 17], sizes = [12, 384], strides = [1, 1]} : vector<12x512xbf16> to vector<12x384xbf16>
    %cst_108 = arith.constant dense<0.000000e+00> : vector<32x384xf32>
    %168 = tpu.matmul %166, %167, %cst_108 {dimension_numbers = #tpu.dot_dimension_numbers<[1], [0], [0], [1], [0, 0, 1, 1], [], []>} : vector<32x12xbf16>, vector<12x384xbf16>, vector<32x384xf32> -> vector<32x384xf32>
    %169 = arith.addf %164, %168 : vector<32x384xf32>
    %c3_109 = arith.constant 3 : index
    %c0_110 = arith.constant 0 : index
    %c0_111 = arith.constant 0 : index
    %170 = vector.load %arg2[%c3_109, %c0_110, %c0_111] : memref<4x32x12xbf16, #tpu.memory_space<vmem>>, vector<1x32x12xbf16>
    %171 = vector.shape_cast %170 : vector<1x32x12xbf16> to vector<32x12xbf16>
    %172 = vector.extract_strided_slice %155 {offsets = [0, 18], sizes = [12, 384], strides = [1, 1]} : vector<12x512xbf16> to vector<12x384xbf16>
    %cst_112 = arith.constant dense<0.000000e+00> : vector<32x384xf32>
    %173 = tpu.matmul %171, %172, %cst_112 {dimension_numbers = #tpu.dot_dimension_numbers<[1], [0], [0], [1], [0, 0, 1, 1], [], []>} : vector<32x12xbf16>, vector<12x384xbf16>, vector<32x384xf32> -> vector<32x384xf32>
    %174 = arith.addf %169, %173 : vector<32x384xf32>
    %175 = vector.broadcast %1 : vector<32x1xf32> to vector<32x384xf32>
    %176 = arith.addf %174, %175 : vector<32x384xf32>
    %177 = arith.negf %176 : vector<32x384xf32>
    %178 = math.exp %177 : vector<32x384xf32>
    %cst_113 = arith.constant 1.000000e+00 : f32
    %179 = vector.broadcast %cst_113 : f32 to vector<32x384xf32>
    %180 = arith.addf %179, %178 : vector<32x384xf32>
    %181 = arith.divf %179, %180 : vector<32x384xf32>
    %182 = arith.mulf %176, %181 : vector<32x384xf32>
    %183 = vector.broadcast %0 : vector<1x384xf32> to vector<32x384xf32>
    %184 = arith.mulf %182, %183 : vector<32x384xf32>
    %cst_114 = arith.constant dense<0.000000e+00> : vector<32xf32>
    %185 = vector.multi_reduction <add>, %184, %cst_114 [1] : vector<32x384xf32> to vector<32xf32>
    %186 = vector.shape_cast %185 : vector<32xf32> to vector<32x1xf32>
    %187 = vector.shape_cast %186 : vector<32x1xf32> to vector<32x1xf32>
    %188 = vector.broadcast %187 : vector<32x1xf32> to vector<32x8xf32>
    %c4_115 = arith.constant 4 : index
    %c0_116 = arith.constant 0 : index
    %c0_117 = arith.constant 0 : index
    %189 = vector.load %arg5[%c4_115, %c0_116, %c0_117] : memref<6x32x8xf32, #tpu.memory_space<vmem>>, vector<1x32x8xf32>
    %190 = vector.shape_cast %189 : vector<1x32x8xf32> to vector<32x8xf32>
    %191 = vector.shape_cast %188 : vector<32x8xf32> to vector<1x32x8xf32>
    tpu.vector_store %arg5[%c4_115, %c0_116, %c0_117], %191 {strides = array<i32>} : memref<6x32x8xf32, #tpu.memory_space<vmem>>, vector<1x32x8xf32>,
    %c5 = arith.constant 5 : index
    %c0_118 = arith.constant 0 : index
    %c0_119 = arith.constant 0 : index
    %192 = vector.load %arg1[%c5, %c0_118, %c0_119] : memref<6x12x512xbf16, #tpu.memory_space<vmem>>, vector<1x12x512xbf16>
    %193 = vector.shape_cast %192 : vector<1x12x512xbf16> to vector<12x512xbf16>
    %c0_120 = arith.constant 0 : index
    %c0_121 = arith.constant 0 : index
    %c0_122 = arith.constant 0 : index
    %194 = vector.load %arg2[%c0_120, %c0_121, %c0_122] : memref<4x32x12xbf16, #tpu.memory_space<vmem>>, vector<1x32x12xbf16>
    %195 = vector.shape_cast %194 : vector<1x32x12xbf16> to vector<32x12xbf16>
    %196 = vector.extract_strided_slice %193 {offsets = [0, 0], sizes = [12, 384], strides = [1, 1]} : vector<12x512xbf16> to vector<12x384xbf16>
    %cst_123 = arith.constant dense<0.000000e+00> : vector<32x384xf32>
    %197 = tpu.matmul %195, %196, %cst_123 {dimension_numbers = #tpu.dot_dimension_numbers<[1], [0], [0], [1], [0, 0, 1, 1], [], []>} : vector<32x12xbf16>, vector<12x384xbf16>, vector<32x384xf32> -> vector<32x384xf32>
    %c1_124 = arith.constant 1 : index
    %c0_125 = arith.constant 0 : index
    %c0_126 = arith.constant 0 : index
    %198 = vector.load %arg2[%c1_124, %c0_125, %c0_126] : memref<4x32x12xbf16, #tpu.memory_space<vmem>>, vector<1x32x12xbf16>
    %199 = vector.shape_cast %198 : vector<1x32x12xbf16> to vector<32x12xbf16>
    %200 = vector.extract_strided_slice %193 {offsets = [0, 1], sizes = [12, 384], strides = [1, 1]} : vector<12x512xbf16> to vector<12x384xbf16>
    %cst_127 = arith.constant dense<0.000000e+00> : vector<32x384xf32>
    %201 = tpu.matmul %199, %200, %cst_127 {dimension_numbers = #tpu.dot_dimension_numbers<[1], [0], [0], [1], [0, 0, 1, 1], [], []>} : vector<32x12xbf16>, vector<12x384xbf16>, vector<32x384xf32> -> vector<32x384xf32>
    %202 = arith.addf %197, %201 : vector<32x384xf32>
    %c2_128 = arith.constant 2 : index
    %c0_129 = arith.constant 0 : index
    %c0_130 = arith.constant 0 : index
    %203 = vector.load %arg2[%c2_128, %c0_129, %c0_130] : memref<4x32x12xbf16, #tpu.memory_space<vmem>>, vector<1x32x12xbf16>
    %204 = vector.shape_cast %203 : vector<1x32x12xbf16> to vector<32x12xbf16>
    %205 = vector.extract_strided_slice %193 {offsets = [0, 17], sizes = [12, 384], strides = [1, 1]} : vector<12x512xbf16> to vector<12x384xbf16>
    %cst_131 = arith.constant dense<0.000000e+00> : vector<32x384xf32>
    %206 = tpu.matmul %204, %205, %cst_131 {dimension_numbers = #tpu.dot_dimension_numbers<[1], [0], [0], [1], [0, 0, 1, 1], [], []>} : vector<32x12xbf16>, vector<12x384xbf16>, vector<32x384xf32> -> vector<32x384xf32>
    %207 = arith.addf %202, %206 : vector<32x384xf32>
    %c3_132 = arith.constant 3 : index
    %c0_133 = arith.constant 0 : index
    %c0_134 = arith.constant 0 : index
    %208 = vector.load %arg2[%c3_132, %c0_133, %c0_134] : memref<4x32x12xbf16, #tpu.memory_space<vmem>>, vector<1x32x12xbf16>
    %209 = vector.shape_cast %208 : vector<1x32x12xbf16> to vector<32x12xbf16>
    %210 = vector.extract_strided_slice %193 {offsets = [0, 18], sizes = [12, 384], strides = [1, 1]} : vector<12x512xbf16> to vector<12x384xbf16>
    %cst_135 = arith.constant dense<0.000000e+00> : vector<32x384xf32>
    %211 = tpu.matmul %209, %210, %cst_135 {dimension_numbers = #tpu.dot_dimension_numbers<[1], [0], [0], [1], [0, 0, 1, 1], [], []>} : vector<32x12xbf16>, vector<12x384xbf16>, vector<32x384xf32> -> vector<32x384xf32>
    %212 = arith.addf %207, %211 : vector<32x384xf32>
    %213 = vector.broadcast %1 : vector<32x1xf32> to vector<32x384xf32>
    %214 = arith.addf %212, %213 : vector<32x384xf32>
    %215 = arith.negf %214 : vector<32x384xf32>
    %216 = math.exp %215 : vector<32x384xf32>
    %cst_136 = arith.constant 1.000000e+00 : f32
    %217 = vector.broadcast %cst_136 : f32 to vector<32x384xf32>
    %218 = arith.addf %217, %216 : vector<32x384xf32>
    %219 = arith.divf %217, %218 : vector<32x384xf32>
    %220 = arith.mulf %214, %219 : vector<32x384xf32>
    %221 = vector.broadcast %0 : vector<1x384xf32> to vector<32x384xf32>
    %222 = arith.mulf %220, %221 : vector<32x384xf32>
    %cst_137 = arith.constant dense<0.000000e+00> : vector<32xf32>
    %223 = vector.multi_reduction <add>, %222, %cst_137 [1] : vector<32x384xf32> to vector<32xf32>
    %224 = vector.shape_cast %223 : vector<32xf32> to vector<32x1xf32>
    %225 = vector.shape_cast %224 : vector<32x1xf32> to vector<32x1xf32>
    %226 = vector.broadcast %225 : vector<32x1xf32> to vector<32x8xf32>
    %c5_138 = arith.constant 5 : index
    %c0_139 = arith.constant 0 : index
    %c0_140 = arith.constant 0 : index
    %227 = vector.load %arg5[%c5_138, %c0_139, %c0_140] : memref<6x32x8xf32, #tpu.memory_space<vmem>>, vector<1x32x8xf32>
    %228 = vector.shape_cast %227 : vector<1x32x8xf32> to vector<32x8xf32>
    %229 = vector.shape_cast %226 : vector<32x8xf32> to vector<1x32x8xf32>
    tpu.vector_store %arg5[%c5_138, %c0_139, %c0_140], %229 {strides = array<i32>} : memref<6x32x8xf32, #tpu.memory_space<vmem>>, vector<1x32x8xf32>,
    return
  }
  func.func @transform_0(%arg0: i32) -> (i32, i32, i32) {
    %c0_i32 = arith.constant 0 : i32
    %c0_i32_0 = arith.constant 0 : i32
    %c0_i32_1 = arith.constant 0 : i32
    return %arg0, %c0_i32, %c0_i32_0 : i32, i32, i32
  }
  func.func @transform_1(%arg0: i32) -> (i32, i32, i32) {
    %c0_i32 = arith.constant 0 : i32
    %c0_i32_0 = arith.constant 0 : i32
    %c0_i32_1 = arith.constant 0 : i32
    %c0_i32_2 = arith.constant 0 : i32
    return %c0_i32, %c0_i32_0, %c0_i32_1 : i32, i32, i32
  }
  func.func @transform_2(%arg0: i32) -> (i32, i32) {
    %c0_i32 = arith.constant 0 : i32
    %c0_i32_0 = arith.constant 0 : i32
    %c0_i32_1 = arith.constant 0 : i32
    return %c0_i32, %c0_i32_0 : i32, i32
  }
  func.func @transform_3(%arg0: i32) -> (i32, i32) {
    %c0_i32 = arith.constant 0 : i32
    %c0_i32_0 = arith.constant 0 : i32
    %c0_i32_1 = arith.constant 0 : i32
    return %c0_i32, %c0_i32_0 : i32, i32
  }
  func.func @transform_4(%arg0: i32) -> (i32, i32, i32) {
    %c0_i32 = arith.constant 0 : i32
    %c0_i32_0 = arith.constant 0 : i32
    %c0_i32_1 = arith.constant 0 : i32
    return %arg0, %c0_i32, %c0_i32_0 : i32, i32, i32
  }
}

module attributes {stable_mosaic.version = 11 : i64} {
  func.func @_tail_mlp_kernel(%arg0: i32, %arg1: memref<1x416xf32, #tpu.memory_space<vmem>>, %arg2: memref<416x97xf32, #tpu.memory_space<vmem>>, %arg3: memref<1x97xf32, #tpu.memory_space<vmem>>, %arg4: memref<97x3xf32, #tpu.memory_space<vmem>>, %arg5: memref<1x3xf32, #tpu.memory_space<vmem>>, %arg6: memref<1x3xf32, #tpu.memory_space<vmem>>) attributes {dimension_semantics = [#tpu.dimension_semantics<arbitrary>], iteration_bounds = array<i64: 1>, scalar_prefetch = 0 : i64, scratch_operands = 0 : i64, tpu.core_type = #tpu.core_type<tc>, window_params = [{pipeline_mode = #tpu.pipeline_mode<synchronous>, transform_indices = @transform_0, window_bounds = array<i64: 1, 416>}, {pipeline_mode = #tpu.pipeline_mode<synchronous>, transform_indices = @transform_1, window_bounds = array<i64: 416, 97>}, {pipeline_mode = #tpu.pipeline_mode<synchronous>, transform_indices = @transform_2, window_bounds = array<i64: 1, 97>}, {pipeline_mode = #tpu.pipeline_mode<synchronous>, transform_indices = @transform_3, window_bounds = array<i64: 97, 3>}, {pipeline_mode = #tpu.pipeline_mode<synchronous>, transform_indices = @transform_4, window_bounds = array<i64: 1, 3>}, {pipeline_mode = #tpu.pipeline_mode<synchronous>, transform_indices = @transform_5, window_bounds = array<i64: 1, 3>}]} {
    %c0 = arith.constant 0 : index
    %c0_0 = arith.constant 0 : index
    %0 = vector.load %arg1[%c0, %c0_0] : memref<1x416xf32, #tpu.memory_space<vmem>>, vector<1x416xf32>
    %c0_1 = arith.constant 0 : index
    %c0_2 = arith.constant 0 : index
    %1 = vector.load %arg2[%c0_1, %c0_2] : memref<416x97xf32, #tpu.memory_space<vmem>>, vector<416x97xf32>
    %cst = arith.constant dense<0.000000e+00> : vector<1x97xf32>
    %2 = tpu.matmul %0, %1, %cst {dimension_numbers = #tpu.dot_dimension_numbers<[1], [0], [0], [1], [0, 0, 1, 1], [], []>} : vector<1x416xf32>, vector<416x97xf32>, vector<1x97xf32> -> vector<1x97xf32>
    %c0_3 = arith.constant 0 : index
    %c0_4 = arith.constant 0 : index
    %3 = vector.load %arg3[%c0_3, %c0_4] : memref<1x97xf32, #tpu.memory_space<vmem>>, vector<1x97xf32>
    %4 = arith.addf %2, %3 : vector<1x97xf32>
    %cst_5 = arith.constant 0.000000e+00 : f32
    %5 = vector.broadcast %cst_5 : f32 to vector<1x97xf32>
    %6 = arith.maximumf %4, %5 : vector<1x97xf32>
    %c0_6 = arith.constant 0 : index
    %c0_7 = arith.constant 0 : index
    %7 = vector.load %arg4[%c0_6, %c0_7] : memref<97x3xf32, #tpu.memory_space<vmem>>, vector<97x3xf32>
    %cst_8 = arith.constant dense<0.000000e+00> : vector<1x3xf32>
    %8 = tpu.matmul %6, %7, %cst_8 {dimension_numbers = #tpu.dot_dimension_numbers<[1], [0], [0], [1], [0, 0, 1, 1], [], []>} : vector<1x97xf32>, vector<97x3xf32>, vector<1x3xf32> -> vector<1x3xf32>
    %c0_9 = arith.constant 0 : index
    %c0_10 = arith.constant 0 : index
    %9 = vector.load %arg5[%c0_9, %c0_10] : memref<1x3xf32, #tpu.memory_space<vmem>>, vector<1x3xf32>
    %10 = arith.addf %8, %9 : vector<1x3xf32>
    %c0_11 = arith.constant 0 : index
    %c0_12 = arith.constant 0 : index
    %11 = vector.load %arg6[%c0_11, %c0_12] : memref<1x3xf32, #tpu.memory_space<vmem>>, vector<1x3xf32>
    tpu.vector_store %arg6[%c0_11, %c0_12], %10 {strides = array<i32>} : memref<1x3xf32, #tpu.memory_space<vmem>>, vector<1x3xf32>,
    return
  }
  func.func @transform_0(%arg0: i32) -> (i32, i32) {
    %c0_i32 = arith.constant 0 : i32
    %c0_i32_0 = arith.constant 0 : i32
    %c0_i32_1 = arith.constant 0 : i32
    return %c0_i32, %c0_i32_0 : i32, i32
  }
  func.func @transform_1(%arg0: i32) -> (i32, i32) {
    %c0_i32 = arith.constant 0 : i32
    %c0_i32_0 = arith.constant 0 : i32
    %c0_i32_1 = arith.constant 0 : i32
    return %c0_i32, %c0_i32_0 : i32, i32
  }
  func.func @transform_2(%arg0: i32) -> (i32, i32) {
    %c0_i32 = arith.constant 0 : i32
    %c0_i32_0 = arith.constant 0 : i32
    %c0_i32_1 = arith.constant 0 : i32
    return %c0_i32, %c0_i32_0 : i32, i32
  }
  func.func @transform_3(%arg0: i32) -> (i32, i32) {
    %c0_i32 = arith.constant 0 : i32
    %c0_i32_0 = arith.constant 0 : i32
    %c0_i32_1 = arith.constant 0 : i32
    return %c0_i32, %c0_i32_0 : i32, i32
  }
  func.func @transform_4(%arg0: i32) -> (i32, i32) {
    %c0_i32 = arith.constant 0 : i32
    %c0_i32_0 = arith.constant 0 : i32
    %c0_i32_1 = arith.constant 0 : i32
    return %c0_i32, %c0_i32_0 : i32, i32
  }
  func.func @transform_5(%arg0: i32) -> (i32, i32) {
    %c0_i32 = arith.constant 0 : i32
    %c0_i32_0 = arith.constant 0 : i32
    %c0_i32_1 = arith.constant 0 : i32
    return %c0_i32, %c0_i32_0 : i32, i32
  }
}

</mosaic_0001>

<llo_original>
// kernel: squeeze.1
$region0: #{squeeze.1}
  %s0 = inlined_call_operand.vmem [shape: f32[13,32], index: 0, kind: input, shape index: {}]
  %s1 = inlined_call_operand.vmem [shape: f32[1,416], index: 1, kind: output, shape index: {}]
  $region1: #{squeeze.1} parent=0
    #allocation0 [shape = 'u8[16384]{0}', space=vmem, size = 0x4000, scoped, tag = 'scoped mem for output reshape']
    %v2 = vld [vmem:[%s0] ss:$4 sm:$0xf]
    %vm3 = vcmask 261120
    %4 = vst.msk [vmem:[#allocation0] ss:$8 sm:$0xf] %vm3, %v2
    %s5 = scalar_lea.vmem %s0, 3
    %v6 = vld [vmem:[%s5] ss:$4 sm:$0x7]
    %7 = vrot.lane.b32.xlu0 %v6, 96
    %v8 = vpop.permute.xlu0 %7
    %vm9 = vcmask 1048320
    %10 = vst.msk [vmem:[#allocation0] ss:$8 sm:$0x7] %vm9, %v8
    %s11 = scalar_lea.vmem %s0, 2
    %v12 = vld [vmem:[%s11] ss:$4 sm:$0x7]
    %13 = vrot.lane.b32.xlu0 %v12, 64
    %v14 = vpop.permute.xlu0 %13
    %vm15 = vcmask 785920
    %16 = vst.msk [vmem:[#allocation0] ss:$8 sm:$0x7] %vm15, %v14
    %s17 = scalar_lea.vmem %s0, 1
    %v18 = vld [vmem:[%s17] ss:$4 sm:$0x7]
    %19 = vrot.lane.b32.xlu0 %v18, 32
    %v20 = vpop.permute.xlu0 %19
    %vm21 = vcmask 523520
    %22 = vst.msk [vmem:[#allocation0] ss:$8 sm:$0x7] %vm21, %v20
    %s24 = sshll.u32 1, 1
    %s25 = ssub.s32 %s24, 1
    %v27 = vld [vmem:[#allocation0] sm:%s25]
    %s28 = sshll.u32 1, 1
    %s29 = ssub.s32 %s28, 1
    %30 = vst [vmem:[%s1] sm:%s29] %v27
    %s31 = scalar_lea.vmem [#allocation0], 8
    %v32 = vld [vmem:[%s31] sm:%s25]
    %s33 = sshll.u32 1, 1
    %s34 = ssub.s32 %s33, 1
    %s35 = scalar_lea.vmem %s1, 1
    %36 = vst [vmem:[%s35] sm:%s34] %v32
    %s37 = scalar_lea.vmem [#allocation0], 16
    %v38 = vld [vmem:[%s37] sm:%s25]
    %s39 = sshll.u32 1, 1
    %s40 = ssub.s32 %s39, 1
    %s41 = smul.addr 1, 2
    %s42 = scalar_lea.vmem %s1, %s41
    %43 = vst [vmem:[%s42] sm:%s40] %v38
    %s44 = scalar_lea.vmem [#allocation0], 24
    %v45 = vld [vmem:[%s44] sm:%s25]
    %s46 = sshll.u32 1, 1
    %s47 = ssub.s32 %s46, 1
    %s48 = smul.addr 1, 3
    %s49 = scalar_lea.vmem %s1, %s48
    %50 = vst [vmem:[%s49] sm:%s47] %v45

// kernel: heffann_forward.3
$region0: #{heffann_forward.3}
  #allocation0 [shape = 'u32[]', space=smem, size = 0x4, offset = 0x4, fixed_abs, tag = 'smem constant byte address 0x4 - core index']
  #allocation1 [shape = 'u32[144,128]{1,0:T(1,128)}', space=vmem, size = 0x12000, scoped, tag = 'internal scratch']
  %s0 = inlined_call_operand.vmem [shape: f32[1,416], index: 0, kind: input, shape index: {}]
  %s1 = inlined_call_operand.vmem [shape: f32[416,97], index: 1, kind: input, shape index: {}]
  %s2 = inlined_call_operand.vmem [shape: f32[1,97], index: 2, kind: input, shape index: {}]
  %s3 = inlined_call_operand.vmem [shape: f32[97,3], index: 3, kind: input, shape index: {}]
  %s4 = inlined_call_operand.vmem [shape: f32[1,3], index: 4, kind: input, shape index: {}]
  %s5 = inlined_call_operand.hbm [shape: f32[1,3], index: 5, kind: output, shape index: {}]
  %s6 = sld [smem:[#allocation0]]
  $region30: #{heffann_forward.3} parent=0
    _
  %s8 = ssub.s32 1, %s6
  %s9 = scalar_select 0, %s8, %s6
  $region1: #{heffann_forward.3} parent=0
    #allocation2 [shape = 'u8[512]{0}', space=vmem, size = 0x400, scoped, tag = 'output window, operand 0, single buffered']
    #allocation3 [shape = 's32[1]{0}', space=sflag, size = 0x4, scoped, tag = 'scoped memory for heffann_forward.3']
    %10 = vsyncpa [#allocation3], 0
    // Predicated region
    $region2: #{heffann_forward.3} parent=1 // pred_check
      _
    $region3: #{heffann_forward.3} parent=1 // pred_check_branch
      %12 = sbr.rel (0) target = $region5
    $region4: #{heffann_forward.3} parent=1 // pred_region
      _
    $region5: #{heffann_forward.3} parent=1 // pred_fallthru
      _
    // Predicated region
    $region6: #{heffann_forward.3} parent=1 // pred_check
      _
    $region7: #{heffann_forward.3} parent=1 // pred_check_branch
      %14 = sbr.rel (0) target = $region9
    $region8: #{heffann_forward.3} parent=1 // pred_region
      _
    $region9: #{heffann_forward.3} parent=1 // pred_fallthru
      _
    // Predicated region
    $region10: #{heffann_forward.3} parent=1 // pred_check
      _
    $region11: #{heffann_forward.3} parent=1 // pred_check_branch
      %16 = sbr.rel (0) target = $region13
    $region12: #{heffann_forward.3} parent=1 // pred_region
      _
    $region13: #{heffann_forward.3} parent=1 // pred_fallthru
      _
    // Predicated region
    $region14: #{heffann_forward.3} parent=1 // pred_check
      _
    $region15: #{heffann_forward.3} parent=1 // pred_check_branch
      %18 = sbr.rel (0) target = $region17
    $region16: #{heffann_forward.3} parent=1 // pred_region
      _
    $region17: #{heffann_forward.3} parent=1 // pred_fallthru
      _
    // Predicated region
    $region18: #{heffann_forward.3} parent=1 // pred_check
      _
    $region19: #{heffann_forward.3} parent=1 // pred_check_branch
      %20 = sbr.rel (0) target = $region21
    $region20: #{heffann_forward.3} parent=1 // pred_region
      _
    $region21: #{heffann_forward.3} parent=1 // pred_fallthru
      _
    %v21 = vld [vmem:[%s0] sm:$0xf]
    %v22 = vld [vmem:[%s1] sm:$0xff]
    %v23 = vld [vmem:[%s1 + $0x8] sm:$0xff]
    %v24 = vld [vmem:[%s1 + $0x10] sm:$0xff]
    %v25 = vld [vmem:[%s1 + $0x18] sm:$0xff]
    %v26 = vld [vmem:[%s1 + $0x20] sm:$0xff]
    %v27 = vld [vmem:[%s1 + $0x28] sm:$0xff]
    %v28 = vld [vmem:[%s1 + $0x30] sm:$0xff]
    %v29 = vld [vmem:[%s1 + $0x38] sm:$0xff]
    %v30 = vld [vmem:[%s1 + $0x40] sm:$0xff]
    %v31 = vld [vmem:[%s1 + $0x48] sm:$0xff]
    %v32 = vld [vmem:[%s1 + $0x50] sm:$0xff]
    %v33 = vld [vmem:[%s1 + $0x58] sm:$0xff]
    %v34 = vld [vmem:[%s1 + $0x60] sm:$0xff]
    %v35 = vld [vmem:[%s1 + $0x68] sm:$0xff]
    %v36 = vld [vmem:[%s1 + $0x70] sm:$0xff]
    %v37 = vld [vmem:[%s1 + $0x78] sm:$0xff]
    %v38 = vld [vmem:[%s1 + $0x80] sm:$0xff]
    %v39 = vld [vmem:[%s1 + $0x88] sm:$0xff]
    %v40 = vld [vmem:[%s1 + $0x90] sm:$0xff]
    %v41 = vld [vmem:[%s1 + $0x98] sm:$0xff]
    %v42 = vld [vmem:[%s1 + $0xa0] sm:$0xff]
    %v43 = vld [vmem:[%s1 + $0xa8] sm:$0xff]
    %v44 = vld [vmem:[%s1 + $0xb0] sm:$0xff]
    %v45 = vld [vmem:[%s1 + $0xb8] sm:$0xff]
    %v46 = vld [vmem:[%s1 + $0xc0] sm:$0xff]
    %v47 = vld [vmem:[%s1 + $0xc8] sm:$0xff]
    %v48 = vld [vmem:[%s1 + $0xd0] sm:$0xff]
    %v49 = vld [vmem:[%s1 + $0xd8] sm:$0xff]
    %v50 = vld [vmem:[%s1 + $0xe0] sm:$0xff]
    %v51 = vld [vmem:[%s1 + $0xe8] sm:$0xff]
    %v52 = vld [vmem:[%s1 + $0xf0] sm:$0xff]
    %v53 = vld [vmem:[%s1 + $0xf8] sm:$0xff]
    %v54 = vld [vmem:[%s1 + $0x100] sm:$0xff]
    %v55 = vld [vmem:[%s1 + $0x108] sm:$0xff]
    %v56 = vld [vmem:[%s1 + $0x110] sm:$0xff]
    %v57 = vld [vmem:[%s1 + $0x118] sm:$0xff]
    %v58 = vld [vmem:[%s1 + $0x120] sm:$0xff]
    %v59 = vld [vmem:[%s1 + $0x128] sm:$0xff]
    %v60 = vld [vmem:[%s1 + $0x130] sm:$0xff]
    %v61 = vld [vmem:[%s1 + $0x138] sm:$0xff]
    %v62 = vld [vmem:[%s1 + $0x140] sm:$0xff]
    %v63 = vld [vmem:[%s1 + $0x148] sm:$0xff]
    %v64 = vld [vmem:[%s1 + $0x150] sm:$0xff]
    %v65 = vld [vmem:[%s1 + $0x158] sm:$0xff]
    %v66 = vld [vmem:[%s1 + $0x160] sm:$0xff]
    %v67 = vld [vmem:[%s1 + $0x168] sm:$0xff]
    %v68 = vld [vmem:[%s1 + $0x170] sm:$0xff]
    %v69 = vld [vmem:[%s1 + $0x178] sm:$0xff]
    %v70 = vld [vmem:[%s1 + $0x180] sm:$0xff]
    %v71 = vld [vmem:[%s1 + $0x188] sm:$0xff]
    %v72 = vld [vmem:[%s1 + $0x190] sm:$0xff]
    %v73 = vld [vmem:[%s1 + $0x198] sm:$0xff]
    %v74 = vld [vmem:[%s2] sm:$0x1]
    %v76 = vlaneseq
    %v77 = vshrl.u32 %v76, 7
    %v78 = vsub.s32 0, %v77
    %v79 = vrot.slane %v21, %v78
    %v80 = vlaneseq
    %v81 = vshrl.u32 %v80, 7
    %v82 = vsub.s32 1, %v81
    %v83 = vrot.slane %v21, %v82
    %v84 = vlaneseq
    %v85 = vshrl.u32 %v84, 7
    %v86 = vsub.s32 2, %v85
    %v87 = vrot.slane %v21, %v86
    %v88 = vlaneseq
    %v89 = vshrl.u32 %v88, 7
    %v90 = vsub.s32 3, %v89
    %v91 = vrot.slane %v21, %v90
    %vm95 = vcmask 261120
    %v96 = vsel %vm95, %v91, 0
    %98 = vmatprep.subr.mxu0 0.0
    %99 = vmatpush1.msra.mxu0 %v37
    %100 = vmatprep.subr.mxu0 0.0
    %101 = vmatpush1.msra.mxu0 %v36
    %102 = vmatprep.subr.mxu0 0.0
    %103 = vmatpush1.msra.mxu0 %v35
    %104 = vmatprep.subr.mxu0 0.0
    %105 = vmatpush1.msra.mxu0 %v34
    %106 = vmatprep.subr.mxu0 0.0
    %107 = vmatpush1.msra.mxu0 %v33
    %108 = vmatprep.subr.mxu0 0.0
    %109 = vmatpush1.msra.mxu0 %v32
    %110 = vmatprep.subr.mxu0 0.0
    %111 = vmatpush1.msra.mxu0 %v31
    %112 = vmatprep.subr.mxu0 0.0
    %113 = vmatpush1.msra.mxu0 %v30
    %114 = vmatprep.subr.mxu0 0.0
    %115 = vmatpush1.msra.mxu0 %v29
    %116 = vmatprep.subr.mxu0 0.0
    %117 = vmatpush1.msra.mxu0 %v28
    %118 = vmatprep.subr.mxu0 0.0
    %119 = vmatpush1.msra.mxu0 %v27
    %120 = vmatprep.subr.mxu0 0.0
    %121 = vmatpush1.msra.mxu0 %v26
    %122 = vmatprep.subr.mxu0 0.0
    %123 = vmatpush1.msra.mxu0 %v25
    %124 = vmatprep.subr.mxu0 0.0
    %125 = vmatpush1.msra.mxu0 %v24
    %126 = vmatprep.subr.mxu0 0.0
    %127 = vmatpush1.msra.mxu0 %v23
    %128 = vmatprep.subr.mxu0 0.0
    %129 = vmatpush1.msra.mxu0 %v22
    %130 = vmatprep.subr.mxu0 0.0
    %131 = vmatpush2.msra.mxu0 %v53
    %132 = vmatprep.subr.mxu0 0.0
    %133 = vmatpush2.msra.mxu0 %v52
    %134 = vmatprep.subr.mxu0 0.0
    %135 = vmatpush2.msra.mxu0 %v51
    %136 = vmatprep.subr.mxu0 0.0
    %137 = vmatpush2.msra.mxu0 %v50
    %138 = vmatprep.subr.mxu0 0.0
    %139 = vmatpush2.msra.mxu0 %v49
    %140 = vmatprep.subr.mxu0 0.0
    %141 = vmatpush2.msra.mxu0 %v48
    %142 = vmatprep.subr.mxu0 0.0
    %143 = vmatpush2.msra.mxu0 %v47
    %144 = vmatprep.subr.mxu0 0.0
    %145 = vmatpush2.msra.mxu0 %v46
    %146 = vmatprep.subr.mxu0 0.0
    %147 = vmatpush2.msra.mxu0 %v45
    %148 = vmatprep.subr.mxu0 0.0
    %149 = vmatpush2.msra.mxu0 %v44
    %150 = vmatprep.subr.mxu0 0.0
    %151 = vmatpush2.msra.mxu0 %v43
    %152 = vmatprep.subr.mxu0 0.0
    %153 = vmatpush2.msra.mxu0 %v42
    %154 = vmatprep.subr.mxu0 0.0
    %155 = vmatpush2.msra.mxu0 %v41
    %156 = vmatprep.subr.mxu0 0.0
    %157 = vmatpush2.msra.mxu0 %v40
    %158 = vmatprep.subr.mxu0 0.0
    %159 = vmatpush2.msra.mxu0 %v39
    %160 = vmatprep.subr.mxu0 0.0
    %161 = vmatpush2.msra.mxu0 %v38
    %162 = vmatprep.mubr.f32.mxu0 %v83
    %163 = vmatmul.mubr.f32.gmra.mxu0 %v79
    %v164 = vpop.f32.mrf.mxu0
    %v165 = vadd.f32 %v74, %v164
    %v166 = vpop.f32.mrf.mxu0
    %167 = vdwg.mxu0
    %168 = vmatprep.subr.mxu0 0.0
    %169 = vmatpush1.msra.mxu0 %v69
    %170 = vmatprep.subr.mxu0 0.0
    %171 = vmatpush1.msra.mxu0 %v68
    %172 = vmatprep.subr.mxu0 0.0
    %173 = vmatpush1.msra.mxu0 %v67
    %174 = vmatprep.subr.mxu0 0.0
    %175 = vmatpush1.msra.mxu0 %v66
    %176 = vmatprep.subr.mxu0 0.0
    %177 = vmatpush1.msra.mxu0 %v65
    %178 = vmatprep.subr.mxu0 0.0
    %179 = vmatpush1.msra.mxu0 %v64
    %180 = vmatprep.subr.mxu0 0.0
    %181 = vmatpush1.msra.mxu0 %v63
    %182 = vmatprep.subr.mxu0 0.0
    %183 = vmatpush1.msra.mxu0 %v62
    %184 = vmatprep.subr.mxu0 0.0
    %185 = vmatpush1.msra.mxu0 %v61
    %186 = vmatprep.subr.mxu0 0.0
    %187 = vmatpush1.msra.mxu0 %v60
    %188 = vmatprep.subr.mxu0 0.0
    %189 = vmatpush1.msra.mxu0 %v59
    %190 = vmatprep.subr.mxu0 0.0
    %191 = vmatpush1.msra.mxu0 %v58
    %192 = vmatprep.subr.mxu0 0.0
    %193 = vmatpush1.msra.mxu0 %v57
    %194 = vmatprep.subr.mxu0 0.0
    %195 = vmatpush1.msra.mxu0 %v56
    %196 = vmatprep.subr.mxu0 0.0
    %197 = vmatpush1.msra.mxu0 %v55
    %198 = vmatprep.subr.mxu0 0.0
    %199 = vmatpush1.msra.mxu0 %v54
    %200 = vmatprep.subr.mxu0 0.0
    %201 = vmatpush2.msra.mxu0 0.0
    %202 = vmatprep.subr.mxu0 0.0
    %203 = vmatpush2.msra.mxu0 0.0
    %204 = vmatprep.subr.mxu0 0.0
    %205 = vmatpush2.msra.mxu0 0.0
    %206 = vmatprep.subr.mxu0 0.0
    %207 = vmatpush2.msra.mxu0 0.0
    %208 = vmatprep.subr.mxu0 0.0
    %209 = vmatpush2.msra.mxu0 0.0
    %210 = vmatprep.subr.mxu0 0.0
    %211 = vmatpush2.msra.mxu0 0.0
    %212 = vmatprep.subr.mxu0 0.0
    %213 = vmatpush2.msra.mxu0 0.0
    %214 = vmatprep.subr.mxu0 0.0
    %215 = vmatpush2.msra.mxu0 0.0
    %216 = vmatprep.subr.mxu0 0.0
    %217 = vmatpush2.msra.mxu0 0.0
    %218 = vmatprep.subr.mxu0 0.0
    %219 = vmatpush2.msra.mxu0 0.0
    %220 = vmatprep.subr.mxu0 0.0
    %221 = vmatpush2.msra.mxu0 0.0
    %222 = vmatprep.subr.mxu0 0.0
    %223 = vmatpush2.msra.mxu0 0.0
    %224 = vmatprep.subr.mxu0 0.0
    %225 = vmatpush2.msra.mxu0 %v73
    %226 = vmatprep.subr.mxu0 0.0
    %227 = vmatpush2.msra.mxu0 %v72
    %228 = vmatprep.subr.mxu0 0.0
    %229 = vmatpush2.msra.mxu0 %v71
    %230 = vmatprep.subr.mxu0 0.0
    %231 = vmatpush2.msra.mxu0 %v70
    %232 = vmatprep.mubr.f32.mxu0 %v96
    %233 = vmatmul.mubr.f32.gmra.mxu0 %v87
    %v234 = vpop.f32.mrf.mxu0
    %v235 = vadd.f32 %v165, %v234
    %v236 = vpop.f32.mrf.mxu0
    %237 = vdwg.mxu0
    %v238 = vmax.f32 %v235, 0.0
    %v239 = vld [vmem:[%s3] sm:$0xff]
    %v240 = vld [vmem:[%s3 + $0x8] sm:$0xff]
    %v241 = vld [vmem:[%s3 + $0x10] sm:$0xff]
    %v242 = vld [vmem:[%s3 + $0x18] sm:$0xff]
    %v243 = vld [vmem:[%s3 + $0x20] sm:$0xff]
    %v244 = vld [vmem:[%s3 + $0x28] sm:$0xff]
    %v245 = vld [vmem:[%s3 + $0x30] sm:$0xff]
    %v246 = vld [vmem:[%s3 + $0x38] sm:$0xff]
    %v247 = vld [vmem:[%s3 + $0x40] sm:$0xff]
    %v248 = vld [vmem:[%s3 + $0x48] sm:$0xff]
    %v249 = vld [vmem:[%s3 + $0x50] sm:$0xff]
    %v250 = vld [vmem:[%s3 + $0x58] sm:$0xff]
    %v251 = vld [vmem:[%s3 + $0x60] sm:$0x1]
    %v252 = vld [vmem:[%s4] sm:$0x1]
    %vm253 = vcmask 793600
    %v255 = vsel %vm253, %v238, 0
    %vm257 = vcmask 1040384
    %v259 = vsel %vm257, %v251, 0
    %261 = vmatprep.subr.mxu0 0.0
    %262 = vmatpush1.msra.mxu0 0.0
    %263 = vmatprep.subr.mxu0 0.0
    %264 = vmatpush1.msra.mxu0 0.0
    %265 = vmatprep.subr.mxu0 0.0
    %266 = vmatpush1.msra.mxu0 0.0
    %267 = vmatprep.subr.mxu0 0.0
    %268 = vmatpush1.msra.mxu0 %v259
    %269 = vmatprep.subr.mxu0 0.0
    %270 = vmatpush1.msra.mxu0 %v250
    %271 = vmatprep.subr.mxu0 0.0
    %272 = vmatpush1.msra.mxu0 %v249
    %273 = vmatprep.subr.mxu0 0.0
    %274 = vmatpush1.msra.mxu0 %v248
    %275 = vmatprep.subr.mxu0 0.0
    %276 = vmatpush1.msra.mxu0 %v247
    %277 = vmatprep.subr.mxu0 0.0
    %278 = vmatpush1.msra.mxu0 %v246
    %279 = vmatprep.subr.mxu0 0.0
    %280 = vmatpush1.msra.mxu0 %v245
    %281 = vmatprep.subr.mxu0 0.0
    %282 = vmatpush1.msra.mxu0 %v244
    %283 = vmatprep.subr.mxu0 0.0
    %284 = vmatpush1.msra.mxu0 %v243
    %285 = vmatprep.subr.mxu0 0.0
    %286 = vmatpush1.msra.mxu0 %v242
    %287 = vmatprep.subr.mxu0 0.0
    %288 = vmatpush1.msra.mxu0 %v241
    %289 = vmatprep.subr.mxu0 0.0
    %290 = vmatpush1.msra.mxu0 %v240
    %291 = vmatprep.subr.mxu0 0.0
    %292 = vmatpush1.msra.mxu0 %v239
    %293 = vmatprep.subr.mxu0 0.0
    %294 = vmatpush2.msra.mxu0 0.0
    %295 = vmatprep.subr.mxu0 0.0
    %296 = vmatpush2.msra.mxu0 0.0
    %297 = vmatprep.subr.mxu0 0.0
    %298 = vmatpush2.msra.mxu0 0.0
    %299 = vmatprep.subr.mxu0 0.0
    %300 = vmatpush2.msra.mxu0 0.0
    %301 = vmatprep.subr.mxu0 0.0
    %302 = vmatpush2.msra.mxu0 0.0
    %303 = vmatprep.subr.mxu0 0.0
    %304 = vmatpush2.msra.mxu0 0.0
    %305 = vmatprep.subr.mxu0 0.0
    %306 = vmatpush2.msra.mxu0 0.0
    %307 = vmatprep.subr.mxu0 0.0
    %308 = vmatpush2.msra.mxu0 0.0
    %309 = vmatprep.subr.mxu0 0.0
    %310 = vmatpush2.msra.mxu0 0.0
    %311 = vmatprep.subr.mxu0 0.0
    %312 = vmatpush2.msra.mxu0 0.0
    %313 = vmatprep.subr.mxu0 0.0
    %314 = vmatpush2.msra.mxu0 0.0
    %315 = vmatprep.subr.mxu0 0.0
    %316 = vmatpush2.msra.mxu0 0.0
    %317 = vmatprep.subr.mxu0 0.0
    %318 = vmatpush2.msra.mxu0 0.0
    %319 = vmatprep.subr.mxu0 0.0
    %320 = vmatpush2.msra.mxu0 0.0
    %321 = vmatprep.subr.mxu0 0.0
    %322 = vmatpush2.msra.mxu0 0.0
    %323 = vmatprep.subr.mxu0 0.0
    %324 = vmatpush2.msra.mxu0 0.0
    %325 = vmatprep.mubr.f32.mxu0 0.0
    %326 = vmatmul.mubr.f32.gmra.mxu0 %v255
    %v327 = vpop.f32.mrf.mxu0
    %v328 = vadd.f32 %v252, %v327
    %v329 = vpop.f32.mrf.mxu0
    %330 = vdwg.mxu0
    %vm331 = vcmask 16384
    %332 = vst.msk [vmem:[#allocation2] sm:$0x1] %vm331, %v328
    // Predicated region
    $region22: #{heffann_forward.3} parent=1 // pred_check
      _
    $region23: #{heffann_forward.3} parent=1 // pred_check_branch
      %334 = sbr.rel (0) target = $region25
    $region24: #{heffann_forward.3} parent=1 // pred_region
      %s336 = ssub.s32 16, 16
      %337 = vsyncadd [#allocation3], %s336
      %s339 = sshll.u32 [#allocation2], 4
      %s340 = int_to_ptr.vmem [resolvable:$true] %s339
      %342 = dma.vmem_to_hbm [thread:$0]  %s340, 16, %s5, [#allocation3]
    $region25: #{heffann_forward.3} parent=1 // pred_fallthru
      _
    // Predicated region
    $region26: #{heffann_forward.3} parent=1 // pred_check
      _
    $region27: #{heffann_forward.3} parent=1 // pred_check_branch
      %344 = sbr.rel (0) target = $region29
    $region28: #{heffann_forward.3} parent=1 // pred_region
      %345 = dma.done [#allocation3], 16
    $region29: #{heffann_forward.3} parent=1 // pred_fallthru
      _
    %346 = vsyncpa [#allocation3], 1

// kernel: heffann_forward.2
$region0: #{heffann_forward.2}
  #allocation0 [shape = 'u32[]', space=smem, size = 0x4, offset = 0x4, fixed_abs, tag = 'smem constant byte address 0x4 - core index']
  #allocation1 [shape = 'u32[144,128]{1,0:T(1,128)}', space=vmem, size = 0x12000, scoped, tag = 'internal scratch']
  %s0 = inlined_call_operand.vmem [shape: bf16[18,12,512], index: 0, kind: input, shape index: {}]
  %s1 = inlined_call_operand.vmem [shape: bf16[4,32,12], index: 1, kind: input, shape index: {}]
  %s2 = inlined_call_operand.vmem [shape: f32[32,1], index: 2, kind: input, shape index: {}]
  %s3 = inlined_call_operand.vmem [shape: f32[1,384], index: 3, kind: input, shape index: {}]
  %s4 = inlined_call_operand.vmem [shape: f32[18,32,8], index: 4, kind: output, shape index: {}]
  %s5 = sld [smem:[#allocation0]]
  $region49: #{heffann_forward.2} parent=0
    _
  %s7 = ssub.s32 1, %s5
  %s8 = scalar_select 0, %s7, %s5
  loop: start=0, step=1, limit=5
  $region2: #{heffann_forward.2} parent=0 // loop_pre_header
    _
  $region3: #{heffann_forward.2} parent=0 // loop_header
    %s10 = sphi 0, %s14
    %p11 = scmp.ge.s32.totalorder %s10, 5
    %s20 = sphi 0, %s22
    %s23 = sphi 0, %s20
    %s24 = sphi 0, %s23
    %s40 = sphi 0, %s24
    %s44 = sphi 0, %s44
    %s46 = sphi 0, %s44
    %s47 = sphi 0, %s46
    %s61 = sphi 0, %s47
    %s65 = sphi 0, %s65
    %s67 = sphi 0, %s65
    %s68 = sphi 0, %s67
    %s82 = sphi 0, %s68
    %s86 = sphi 0, %s86
    %s88 = sphi 0, %s86
    %s89 = sphi 0, %s88
    %s103 = sphi 0, %s89
    %s109 = sphi 0, %s111
    %s112 = sphi 0, %s109
    %s113 = sphi 0, %s112
    %s129 = sphi 0, %s113
  $region4: #{heffann_forward.2} parent=0 // loop_header_branch
    %13 = sbr.rel (%p11) target = $region8
  $region5: #{heffann_forward.2} parent=0 // loop_body
    %s15 = ssub.s32 %s10, 1
    %s16 = ssub.s32 %s10, 2
    %s17 = sadd.s32 %s10, 1
    %s18 = ssub.s32 %s10, %s17
    %p19 = scmp.eq.s32.totalorder %s18, 0
    %s21 = sadd.s32 %s20, 1
    %s22 = scalar_select %p19, %s20, %s21
    %p25 = pneg %p19
    %p26 = scmp.eq.s32.totalorder %s10, 2
    %p27 = por %p25, %p26
    %p28 = scmp.ne.s32.totalorder %s20, %s23
    %p29 = scmp.eq.s32.totalorder %s10, 0
    %p30 = por %p28, %p29
    %p31 = scmp.ne.s32.totalorder %s20, %s23
    %p32 = scmp.eq.s32.totalorder %s15, 2
    %p33 = por %p31, %p32
    %p34 = scmp.ne.s32.totalorder %s23, %s24
    %p35 = scmp.eq.s32.totalorder %s15, 0
    %p36 = por %p34, %p35
    %p37 = scmp.ne.s32.totalorder %s23, %s24
    %p38 = scmp.eq.s32.totalorder %s16, 2
    %p39 = por %p37, %p38
    %p41 = scmp.ne.s32.totalorder %s24, %s40
    %p42 = scmp.eq.s32.totalorder %s16, 0
    %p43 = por %p41, %p42
    %s45 = sadd.s32 %s44, 1
    %p48 = scmp.eq.s32.totalorder %s10, 2
    %p49 = scmp.ne.s32.totalorder %s44, %s46
    %p50 = scmp.eq.s32.totalorder %s10, 0
    %p51 = por %p49, %p50
    %p52 = scmp.ne.s32.totalorder %s44, %s46
    %p53 = scmp.eq.s32.totalorder %s15, 2
    %p54 = por %p52, %p53
    %p55 = scmp.ne.s32.totalorder %s46, %s47
    %p56 = scmp.eq.s32.totalorder %s15, 0
    %p57 = por %p55, %p56
    %p58 = scmp.ne.s32.totalorder %s46, %s47
    %p59 = scmp.eq.s32.totalorder %s16, 2
    %p60 = por %p58, %p59
    %p62 = scmp.ne.s32.totalorder %s47, %s61
    %p63 = scmp.eq.s32.totalorder %s16, 0
    %p64 = por %p62, %p63
    %s66 = sadd.s32 %s65, 1
    %p69 = scmp.eq.s32.totalorder %s10, 2
    %p70 = scmp.ne.s32.totalorder %s65, %s67
    %p71 = scmp.eq.s32.totalorder %s10, 0
    %p72 = por %p70, %p71
    %p73 = scmp.ne.s32.totalorder %s65, %s67
    %p74 = scmp.eq.s32.totalorder %s15, 2
    %p75 = por %p73, %p74
    %p76 = scmp.ne.s32.totalorder %s67, %s68
    %p77 = scmp.eq.s32.totalorder %s15, 0
    %p78 = por %p76, %p77
    %p79 = scmp.ne.s32.totalorder %s67, %s68
    %p80 = scmp.eq.s32.totalorder %s16, 2
    %p81 = por %p79, %p80
    %p83 = scmp.ne.s32.totalorder %s68, %s82
    %p84 = scmp.eq.s32.totalorder %s16, 0
    %p85 = por %p83, %p84
    %s87 = sadd.s32 %s86, 1
    %p90 = scmp.eq.s32.totalorder %s10, 2
    %p91 = scmp.ne.s32.totalorder %s86, %s88
    %p92 = scmp.eq.s32.totalorder %s10, 0
    %p93 = por %p91, %p92
    %p94 = scmp.ne.s32.totalorder %s86, %s88
    %p95 = scmp.eq.s32.totalorder %s15, 2
    %p96 = por %p94, %p95
    %p97 = scmp.ne.s32.totalorder %s88, %s89
    %p98 = scmp.eq.s32.totalorder %s15, 0
    %p99 = por %p97, %p98
    %p100 = scmp.ne.s32.totalorder %s88, %s89
    %p101 = scmp.eq.s32.totalorder %s16, 2
    %p102 = por %p100, %p101
    %p104 = scmp.ne.s32.totalorder %s89, %s103
    %p105 = scmp.eq.s32.totalorder %s16, 0
    %p106 = por %p104, %p105
    %s107 = ssub.s32 %s10, %s17
    %p108 = scmp.eq.s32.totalorder %s107, 0
    %s110 = sadd.s32 %s109, 1
    %s111 = scalar_select %p108, %s109, %s110
    %p114 = pneg %p108
    %p115 = scmp.eq.s32.totalorder %s10, 2
    %p116 = por %p114, %p115
    %p117 = scmp.ne.s32.totalorder %s109, %s112
    %p118 = scmp.eq.s32.totalorder %s10, 0
    %p119 = por %p117, %p118
    %p120 = scmp.ne.s32.totalorder %s109, %s112
    %p121 = scmp.eq.s32.totalorder %s15, 2
    %p122 = por %p120, %p121
    %p123 = scmp.ne.s32.totalorder %s112, %s113
    %p124 = scmp.eq.s32.totalorder %s15, 0
    %p125 = por %p123, %p124
    %p126 = scmp.ne.s32.totalorder %s112, %s113
    %p127 = scmp.eq.s32.totalorder %s16, 2
    %p128 = por %p126, %p127
    %p130 = scmp.ne.s32.totalorder %s113, %s129
    %p131 = scmp.eq.s32.totalorder %s16, 0
    %p132 = por %p130, %p131
    %p133 = scmp.le.s32.totalorder 1, %s10
    %p134 = scmp.lt.s32.totalorder %s10, 4
    %p135 = pnand %p133, %p134
    %p136 = pneg %p135
    // Predicated region
    $region9: #{heffann_forward.2} parent=5 // pred_check
      _
    $region10: #{heffann_forward.2} parent=5 // pred_check_branch
      %138 = sbr.rel (%p135) target = $region12
    $region11: #{heffann_forward.2} parent=5 // pred_region
      %s139 = ssub.s32 %s10, 1
      // Predicated region
      $region13: #{heffann_forward.2} parent=11 // pred_check
        %p140 = pneg %p57
      $region14: #{heffann_forward.2} parent=11 // pred_check_branch
        %142 = sbr.rel (%p140) target = $region16
      $region15: #{heffann_forward.2} parent=11 // pred_region
        _
      $region16: #{heffann_forward.2} parent=11 // pred_fallthru
        _
      // Predicated region
      $region17: #{heffann_forward.2} parent=11 // pred_check
        %p143 = pneg %p78
      $region18: #{heffann_forward.2} parent=11 // pred_check_branch
        %145 = sbr.rel (%p143) target = $region20
      $region19: #{heffann_forward.2} parent=11 // pred_region
        _
      $region20: #{heffann_forward.2} parent=11 // pred_fallthru
        _
      // Predicated region
      $region21: #{heffann_forward.2} parent=11 // pred_check
        %p146 = pneg %p99
      $region22: #{heffann_forward.2} parent=11 // pred_check_branch
        %148 = sbr.rel (%p146) target = $region24
      $region23: #{heffann_forward.2} parent=11 // pred_region
        _
      $region24: #{heffann_forward.2} parent=11 // pred_fallthru
        _
    $region12: #{heffann_forward.2} parent=5 // pred_fallthru
      _
    %p149 = scmp.lt.s32.totalorder %s10, 3
    // Predicated region
    $region25: #{heffann_forward.2} parent=5 // pred_check
      %p150 = pneg %p149
    $region26: #{heffann_forward.2} parent=5 // pred_check_branch
      %152 = sbr.rel (%p150) target = $region28
    $region27: #{heffann_forward.2} parent=5 // pred_region
      // Predicated region
      $region29: #{heffann_forward.2} parent=27 // pred_check
        %p153 = pneg %p30
      $region30: #{heffann_forward.2} parent=27 // pred_check_branch
        %155 = sbr.rel (%p153) target = $region32
      $region31: #{heffann_forward.2} parent=27 // pred_region
        %s156 = smul.u32 6, %s10
        %p157 = scmp.lt.s32.totalorder %s156, 17
        %s158 = scalar_select %p157, %s156, 17
        %s159 = smul.addr %s158, 8
        %s160 = smul.addr %s159, 4
        %s161 = scalar_lea.vmem %s0, %s160
        %s162 = smul.u32 6, %s10
      $region32: #{heffann_forward.2} parent=27 // pred_fallthru
        _
    $region28: #{heffann_forward.2} parent=5 // pred_fallthru
      _
    %p163 = scmp.le.s32.totalorder 1, %s10
    %p164 = scmp.lt.s32.totalorder %s10, 4
    %p165 = pnand %p163, %p164
    %p166 = pneg %p165
    // Predicated region
    $region33: #{heffann_forward.2} parent=5 // pred_check
      _
    $region34: #{heffann_forward.2} parent=5 // pred_check_branch
      %168 = sbr.rel (%p165) target = $region36
    $region35: #{heffann_forward.2} parent=5 // pred_region
      %s169 = ssub.s32 %s10, 1
      %s170 = smul.u32 6, %s15
      %p171 = scmp.lt.s32.totalorder %s170, 17
      %s172 = scalar_select %p171, %s170, 17
      %s173 = smul.addr %s172, 8
      %s174 = smul.addr %s173, 4
      %s175 = scalar_lea.vmem %s0, %s174
      %p176 = pneg %p36
      %p177 = pneg %p33
      %p178 = pneg %p57
      %p179 = pneg %p54
      %p180 = pneg %p78
      %p181 = pneg %p75
      %p182 = pneg %p99
      %p183 = pneg %p96
      %p184 = pneg %p125
      %p185 = pneg %p122
      %s186 = smul.u32 6, %s15
      %p187 = scmp.lt.s32.totalorder %s186, 17
      %s188 = scalar_select %p187, %s186, 17
      %s189 = smul.addr %s188, 4
      %s190 = smul.addr %s189, 8
      %s191 = scalar_lea.vmem %s4, %s190
      %s192 = smul.u32 6, %s15
      %p193 = scmp.lt.s32.totalorder %s192, 17
      %s194 = scalar_select %p193, %s192, 17
      %s195 = smul.addr %s194, 8
      %s196 = smul.addr %s195, 4
      %s197 = scalar_lea.vmem %s0, %s196
      %s198 = smul.u32 6, %s15
      %s199 = smul.u32 6, %s15
      %p200 = scmp.lt.s32.totalorder %s199, 17
      %s201 = scalar_select %p200, %s199, 17
      %s202 = smul.addr %s201, 4
      %s203 = smul.addr %s202, 8
      %s204 = scalar_lea.vmem %s4, %s203
      %s205 = smul.u32 6, %s15
      %v207 = vld [vmem:[%s3] sm:$0x7]
      %v208 = vld [vmem:[%s2] sm:$0xff]
      %v209 = vld [vmem:[%s2 + $0x8] sm:$0xff]
      %v210 = vld [vmem:[%s2 + $0x10] sm:$0xff]
      %v211 = vld [vmem:[%s2 + $0x18] sm:$0xff]
      %v212 = vld [vmem:[%s197] sm:$0xff]
      %v213 = vld [vmem:[%s197 + $0x8] sm:$0xff]
      %v214 = vld [vmem:[%s197 + $0x10] sm:$0x33]
      %v215 = vld [vmem:[%s197 + $0x18] sm:$0x33]
      %v216 = vld [vmem:[%s1] sm:$0xf]
      %v217 = vld [vmem:[%s1 + $0x4] sm:$0xf]
      %v218 = vld [vmem:[%s1 + $0x8] sm:$0xf]
      %v219 = vld [vmem:[%s1 + $0xc] sm:$0xf]
      %s220 = scalar_lea.vmem %s1, 16
      %v221 = vld [vmem:[%s220] sm:$0xf]
      %v222 = vld [vmem:[%s220 + $0x4] sm:$0xf]
      %v223 = vld [vmem:[%s220 + $0x8] sm:$0xf]
      %v224 = vld [vmem:[%s220 + $0xc] sm:$0xf]
      %v229 = vunpack.c.l.b16 %v221
      %v230 = vunpack.c.l.b16 %v222
      %v231 = vunpack.c.l.b16 %v223
      %v232 = vunpack.c.l.b16 %v224
      %v233 = vpack.c.b16 %v230, %v229
      %v234 = vpack.c.b16 %v232, %v231
      %v239 = vunpack.c.l.b16 %v212
      %v240 = vunpack.c.h.b16 %v212
      %v241 = vunpack.c.l.b16 %v213
      %v242 = vunpack.c.h.b16 %v213
      %v243 = vunpack.c.l.b16 %v214
      %v244 = vunpack.c.h.b16 %v214
      %v245 = vunpack.c.l.b16 %v215
      %v246 = vunpack.c.h.b16 %v215
      %v247 = vpack.c.b16 %v243, %v239
      %v248 = vpack.c.b16 %v244, %v240
      %v249 = vpack.c.b16 %v245, %v241
      %v250 = vpack.c.b16 %v246, %v242
      %251 = vrot.lane.b32.xlu0 %v247, 127
      %v252 = vpop.permute.xlu0 %251
      %253 = vrot.lane.b32.xlu0 %v248, 127
      %v254 = vpop.permute.xlu0 %253
      %255 = vrot.lane.b32.xlu0 %v249, 127
      %v256 = vpop.permute.xlu0 %255
      %257 = vrot.lane.b32.xlu0 %v250, 127
      %v258 = vpop.permute.xlu0 %257
      %vm259 = vcmask 1039360
      %v260 = vsel %vm259, %v252, %v254
      %v261 = vsel %vm259, %v254, %v256
      %v262 = vsel %vm259, %v256, %v258
      %vm263 = vcmask 97280
      %v265 = vsel %vm263, %v233, 0
      %v268 = vsel %vm263, %v234, 0
      %vm270 = vcmask 1045504
      %v272 = vsel %vm270, %v260, 0
      %v275 = vsel %vm270, %v261, 0
      %v278 = vsel %vm270, %v262, 0
      %280 = vmatprep.subr.bf16.mxu0 0
      %281 = vmatpush1.bf16.msra.mxu0 0
      %282 = vmatprep.subr.bf16.mxu0 0
      %283 = vmatpush1.bf16.msra.mxu0 0
      %284 = vmatprep.subr.bf16.mxu0 0
      %285 = vmatpush1.bf16.msra.mxu0 0
      %286 = vmatprep.subr.bf16.mxu0 0
      %287 = vmatpush1.bf16.msra.mxu0 0
      %288 = vmatprep.subr.bf16.mxu0 0
      %289 = vmatpush1.bf16.msra.mxu0 0
      %290 = vmatprep.subr.bf16.mxu0 0
      %291 = vmatpush1.bf16.msra.mxu0 0
      %292 = vmatprep.subr.bf16.mxu0 0
      %293 = vmatpush1.bf16.msra.mxu0 0
      %294 = vmatprep.subr.bf16.mxu0 %v275
      %295 = vmatpush1.bf16.msra.mxu0 %v272
      %296 = vmatprep.subr.bf16.mxu0 0
      %297 = vmatpush2.bf16.msra.mxu0 0
      %298 = vmatprep.subr.bf16.mxu0 0
      %299 = vmatpush2.bf16.msra.mxu0 0
      %300 = vmatprep.subr.bf16.mxu0 0
      %301 = vmatpush2.bf16.msra.mxu0 0
      %302 = vmatprep.subr.bf16.mxu0 0
      %303 = vmatpush2.bf16.msra.mxu0 0
      %304 = vmatprep.subr.bf16.mxu0 0
      %305 = vmatpush2.bf16.msra.mxu0 0
      %306 = vmatprep.subr.bf16.mxu0 0
      %307 = vmatpush2.bf16.msra.mxu0 0
      %308 = vmatprep.subr.bf16.mxu0 0
      %309 = vmatpush2.bf16.msra.mxu0 0
      %310 = vmatprep.subr.bf16.mxu0 0
      %311 = vmatpush2.bf16.msra.mxu0 0
      %312 = vmatprep.mubr.bf16.mxu0 0
      %313 = vmatmul.mubr.bf16.gmra.mxu0 %v265
      %v314 = vpop.f32.mrf.mxu0
      %v315 = vadd.f32 0.0, %v314
      %v316 = vpop.f32.mrf.mxu0
      %v317 = vadd.f32 0.0, %v316
      %v318 = vpop.f32.mrf.mxu0
      %v319 = vadd.f32 0.0, %v318
      %v320 = vpop.f32.mrf.mxu0
      %v321 = vadd.f32 0.0, %v320
      %322 = vmatprep.mubr.bf16.mxu0 0
      %323 = vmatmul.mubr.bf16.gmra.mxu0 %v268
      %v324 = vpop.f32.mrf.mxu0
      %v325 = vadd.f32 0.0, %v324
      %v326 = vpop.f32.mrf.mxu0
      %v327 = vadd.f32 0.0, %v326
      %v328 = vpop.f32.mrf.mxu0
      %v329 = vadd.f32 0.0, %v328
      %v330 = vpop.f32.mrf.mxu0
      %v331 = vadd.f32 0.0, %v330
      %332 = vdwg.mxu0
      %333 = vmatprep.subr.bf16.mxu0 0
      %334 = vmatpush1.bf16.msra.mxu0 0
      %335 = vmatprep.subr.bf16.mxu0 0
      %336 = vmatpush1.bf16.msra.mxu0 0
      %337 = vmatprep.subr.bf16.mxu0 0
      %338 = vmatpush1.bf16.msra.mxu0 0
      %339 = vmatprep.subr.bf16.mxu0 0
      %340 = vmatpush1.bf16.msra.mxu0 0
      %341 = vmatprep.subr.bf16.mxu0 0
      %342 = vmatpush1.bf16.msra.mxu0 0
      %343 = vmatprep.subr.bf16.mxu0 0
      %344 = vmatpush1.bf16.msra.mxu0 0
      %345 = vmatprep.subr.bf16.mxu0 0
      %346 = vmatpush1.bf16.msra.mxu0 0
      %347 = vmatprep.subr.bf16.mxu0 0
      %348 = vmatpush1.bf16.msra.mxu0 %v278
      %349 = vmatprep.subr.bf16.mxu0 0
      %350 = vmatpush2.bf16.msra.mxu0 0
      %351 = vmatprep.subr.bf16.mxu0 0
      %352 = vmatpush2.bf16.msra.mxu0 0
      %353 = vmatprep.subr.bf16.mxu0 0
      %354 = vmatpush2.bf16.msra.mxu0 0
      %355 = vmatprep.subr.bf16.mxu0 0
      %356 = vmatpush2.bf16.msra.mxu0 0
      %357 = vmatprep.subr.bf16.mxu0 0
      %358 = vmatpush2.bf16.msra.mxu0 0
      %359 = vmatprep.subr.bf16.mxu0 0
      %360 = vmatpush2.bf16.msra.mxu0 0
      %361 = vmatprep.subr.bf16.mxu0 0
      %362 = vmatpush2.bf16.msra.mxu0 0
      %363 = vmatprep.subr.bf16.mxu0 0
      %364 = vmatpush2.bf16.msra.mxu0 0
      %365 = vmatprep.mubr.bf16.mxu0 0
      %366 = vmatmul.mubr.bf16.gmra.mxu0 %v265
      %v367 = vpop.f32.mrf.mxu0
      %v368 = vadd.f32 0.0, %v367
      %v369 = vpop.f32.mrf.mxu0
      %v370 = vpop.f32.mrf.mxu0
      %v371 = vadd.f32 0.0, %v370
      %v372 = vpop.f32.mrf.mxu0
      %373 = vmatprep.mubr.bf16.mxu0 0
      %374 = vmatmul.mubr.bf16.gmra.mxu0 %v268
      %v375 = vpop.f32.mrf.mxu0
      %v376 = vadd.f32 0.0, %v375
      %v377 = vpop.f32.mrf.mxu0
      %v378 = vpop.f32.mrf.mxu0
      %v379 = vadd.f32 0.0, %v378
      %v380 = vpop.f32.mrf.mxu0
      %381 = vdwg.mxu0
      %v386 = vunpack.c.l.b16 %v216
      %v387 = vunpack.c.l.b16 %v217
      %v388 = vunpack.c.l.b16 %v218
      %v389 = vunpack.c.l.b16 %v219
      %v390 = vpack.c.b16 %v387, %v386
      %v391 = vpack.c.b16 %v389, %v388
      %v393 = vsel %vm263, %v390, 0
      %v396 = vsel %vm263, %v391, 0
      %v399 = vsel %vm270, %v247, 0
      %v402 = vsel %vm270, %v248, 0
      %v405 = vsel %vm270, %v249, 0
      %407 = vmatprep.subr.bf16.mxu0 0
      %408 = vmatpush1.bf16.msra.mxu0 0
      %409 = vmatprep.subr.bf16.mxu0 0
      %410 = vmatpush1.bf16.msra.mxu0 0
      %411 = vmatprep.subr.bf16.mxu0 0
      %412 = vmatpush1.bf16.msra.mxu0 0
      %413 = vmatprep.subr.bf16.mxu0 0
      %414 = vmatpush1.bf16.msra.mxu0 0
      %415 = vmatprep.subr.bf16.mxu0 0
      %416 = vmatpush1.bf16.msra.mxu0 0
      %417 = vmatprep.subr.bf16.mxu0 0
      %418 = vmatpush1.bf16.msra.mxu0 0
      %419 = vmatprep.subr.bf16.mxu0 0
      %420 = vmatpush1.bf16.msra.mxu0 0
      %421 = vmatprep.subr.bf16.mxu0 %v402
      %422 = vmatpush1.bf16.msra.mxu0 %v399
      %423 = vmatprep.subr.bf16.mxu0 0
      %424 = vmatpush2.bf16.msra.mxu0 0
      %425 = vmatprep.subr.bf16.mxu0 0
      %426 = vmatpush2.bf16.msra.mxu0 0
      %427 = vmatprep.subr.bf16.mxu0 0
      %428 = vmatpush2.bf16.msra.mxu0 0
      %429 = vmatprep.subr.bf16.mxu0 0
      %430 = vmatpush2.bf16.msra.mxu0 0
      %431 = vmatprep.subr.bf16.mxu0 0
      %432 = vmatpush2.bf16.msra.mxu0 0
      %433 = vmatprep.subr.bf16.mxu0 0
      %434 = vmatpush2.bf16.msra.mxu0 0
      %435 = vmatprep.subr.bf16.mxu0 0
      %436 = vmatpush2.bf16.msra.mxu0 0
      %437 = vmatprep.subr.bf16.mxu0 0
      %438 = vmatpush2.bf16.msra.mxu0 0
      %439 = vmatprep.mubr.bf16.mxu0 0
      %440 = vmatmul.mubr.bf16.gmra.mxu0 %v393
      %v441 = vpop.f32.mrf.mxu0
      %v442 = vadd.f32 %v315, %v441
      %v443 = vpop.f32.mrf.mxu0
      %v444 = vadd.f32 %v317, %v443
      %v445 = vpop.f32.mrf.mxu0
      %v446 = vadd.f32 %v319, %v445
      %v447 = vpop.f32.mrf.mxu0
      %v448 = vadd.f32 %v321, %v447
      %449 = vmatprep.mubr.bf16.mxu0 0
      %450 = vmatmul.mubr.bf16.gmra.mxu0 %v396
      %v451 = vpop.f32.mrf.mxu0
      %v452 = vadd.f32 %v325, %v451
      %v453 = vpop.f32.mrf.mxu0
      %v454 = vadd.f32 %v327, %v453
      %v455 = vpop.f32.mrf.mxu0
      %v456 = vadd.f32 %v329, %v455
      %v457 = vpop.f32.mrf.mxu0
      %v458 = vadd.f32 %v331, %v457
      %459 = vdwg.mxu0
      %460 = vmatprep.subr.bf16.mxu0 0
      %461 = vmatpush1.bf16.msra.mxu0 0
      %462 = vmatprep.subr.bf16.mxu0 0
      %463 = vmatpush1.bf16.msra.mxu0 0
      %464 = vmatprep.subr.bf16.mxu0 0
      %465 = vmatpush1.bf16.msra.mxu0 0
      %466 = vmatprep.subr.bf16.mxu0 0
      %467 = vmatpush1.bf16.msra.mxu0 0
      %468 = vmatprep.subr.bf16.mxu0 0
      %469 = vmatpush1.bf16.msra.mxu0 0
      %470 = vmatprep.subr.bf16.mxu0 0
      %471 = vmatpush1.bf16.msra.mxu0 0
      %472 = vmatprep.subr.bf16.mxu0 0
      %473 = vmatpush1.bf16.msra.mxu0 0
      %474 = vmatprep.subr.bf16.mxu0 0
      %475 = vmatpush1.bf16.msra.mxu0 %v405
      %476 = vmatprep.subr.bf16.mxu0 0
      %477 = vmatpush2.bf16.msra.mxu0 0
      %478 = vmatprep.subr.bf16.mxu0 0
      %479 = vmatpush2.bf16.msra.mxu0 0
      %480 = vmatprep.subr.bf16.mxu0 0
      %481 = vmatpush2.bf16.msra.mxu0 0
      %482 = vmatprep.subr.bf16.mxu0 0
      %483 = vmatpush2.bf16.msra.mxu0 0
      %484 = vmatprep.subr.bf16.mxu0 0
      %485 = vmatpush2.bf16.msra.mxu0 0
      %486 = vmatprep.subr.bf16.mxu0 0
      %487 = vmatpush2.bf16.msra.mxu0 0
      %488 = vmatprep.subr.bf16.mxu0 0
      %489 = vmatpush2.bf16.msra.mxu0 0
      %490 = vmatprep.subr.bf16.mxu0 0
      %491 = vmatpush2.bf16.msra.mxu0 0
      %492 = vmatprep.mubr.bf16.mxu0 0
      %493 = vmatmul.mubr.bf16.gmra.mxu0 %v393
      %v494 = vpop.f32.mrf.mxu0
      %v495 = vadd.f32 %v368, %v494
      %v496 = vpop.f32.mrf.mxu0
      %v497 = vpop.f32.mrf.mxu0
      %v498 = vadd.f32 %v371, %v497
      %v499 = vpop.f32.mrf.mxu0
      %500 = vmatprep.mubr.bf16.mxu0 0
      %501 = vmatmul.mubr.bf16.gmra.mxu0 %v396
      %v502 = vpop.f32.mrf.mxu0
      %v503 = vadd.f32 %v376, %v502
      %v504 = vpop.f32.mrf.mxu0
      %v505 = vpop.f32.mrf.mxu0
      %v506 = vadd.f32 %v379, %v505
      %v507 = vpop.f32.mrf.mxu0
      %508 = vdwg.mxu0
      %s509 = scalar_lea.vmem %s1, 32
      %v510 = vld [vmem:[%s509] sm:$0xf]
      %v511 = vld [vmem:[%s509 + $0x4] sm:$0xf]
      %v512 = vld [vmem:[%s509 + $0x8] sm:$0xf]
      %v513 = vld [vmem:[%s509 + $0xc] sm:$0xf]
      %v518 = vunpack.c.l.b16 %v510
      %v519 = vunpack.c.l.b16 %v511
      %v520 = vunpack.c.l.b16 %v512
      %v521 = vunpack.c.l.b16 %v513
      %v522 = vpack.c.b16 %v519, %v518
      %v523 = vpack.c.b16 %v521, %v520
      %524 = vrot.lane.b32.xlu0 %v247, 111
      %v525 = vpop.permute.xlu0 %524
      %526 = vrot.lane.b32.xlu0 %v248, 111
      %v527 = vpop.permute.xlu0 %526
      %528 = vrot.lane.b32.xlu0 %v249, 111
      %v529 = vpop.permute.xlu0 %528
      %530 = vrot.lane.b32.xlu0 %v250, 111
      %v531 = vpop.permute.xlu0 %530
      %vm532 = vcmask 908288
      %v533 = vsel %vm532, %v525, %v527
      %v534 = vsel %vm532, %v527, %v529
      %v535 = vsel %vm532, %v529, %v531
      %v537 = vsel %vm263, %v522, 0
      %v540 = vsel %vm263, %v523, 0
      %v543 = vsel %vm270, %v533, 0
      %v546 = vsel %vm270, %v534, 0
      %v549 = vsel %vm270, %v535, 0
      %551 = vmatprep.subr.bf16.mxu0 0
      %552 = vmatpush1.bf16.msra.mxu0 0
      %553 = vmatprep.subr.bf16.mxu0 0
      %554 = vmatpush1.bf16.msra.mxu0 0
      %555 = vmatprep.subr.bf16.mxu0 0
      %556 = vmatpush1.bf16.msra.mxu0 0
      %557 = vmatprep.subr.bf16.mxu0 0
      %558 = vmatpush1.bf16.msra.mxu0 0
      %559 = vmatprep.subr.bf16.mxu0 0
      %560 = vmatpush1.bf16.msra.mxu0 0
      %561 = vmatprep.subr.bf16.mxu0 0
      %562 = vmatpush1.bf16.msra.mxu0 0
      %563 = vmatprep.subr.bf16.mxu0 0
      %564 = vmatpush1.bf16.msra.mxu0 0
      %565 = vmatprep.subr.bf16.mxu0 %v546
      %566 = vmatpush1.bf16.msra.mxu0 %v543
      %567 = vmatprep.subr.bf16.mxu0 0
      %568 = vmatpush2.bf16.msra.mxu0 0
      %569 = vmatprep.subr.bf16.mxu0 0
      %570 = vmatpush2.bf16.msra.mxu0 0
      %571 = vmatprep.subr.bf16.mxu0 0
      %572 = vmatpush2.bf16.msra.mxu0 0
      %573 = vmatprep.subr.bf16.mxu0 0
      %574 = vmatpush2.bf16.msra.mxu0 0
      %575 = vmatprep.subr.bf16.mxu0 0
      %576 = vmatpush2.bf16.msra.mxu0 0
      %577 = vmatprep.subr.bf16.mxu0 0
      %578 = vmatpush2.bf16.msra.mxu0 0
      %579 = vmatprep.subr.bf16.mxu0 0
      %580 = vmatpush2.bf16.msra.mxu0 0
      %581 = vmatprep.subr.bf16.mxu0 0
      %582 = vmatpush2.bf16.msra.mxu0 0
      %583 = vmatprep.mubr.bf16.mxu0 0
      %584 = vmatmul.mubr.bf16.gmra.mxu0 %v537
      %v585 = vpop.f32.mrf.mxu0
      %v586 = vadd.f32 0.0, %v585
      %v587 = vpop.f32.mrf.mxu0
      %v588 = vadd.f32 0.0, %v587
      %v589 = vpop.f32.mrf.mxu0
      %v590 = vadd.f32 0.0, %v589
      %v591 = vpop.f32.mrf.mxu0
      %v592 = vadd.f32 0.0, %v591
      %593 = vmatprep.mubr.bf16.mxu0 0
      %594 = vmatmul.mubr.bf16.gmra.mxu0 %v540
      %v595 = vpop.f32.mrf.mxu0
      %v596 = vadd.f32 0.0, %v595
      %v597 = vpop.f32.mrf.mxu0
      %v598 = vadd.f32 0.0, %v597
      %v599 = vpop.f32.mrf.mxu0
      %v600 = vadd.f32 0.0, %v599
      %v601 = vpop.f32.mrf.mxu0
      %v602 = vadd.f32 0.0, %v601
      %603 = vdwg.mxu0
      %604 = vmatprep.subr.bf16.mxu0 0
      %605 = vmatpush1.bf16.msra.mxu0 0
      %606 = vmatprep.subr.bf16.mxu0 0
      %607 = vmatpush1.bf16.msra.mxu0 0
      %608 = vmatprep.subr.bf16.mxu0 0
      %609 = vmatpush1.bf16.msra.mxu0 0
      %610 = vmatprep.subr.bf16.mxu0 0
      %611 = vmatpush1.bf16.msra.mxu0 0
      %612 = vmatprep.subr.bf16.mxu0 0
      %613 = vmatpush1.bf16.msra.mxu0 0
      %614 = vmatprep.subr.bf16.mxu0 0
      %615 = vmatpush1.bf16.msra.mxu0 0
      %616 = vmatprep.subr.bf16.mxu0 0
      %617 = vmatpush1.bf16.msra.mxu0 0
      %618 = vmatprep.subr.bf16.mxu0 0
      %619 = vmatpush1.bf16.msra.mxu0 %v549
      %620 = vmatprep.subr.bf16.mxu0 0
      %621 = vmatpush2.bf16.msra.mxu0 0
      %622 = vmatprep.subr.bf16.mxu0 0
      %623 = vmatpush2.bf16.msra.mxu0 0
      %624 = vmatprep.subr.bf16.mxu0 0
      %625 = vmatpush2.bf16.msra.mxu0 0
      %626 = vmatprep.subr.bf16.mxu0 0
      %627 = vmatpush2.bf16.msra.mxu0 0
      %628 = vmatprep.subr.bf16.mxu0 0
      %629 = vmatpush2.bf16.msra.mxu0 0
      %630 = vmatprep.subr.bf16.mxu0 0
      %631 = vmatpush2.bf16.msra.mxu0 0
      %632 = vmatprep.subr.bf16.mxu0 0
      %633 = vmatpush2.bf16.msra.mxu0 0
      %634 = vmatprep.subr.bf16.mxu0 0
      %635 = vmatpush2.bf16.msra.mxu0 0
      %636 = vmatprep.mubr.bf16.mxu0 0
      %637 = vmatmul.mubr.bf16.gmra.mxu0 %v537
      %v638 = vpop.f32.mrf.mxu0
      %v639 = vadd.f32 0.0, %v638
      %v640 = vpop.f32.mrf.mxu0
      %v641 = vpop.f32.mrf.mxu0
      %v642 = vadd.f32 0.0, %v641
      %v643 = vpop.f32.mrf.mxu0
      %644 = vmatprep.mubr.bf16.mxu0 0
      %645 = vmatmul.mubr.bf16.gmra.mxu0 %v540
      %v646 = vpop.f32.mrf.mxu0
      %v647 = vadd.f32 0.0, %v646
      %v648 = vpop.f32.mrf.mxu0
      %v649 = vpop.f32.mrf.mxu0
      %v650 = vadd.f32 0.0, %v649
      %v651 = vpop.f32.mrf.mxu0
      %652 = vdwg.mxu0
      %v653 = vadd.f32 %v442, %v586
      %v654 = vadd.f32 %v444, %v588
      %v655 = vadd.f32 %v495, %v639
      %v656 = vadd.f32 %v446, %v590
      %v657 = vadd.f32 %v448, %v592
      %v658 = vadd.f32 %v498, %v642
      %v659 = vadd.f32 %v452, %v596
      %v660 = vadd.f32 %v454, %v598
      %v661 = vadd.f32 %v503, %v647
      %v662 = vadd.f32 %v456, %v600
      %v663 = vadd.f32 %v458, %v602
      %v664 = vadd.f32 %v506, %v650
      %s665 = scalar_lea.vmem %s1, 48
      %v666 = vld [vmem:[%s665] sm:$0xf]
      %v667 = vld [vmem:[%s665 + $0x4] sm:$0xf]
      %v668 = vld [vmem:[%s665 + $0x8] sm:$0xf]
      %v669 = vld [vmem:[%s665 + $0xc] sm:$0xf]
      %v674 = vunpack.c.l.b16 %v666
      %v675 = vunpack.c.l.b16 %v667
      %v676 = vunpack.c.l.b16 %v668
      %v677 = vunpack.c.l.b16 %v669
      %v678 = vpack.c.b16 %v675, %v674
      %v679 = vpack.c.b16 %v677, %v676
      %680 = vrot.lane.b32.xlu0 %v247, 110
      %v681 = vpop.permute.xlu0 %680
      %682 = vrot.lane.b32.xlu0 %v248, 110
      %v683 = vpop.permute.xlu0 %682
      %684 = vrot.lane.b32.xlu0 %v249, 110
      %v685 = vpop.permute.xlu0 %684
      %686 = vrot.lane.b32.xlu0 %v250, 110
      %v687 = vpop.permute.xlu0 %686
      %vm688 = vcmask 900096
      %v689 = vsel %vm688, %v681, %v683
      %v690 = vsel %vm688, %v683, %v685
      %v691 = vsel %vm688, %v685, %v687
      %v693 = vsel %vm263, %v678, 0
      %v696 = vsel %vm263, %v679, 0
      %v699 = vsel %vm270, %v689, 0
      %v702 = vsel %vm270, %v690, 0
      %v705 = vsel %vm270, %v691, 0
      %707 = vmatprep.subr.bf16.mxu0 0
      %708 = vmatpush1.bf16.msra.mxu0 0
      %709 = vmatprep.subr.bf16.mxu0 0
      %710 = vmatpush1.bf16.msra.mxu0 0
      %711 = vmatprep.subr.bf16.mxu0 0
      %712 = vmatpush1.bf16.msra.mxu0 0
      %713 = vmatprep.subr.bf16.mxu0 0
      %714 = vmatpush1.bf16.msra.mxu0 0
      %715 = vmatprep.subr.bf16.mxu0 0
      %716 = vmatpush1.bf16.msra.mxu0 0
      %717 = vmatprep.subr.bf16.mxu0 0
      %718 = vmatpush1.bf16.msra.mxu0 0
      %719 = vmatprep.subr.bf16.mxu0 0
      %720 = vmatpush1.bf16.msra.mxu0 0
      %721 = vmatprep.subr.bf16.mxu0 %v702
      %722 = vmatpush1.bf16.msra.mxu0 %v699
      %723 = vmatprep.subr.bf16.mxu0 0
      %724 = vmatpush2.bf16.msra.mxu0 0
      %725 = vmatprep.subr.bf16.mxu0 0
      %726 = vmatpush2.bf16.msra.mxu0 0
      %727 = vmatprep.subr.bf16.mxu0 0
      %728 = vmatpush2.bf16.msra.mxu0 0
      %729 = vmatprep.subr.bf16.mxu0 0
      %730 = vmatpush2.bf16.msra.mxu0 0
      %731 = vmatprep.subr.bf16.mxu0 0
      %732 = vmatpush2.bf16.msra.mxu0 0
      %733 = vmatprep.subr.bf16.mxu0 0
      %734 = vmatpush2.bf16.msra.mxu0 0
      %735 = vmatprep.subr.bf16.mxu0 0
      %736 = vmatpush2.bf16.msra.mxu0 0
      %737 = vmatprep.subr.bf16.mxu0 0
      %738 = vmatpush2.bf16.msra.mxu0 0
      %739 = vmatprep.mubr.bf16.mxu0 0
      %740 = vmatmul.mubr.bf16.gmra.mxu0 %v693
      %v741 = vpop.f32.mrf.mxu0
      %v742 = vadd.f32 0.0, %v741
      %v743 = vpop.f32.mrf.mxu0
      %v744 = vadd.f32 0.0, %v743
      %v745 = vpop.f32.mrf.mxu0
      %v746 = vadd.f32 0.0, %v745
      %v747 = vpop.f32.mrf.mxu0
      %v748 = vadd.f32 0.0, %v747
      %749 = vmatprep.mubr.bf16.mxu0 0
      %750 = vmatmul.mubr.bf16.gmra.mxu0 %v696
      %v751 = vpop.f32.mrf.mxu0
      %v752 = vadd.f32 0.0, %v751
      %v753 = vpop.f32.mrf.mxu0
      %v754 = vadd.f32 0.0, %v753
      %v755 = vpop.f32.mrf.mxu0
      %v756 = vadd.f32 0.0, %v755
      %v757 = vpop.f32.mrf.mxu0
      %v758 = vadd.f32 0.0, %v757
      %759 = vdwg.mxu0
      %760 = vmatprep.subr.bf16.mxu0 0
      %761 = vmatpush1.bf16.msra.mxu0 0
      %762 = vmatprep.subr.bf16.mxu0 0
      %763 = vmatpush1.bf16.msra.mxu0 0
      %764 = vmatprep.subr.bf16.mxu0 0
      %765 = vmatpush1.bf16.msra.mxu0 0
      %766 = vmatprep.subr.bf16.mxu0 0
      %767 = vmatpush1.bf16.msra.mxu0 0
      %768 = vmatprep.subr.bf16.mxu0 0
      %769 = vmatpush1.bf16.msra.mxu0 0
      %770 = vmatprep.subr.bf16.mxu0 0
      %771 = vmatpush1.bf16.msra.mxu0 0
      %772 = vmatprep.subr.bf16.mxu0 0
      %773 = vmatpush1.bf16.msra.mxu0 0
      %774 = vmatprep.subr.bf16.mxu0 0
      %775 = vmatpush1.bf16.msra.mxu0 %v705
      %776 = vmatprep.subr.bf16.mxu0 0
      %777 = vmatpush2.bf16.msra.mxu0 0
      %778 = vmatprep.subr.bf16.mxu0 0
      %779 = vmatpush2.bf16.msra.mxu0 0
      %780 = vmatprep.subr.bf16.mxu0 0
      %781 = vmatpush2.bf16.msra.mxu0 0
      %782 = vmatprep.subr.bf16.mxu0 0
      %783 = vmatpush2.bf16.msra.mxu0 0
      %784 = vmatprep.subr.bf16.mxu0 0
      %785 = vmatpush2.bf16.msra.mxu0 0
      %786 = vmatprep.subr.bf16.mxu0 0
      %787 = vmatpush2.bf16.msra.mxu0 0
      %788 = vmatprep.subr.bf16.mxu0 0
      %789 = vmatpush2.bf16.msra.mxu0 0
      %790 = vmatprep.subr.bf16.mxu0 0
      %791 = vmatpush2.bf16.msra.mxu0 0
      %792 = vmatprep.mubr.bf16.mxu0 0
      %793 = vmatmul.mubr.bf16.gmra.mxu0 %v693
      %v794 = vpop.f32.mrf.mxu0
      %v795 = vadd.f32 0.0, %v794
      %v796 = vpop.f32.mrf.mxu0
      %v797 = vpop.f32.mrf.mxu0
      %v798 = vadd.f32 0.0, %v797
      %v799 = vpop.f32.mrf.mxu0
      %800 = vmatprep.mubr.bf16.mxu0 0
      %801 = vmatmul.mubr.bf16.gmra.mxu0 %v696
      %v802 = vpop.f32.mrf.mxu0
      %v803 = vadd.f32 0.0, %v802
      %v804 = vpop.f32.mrf.mxu0
      %v805 = vpop.f32.mrf.mxu0
      %v806 = vadd.f32 0.0, %v805
      %v807 = vpop.f32.mrf.mxu0
      %808 = vdwg.mxu0
      %v809 = vadd.f32 %v653, %v742
      %v810 = vadd.f32 %v654, %v744
      %v811 = vadd.f32 %v655, %v795
      %v812 = vadd.f32 %v656, %v746
      %v813 = vadd.f32 %v657, %v748
      %v814 = vadd.f32 %v658, %v798
      %v815 = vadd.f32 %v659, %v752
      %v816 = vadd.f32 %v660, %v754
      %v817 = vadd.f32 %v661, %v803
      %v818 = vadd.f32 %v662, %v756
      %v819 = vadd.f32 %v663, %v758
      %v820 = vadd.f32 %v664, %v806
      %822 = vset.pattern.permute.xlu0 0
      %823 = vperm.xlu0 %822, %v208
      %v824 = vpop.permute.xlu0 %823
      %827 = vset.pattern.permute.xlu0 0
      %828 = vperm.xlu0 %827, %v209
      %v829 = vpop.permute.xlu0 %828
      %832 = vset.pattern.permute.xlu0 0
      %833 = vperm.xlu0 %832, %v210
      %v834 = vpop.permute.xlu0 %833
      %837 = vset.pattern.permute.xlu0 0
      %838 = vperm.xlu0 %837, %v211
      %v839 = vpop.permute.xlu0 %838
      %v841 = vadd.f32 %v809, %v824
      %v842 = vadd.f32 %v810, %v824
      %v843 = vadd.f32 %v811, %v824
      %v844 = vadd.f32 %v812, %v829
      %v845 = vadd.f32 %v813, %v829
      %v846 = vadd.f32 %v814, %v829
      %v847 = vadd.f32 %v815, %v834
      %v848 = vadd.f32 %v816, %v834
      %v849 = vadd.f32 %v817, %v834
      %v850 = vadd.f32 %v818, %v839
      %v851 = vadd.f32 %v819, %v839
      %v852 = vadd.f32 %v820, %v839
      %v853 = vxor.u32 %v841, 2147483648
      %v854 = vxor.u32 %v842, 2147483648
      %v855 = vxor.u32 %v843, 2147483648
      %v856 = vxor.u32 %v844, 2147483648
      %v857 = vxor.u32 %v845, 2147483648
      %v858 = vxor.u32 %v846, 2147483648
      %v859 = vxor.u32 %v847, 2147483648
      %v860 = vxor.u32 %v848, 2147483648
      %v861 = vxor.u32 %v849, 2147483648
      %v862 = vxor.u32 %v850, 2147483648
      %v863 = vxor.u32 %v851, 2147483648
      %v864 = vxor.u32 %v852, 2147483648
      %v865 = vmul.f32 %v853, 1.442695
      %v866 = vpow.pop %v865
      %v867 = vmul.f32 %v854, 1.442695
      %v868 = vpow.pop %v867
      %v869 = vmul.f32 %v855, 1.442695
      %v870 = vpow.pop %v869
      %v871 = vmul.f32 %v856, 1.442695
      %v872 = vpow.pop %v871
      %v873 = vmul.f32 %v857, 1.442695
      %v874 = vpow.pop %v873
      %v875 = vmul.f32 %v858, 1.442695
      %v876 = vpow.pop %v875
      %v877 = vmul.f32 %v859, 1.442695
      %v878 = vpow.pop %v877
      %v879 = vmul.f32 %v860, 1.442695
      %v880 = vpow.pop %v879
      %v881 = vmul.f32 %v861, 1.442695
      %v882 = vpow.pop %v881
      %v883 = vmul.f32 %v862, 1.442695
      %v884 = vpow.pop %v883
      %v885 = vmul.f32 %v863, 1.442695
      %v886 = vpow.pop %v885
      %v887 = vmul.f32 %v864, 1.442695
      %v888 = vpow.pop %v887
      %v889 = vadd.f32 %v866, 1.0
      %v890 = vadd.f32 %v868, 1.0
      %v891 = vadd.f32 %v870, 1.0
      %v892 = vadd.f32 %v872, 1.0
      %v893 = vadd.f32 %v874, 1.0
      %v894 = vadd.f32 %v876, 1.0
      %v895 = vadd.f32 %v878, 1.0
      %v896 = vadd.f32 %v880, 1.0
      %v897 = vadd.f32 %v882, 1.0
      %v898 = vadd.f32 %v884, 1.0
      %v899 = vadd.f32 %v886, 1.0
      %v900 = vadd.f32 %v888, 1.0
      %v901 = vrcp.pop %v889
      %v902 = vmul.f32 1.0, %v901
      %v903 = vrcp.pop %v890
      %v904 = vmul.f32 1.0, %v903
      %v905 = vrcp.pop %v891
      %v906 = vmul.f32 1.0, %v905
      %v907 = vrcp.pop %v892
      %v908 = vmul.f32 1.0, %v907
      %v909 = vrcp.pop %v893
      %v910 = vmul.f32 1.0, %v909
      %v911 = vrcp.pop %v894
      %v912 = vmul.f32 1.0, %v911
      %v913 = vrcp.pop %v895
      %v914 = vmul.f32 1.0, %v913
      %v915 = vrcp.pop %v896
      %v916 = vmul.f32 1.0, %v915
      %v917 = vrcp.pop %v897
      %v918 = vmul.f32 1.0, %v917
      %v919 = vrcp.pop %v898
      %v920 = vmul.f32 1.0, %v919
      %v921 = vrcp.pop %v899
      %v922 = vmul.f32 1.0, %v921
      %v923 = vrcp.pop %v900
      %v924 = vmul.f32 1.0, %v923
      %v925 = vmul.f32 %v841, %v902
      %v926 = vmul.f32 %v842, %v904
      %v927 = vmul.f32 %v843, %v906
      %v928 = vmul.f32 %v844, %v908
      %v929 = vmul.f32 %v845, %v910
      %v930 = vmul.f32 %v846, %v912
      %v931 = vmul.f32 %v847, %v914
      %v932 = vmul.f32 %v848, %v916
      %v933 = vmul.f32 %v849, %v918
      %v934 = vmul.f32 %v850, %v920
      %v935 = vmul.f32 %v851, %v922
      %v936 = vmul.f32 %v852, %v924
      %v938 = vlaneseq
      %v939 = vshrl.u32 %v938, 7
      %v940 = vsub.s32 0, %v939
      %v941 = vrot.slane %v207, %v940
      %v942 = vlaneseq
      %v943 = vshrl.u32 %v942, 7
      %v944 = vsub.s32 1, %v943
      %v945 = vrot.slane %v207, %v944
      %v946 = vlaneseq
      %v947 = vshrl.u32 %v946, 7
      %v948 = vsub.s32 2, %v947
      %v949 = vrot.slane %v207, %v948
      %v953 = vmul.f32 %v925, %v941
      %v954 = vmul.f32 %v926, %v945
      %v955 = vmul.f32 %v927, %v949
      %v956 = vmul.f32 %v928, %v941
      %v957 = vmul.f32 %v929, %v945
      %v958 = vmul.f32 %v930, %v949
      %v959 = vmul.f32 %v931, %v941
      %v960 = vmul.f32 %v932, %v945
      %v961 = vmul.f32 %v933, %v949
      %v962 = vmul.f32 %v934, %v941
      %v963 = vmul.f32 %v935, %v945
      %v964 = vmul.f32 %v936, %v949
      %v965 = vadd.f32 %v953, %v954
      %v966 = vadd.f32 %v965, %v955
      %967 = vadd.xlane.f32.xlu0 %v966
      %v968 = vpop.xlane.xlu0 %967
      %v969 = vadd.f32 %v956, %v957
      %v970 = vadd.f32 %v969, %v958
      %971 = vadd.xlane.f32.xlu0 %v970
      %v972 = vpop.xlane.xlu0 %971
      %v973 = vadd.f32 %v959, %v960
      %v974 = vadd.f32 %v973, %v961
      %975 = vadd.xlane.f32.xlu0 %v974
      %v976 = vpop.xlane.xlu0 %975
      %v977 = vadd.f32 %v962, %v963
      %v978 = vadd.f32 %v977, %v964
      %979 = vadd.xlane.f32.xlu0 %v978
      %v980 = vpop.xlane.xlu0 %979
      %vm981 = vcmask 64512
      %982 = vst.msk [vmem:[%s204] sm:$0xff] %vm981, %v968
      %983 = vst.msk [vmem:[%s204 + $0x8] sm:$0xff] %vm981, %v972
      %984 = vst.msk [vmem:[%s204 + $0x10] sm:$0xff] %vm981, %v976
      %985 = vst.msk [vmem:[%s204 + $0x18] sm:$0xff] %vm981, %v980
      %s986 = scalar_lea.vmem %s197, 32
      %v987 = vld [vmem:[%s986] sm:$0xff]
      %v988 = vld [vmem:[%s986 + $0x8] sm:$0xff]
      %v989 = vld [vmem:[%s986 + $0x10] sm:$0x33]
      %v990 = vld [vmem:[%s986 + $0x18] sm:$0x33]
      %v991 = vld [vmem:[%s1] sm:$0xf]
      %v992 = vld [vmem:[%s1 + $0x4] sm:$0xf]
      %v993 = vld [vmem:[%s1 + $0x8] sm:$0xf]
      %v994 = vld [vmem:[%s1 + $0xc] sm:$0xf]
      %v995 = vld [vmem:[%s220] sm:$0xf]
      %v996 = vld [vmem:[%s220 + $0x4] sm:$0xf]
      %v997 = vld [vmem:[%s220 + $0x8] sm:$0xf]
      %v998 = vld [vmem:[%s220 + $0xc] sm:$0xf]
      %v1003 = vunpack.c.l.b16 %v995
      %v1004 = vunpack.c.l.b16 %v996
      %v1005 = vunpack.c.l.b16 %v997
      %v1006 = vunpack.c.l.b16 %v998
      %v1007 = vpack.c.b16 %v1004, %v1003
      %v1008 = vpack.c.b16 %v1006, %v1005
      %v1013 = vunpack.c.l.b16 %v987
      %v1014 = vunpack.c.h.b16 %v987
      %v1015 = vunpack.c.l.b16 %v988
      %v1016 = vunpack.c.h.b16 %v988
      %v1017 = vunpack.c.l.b16 %v989
      %v1018 = vunpack.c.h.b16 %v989
      %v1019 = vunpack.c.l.b16 %v990
      %v1020 = vunpack.c.h.b16 %v990
      %v1021 = vpack.c.b16 %v1017, %v1013
      %v1022 = vpack.c.b16 %v1018, %v1014
      %v1023 = vpack.c.b16 %v1019, %v1015
      %v1024 = vpack.c.b16 %v1020, %v1016
      %1025 = vrot.lane.b32.xlu0 %v1021, 127
      %v1026 = vpop.permute.xlu0 %1025
      %1027 = vrot.lane.b32.xlu0 %v1022, 127
      %v1028 = vpop.permute.xlu0 %1027
      %1029 = vrot.lane.b32.xlu0 %v1023, 127
      %v1030 = vpop.permute.xlu0 %1029
      %1031 = vrot.lane.b32.xlu0 %v1024, 127
      %v1032 = vpop.permute.xlu0 %1031
      %v1033 = vsel %vm259, %v1026, %v1028
      %v1034 = vsel %vm259, %v1028, %v1030
      %v1035 = vsel %vm259, %v1030, %v1032
      %v1037 = vsel %vm263, %v1007, 0
      %v1040 = vsel %vm263, %v1008, 0
      %v1043 = vsel %vm270, %v1033, 0
      %v1046 = vsel %vm270, %v1034, 0
      %v1049 = vsel %vm270, %v1035, 0
      %1051 = vmatprep.subr.bf16.mxu0 0
      %1052 = vmatpush1.bf16.msra.mxu0 0
      %1053 = vmatprep.subr.bf16.mxu0 0
      %1054 = vmatpush1.bf16.msra.mxu0 0
      %1055 = vmatprep.subr.bf16.mxu0 0
      %1056 = vmatpush1.bf16.msra.mxu0 0
      %1057 = vmatprep.subr.bf16.mxu0 0
      %1058 = vmatpush1.bf16.msra.mxu0 0
      %1059 = vmatprep.subr.bf16.mxu0 0
      %1060 = vmatpush1.bf16.msra.mxu0 0
      %1061 = vmatprep.subr.bf16.mxu0 0
      %1062 = vmatpush1.bf16.msra.mxu0 0
      %1063 = vmatprep.subr.bf16.mxu0 0
      %1064 = vmatpush1.bf16.msra.mxu0 0
      %1065 = vmatprep.subr.bf16.mxu0 %v1046
      %1066 = vmatpush1.bf16.msra.mxu0 %v1043
      %1067 = vmatprep.subr.bf16.mxu0 0
      %1068 = vmatpush2.bf16.msra.mxu0 0
      %1069 = vmatprep.subr.bf16.mxu0 0
      %1070 = vmatpush2.bf16.msra.mxu0 0
      %1071 = vmatprep.subr.bf16.mxu0 0
      %1072 = vmatpush2.bf16.msra.mxu0 0
      %1073 = vmatprep.subr.bf16.mxu0 0
      %1074 = vmatpush2.bf16.msra.mxu0 0
      %1075 = vmatprep.subr.bf16.mxu0 0
      %1076 = vmatpush2.bf16.msra.mxu0 0
      %1077 = vmatprep.subr.bf16.mxu0 0
      %1078 = vmatpush2.bf16.msra.mxu0 0
      %1079 = vmatprep.subr.bf16.mxu0 0
      %1080 = vmatpush2.bf16.msra.mxu0 0
      %1081 = vmatprep.subr.bf16.mxu0 0
      %1082 = vmatpush2.bf16.msra.mxu0 0
      %1083 = vmatprep.mubr.bf16.mxu0 0
      %1084 = vmatmul.mubr.bf16.gmra.mxu0 %v1037
      %v1085 = vpop.f32.mrf.mxu0
      %v1086 = vadd.f32 0.0, %v1085
      %v1087 = vpop.f32.mrf.mxu0
      %v1088 = vadd.f32 0.0, %v1087
      %v1089 = vpop.f32.mrf.mxu0
      %v1090 = vadd.f32 0.0, %v1089
      %v1091 = vpop.f32.mrf.mxu0
      %v1092 = vadd.f32 0.0, %v1091
      %1093 = vmatprep.mubr.bf16.mxu0 0
      %1094 = vmatmul.mubr.bf16.gmra.mxu0 %v1040
      %v1095 = vpop.f32.mrf.mxu0
      %v1096 = vadd.f32 0.0, %v1095
      %v1097 = vpop.f32.mrf.mxu0
      %v1098 = vadd.f32 0.0, %v1097
      %v1099 = vpop.f32.mrf.mxu0
      %v1100 = vadd.f32 0.0, %v1099
      %v1101 = vpop.f32.mrf.mxu0
      %v1102 = vadd.f32 0.0, %v1101
      %1103 = vdwg.mxu0
      %1104 = vmatprep.subr.bf16.mxu0 0
      %1105 = vmatpush1.bf16.msra.mxu0 0
      %1106 = vmatprep.subr.bf16.mxu0 0
      %1107 = vmatpush1.bf16.msra.mxu0 0
      %1108 = vmatprep.subr.bf16.mxu0 0
      %1109 = vmatpush1.bf16.msra.mxu0 0
      %1110 = vmatprep.subr.bf16.mxu0 0
      %1111 = vmatpush1.bf16.msra.mxu0 0
      %1112 = vmatprep.subr.bf16.mxu0 0
      %1113 = vmatpush1.bf16.msra.mxu0 0
      %1114 = vmatprep.subr.bf16.mxu0 0
      %1115 = vmatpush1.bf16.msra.mxu0 0
      %1116 = vmatprep.subr.bf16.mxu0 0
      %1117 = vmatpush1.bf16.msra.mxu0 0
      %1118 = vmatprep.subr.bf16.mxu0 0
      %1119 = vmatpush1.bf16.msra.mxu0 %v1049
      %1120 = vmatprep.subr.bf16.mxu0 0
      %1121 = vmatpush2.bf16.msra.mxu0 0
      %1122 = vmatprep.subr.bf16.mxu0 0
      %1123 = vmatpush2.bf16.msra.mxu0 0
      %1124 = vmatprep.subr.bf16.mxu0 0
      %1125 = vmatpush2.bf16.msra.mxu0 0
      %1126 = vmatprep.subr.bf16.mxu0 0
      %1127 = vmatpush2.bf16.msra.mxu0 0
      %1128 = vmatprep.subr.bf16.mxu0 0
      %1129 = vmatpush2.bf16.msra.mxu0 0
      %1130 = vmatprep.subr.bf16.mxu0 0
      %1131 = vmatpush2.bf16.msra.mxu0 0
      %1132 = vmatprep.subr.bf16.mxu0 0
      %1133 = vmatpush2.bf16.msra.mxu0 0
      %1134 = vmatprep.subr.bf16.mxu0 0
      %1135 = vmatpush2.bf16.msra.mxu0 0
      %1136 = vmatprep.mubr.bf16.mxu0 0
      %1137 = vmatmul.mubr.bf16.gmra.mxu0 %v1037
      %v1138 = vpop.f32.mrf.mxu0
      %v1139 = vadd.f32 0.0, %v1138
      %v1140 = vpop.f32.mrf.mxu0
      %v1141 = vpop.f32.mrf.mxu0
      %v1142 = vadd.f32 0.0, %v1141
      %v1143 = vpop.f32.mrf.mxu0
      %1144 = vmatprep.mubr.bf16.mxu0 0
      %1145 = vmatmul.mubr.bf16.gmra.mxu0 %v1040
      %v1146 = vpop.f32.mrf.mxu0
      %v1147 = vadd.f32 0.0, %v1146
      %v1148 = vpop.f32.mrf.mxu0
      %v1149 = vpop.f32.mrf.mxu0
      %v1150 = vadd.f32 0.0, %v1149
      %v1151 = vpop.f32.mrf.mxu0
      %1152 = vdwg.mxu0
      %v1157 = vunpack.c.l.b16 %v991
      %v1158 = vunpack.c.l.b16 %v992
      %v1159 = vunpack.c.l.b16 %v993
      %v1160 = vunpack.c.l.b16 %v994
      %v1161 = vpack.c.b16 %v1158, %v1157
      %v1162 = vpack.c.b16 %v1160, %v1159
      %v1164 = vsel %vm263, %v1161, 0
      %v1167 = vsel %vm263, %v1162, 0
      %v1170 = vsel %vm270, %v1021, 0
      %v1173 = vsel %vm270, %v1022, 0
      %v1176 = vsel %vm270, %v1023, 0
      %1178 = vmatprep.subr.bf16.mxu0 0
      %1179 = vmatpush1.bf16.msra.mxu0 0
      %1180 = vmatprep.subr.bf16.mxu0 0
      %1181 = vmatpush1.bf16.msra.mxu0 0
      %1182 = vmatprep.subr.bf16.mxu0 0
      %1183 = vmatpush1.bf16.msra.mxu0 0
      %1184 = vmatprep.subr.bf16.mxu0 0
      %1185 = vmatpush1.bf16.msra.mxu0 0
      %1186 = vmatprep.subr.bf16.mxu0 0
      %1187 = vmatpush1.bf16.msra.mxu0 0
      %1188 = vmatprep.subr.bf16.mxu0 0
      %1189 = vmatpush1.bf16.msra.mxu0 0
      %1190 = vmatprep.subr.bf16.mxu0 0
      %1191 = vmatpush1.bf16.msra.mxu0 0
      %1192 = vmatprep.subr.bf16.mxu0 %v1173
      %1193 = vmatpush1.bf16.msra.mxu0 %v1170
      %1194 = vmatprep.subr.bf16.mxu0 0
      %1195 = vmatpush2.bf16.msra.mxu0 0
      %1196 = vmatprep.subr.bf16.mxu0 0
      %1197 = vmatpush2.bf16.msra.mxu0 0
      %1198 = vmatprep.subr.bf16.mxu0 0
      %1199 = vmatpush2.bf16.msra.mxu0 0
      %1200 = vmatprep.subr.bf16.mxu0 0
      %1201 = vmatpush2.bf16.msra.mxu0 0
      %1202 = vmatprep.subr.bf16.mxu0 0
      %1203 = vmatpush2.bf16.msra.mxu0 0
      %1204 = vmatprep.subr.bf16.mxu0 0
      %1205 = vmatpush2.bf16.msra.mxu0 0
      %1206 = vmatprep.subr.bf16.mxu0 0
      %1207 = vmatpush2.bf16.msra.mxu0 0
      %1208 = vmatprep.subr.bf16.mxu0 0
      %1209 = vmatpush2.bf16.msra.mxu0 0
      %1210 = vmatprep.mubr.bf16.mxu0 0
      %1211 = vmatmul.mubr.bf16.gmra.mxu0 %v1164
      %v1212 = vpop.f32.mrf.mxu0
      %v1213 = vadd.f32 %v1086, %v1212
      %v1214 = vpop.f32.mrf.mxu0
      %v1215 = vadd.f32 %v1088, %v1214
      %v1216 = vpop.f32.mrf.mxu0
      %v1217 = vadd.f32 %v1090, %v1216
      %v1218 = vpop.f32.mrf.mxu0
      %v1219 = vadd.f32 %v1092, %v1218
      %1220 = vmatprep.mubr.bf16.mxu0 0
      %1221 = vmatmul.mubr.bf16.gmra.mxu0 %v1167
      %v1222 = vpop.f32.mrf.mxu0
      %v1223 = vadd.f32 %v1096, %v1222
      %v1224 = vpop.f32.mrf.mxu0
      %v1225 = vadd.f32 %v1098, %v1224
      %v1226 = vpop.f32.mrf.mxu0
      %v1227 = vadd.f32 %v1100, %v1226
      %v1228 = vpop.f32.mrf.mxu0
      %v1229 = vadd.f32 %v1102, %v1228
      %1230 = vdwg.mxu0
      %1231 = vmatprep.subr.bf16.mxu0 0
      %1232 = vmatpush1.bf16.msra.mxu0 0
      %1233 = vmatprep.subr.bf16.mxu0 0
      %1234 = vmatpush1.bf16.msra.mxu0 0
      %1235 = vmatprep.subr.bf16.mxu0 0
      %1236 = vmatpush1.bf16.msra.mxu0 0
      %1237 = vmatprep.subr.bf16.mxu0 0
      %1238 = vmatpush1.bf16.msra.mxu0 0
      %1239 = vmatprep.subr.bf16.mxu0 0
      %1240 = vmatpush1.bf16.msra.mxu0 0
      %1241 = vmatprep.subr.bf16.mxu0 0
      %1242 = vmatpush1.bf16.msra.mxu0 0
      %1243 = vmatprep.subr.bf16.mxu0 0
      %1244 = vmatpush1.bf16.msra.mxu0 0
      %1245 = vmatprep.subr.bf16.mxu0 0
      %1246 = vmatpush1.bf16.msra.mxu0 %v1176
      %1247 = vmatprep.subr.bf16.mxu0 0
      %1248 = vmatpush2.bf16.msra.mxu0 0
      %1249 = vmatprep.subr.bf16.mxu0 0
      %1250 = vmatpush2.bf16.msra.mxu0 0
      %1251 = vmatprep.subr.bf16.mxu0 0
      %1252 = vmatpush2.bf16.msra.mxu0 0
      %1253 = vmatprep.subr.bf16.mxu0 0
      %1254 = vmatpush2.bf16.msra.mxu0 0
      %1255 = vmatprep.subr.bf16.mxu0 0
      %1256 = vmatpush2.bf16.msra.mxu0 0
      %1257 = vmatprep.subr.bf16.mxu0 0
      %1258 = vmatpush2.bf16.msra.mxu0 0
      %1259 = vmatprep.subr.bf16.mxu0 0
      %1260 = vmatpush2.bf16.msra.mxu0 0
      %1261 = vmatprep.subr.bf16.mxu0 0
      %1262 = vmatpush2.bf16.msra.mxu0 0
      %1263 = vmatprep.mubr.bf16.mxu0 0
      %1264 = vmatmul.mubr.bf16.gmra.mxu0 %v1164
      %v1265 = vpop.f32.mrf.mxu0
      %v1266 = vadd.f32 %v1139, %v1265
      %v1267 = vpop.f32.mrf.mxu0
      %v1268 = vpop.f32.mrf.mxu0
      %v1269 = vadd.f32 %v1142, %v1268
      %v1270 = vpop.f32.mrf.mxu0
      %1271 = vmatprep.mubr.bf16.mxu0 0
      %1272 = vmatmul.mubr.bf16.gmra.mxu0 %v1167
      %v1273 = vpop.f32.mrf.mxu0
      %v1274 = vadd.f32 %v1147, %v1273
      %v1275 = vpop.f32.mrf.mxu0
      %v1276 = vpop.f32.mrf.mxu0
      %v1277 = vadd.f32 %v1150, %v1276
      %v1278 = vpop.f32.mrf.mxu0
      %1279 = vdwg.mxu0
      %v1280 = vld [vmem:[%s509] sm:$0xf]
      %v1281 = vld [vmem:[%s509 + $0x4] sm:$0xf]
      %v1282 = vld [vmem:[%s509 + $0x8] sm:$0xf]
      %v1283 = vld [vmem:[%s509 + $0xc] sm:$0xf]
      %v1288 = vunpack.c.l.b16 %v1280
      %v1289 = vunpack.c.l.b16 %v1281
      %v1290 = vunpack.c.l.b16 %v1282
      %v1291 = vunpack.c.l.b16 %v1283
      %v1292 = vpack.c.b16 %v1289, %v1288
      %v1293 = vpack.c.b16 %v1291, %v1290
      %1294 = vrot.lane.b32.xlu0 %v1021, 111
      %v1295 = vpop.permute.xlu0 %1294
      %1296 = vrot.lane.b32.xlu0 %v1022, 111
      %v1297 = vpop.permute.xlu0 %1296
      %1298 = vrot.lane.b32.xlu0 %v1023, 111
      %v1299 = vpop.permute.xlu0 %1298
      %1300 = vrot.lane.b32.xlu0 %v1024, 111
      %v1301 = vpop.permute.xlu0 %1300
      %v1302 = vsel %vm532, %v1295, %v1297
      %v1303 = vsel %vm532, %v1297, %v1299
      %v1304 = vsel %vm532, %v1299, %v1301
      %v1306 = vsel %vm263, %v1292, 0
      %v1309 = vsel %vm263, %v1293, 0
      %v1312 = vsel %vm270, %v1302, 0
      %v1315 = vsel %vm270, %v1303, 0
      %v1318 = vsel %vm270, %v1304, 0
      %1320 = vmatprep.subr.bf16.mxu0 0
      %1321 = vmatpush1.bf16.msra.mxu0 0
      %1322 = vmatprep.subr.bf16.mxu0 0
      %1323 = vmatpush1.bf16.msra.mxu0 0
      %1324 = vmatprep.subr.bf16.mxu0 0
      %1325 = vmatpush1.bf16.msra.mxu0 0
      %1326 = vmatprep.subr.bf16.mxu0 0
      %1327 = vmatpush1.bf16.msra.mxu0 0
      %1328 = vmatprep.subr.bf16.mxu0 0
      %1329 = vmatpush1.bf16.msra.mxu0 0
      %1330 = vmatprep.subr.bf16.mxu0 0
      %1331 = vmatpush1.bf16.msra.mxu0 0
      %1332 = vmatprep.subr.bf16.mxu0 0
      %1333 = vmatpush1.bf16.msra.mxu0 0
      %1334 = vmatprep.subr.bf16.mxu0 %v1315
      %1335 = vmatpush1.bf16.msra.mxu0 %v1312
      %1336 = vmatprep.subr.bf16.mxu0 0
      %1337 = vmatpush2.bf16.msra.mxu0 0
      %1338 = vmatprep.subr.bf16.mxu0 0
      %1339 = vmatpush2.bf16.msra.mxu0 0
      %1340 = vmatprep.subr.bf16.mxu0 0
      %1341 = vmatpush2.bf16.msra.mxu0 0
      %1342 = vmatprep.subr.bf16.mxu0 0
      %1343 = vmatpush2.bf16.msra.mxu0 0
      %1344 = vmatprep.subr.bf16.mxu0 0
      %1345 = vmatpush2.bf16.msra.mxu0 0
      %1346 = vmatprep.subr.bf16.mxu0 0
      %1347 = vmatpush2.bf16.msra.mxu0 0
      %1348 = vmatprep.subr.bf16.mxu0 0
      %1349 = vmatpush2.bf16.msra.mxu0 0
      %1350 = vmatprep.subr.bf16.mxu0 0
      %1351 = vmatpush2.bf16.msra.mxu0 0
      %1352 = vmatprep.mubr.bf16.mxu0 0
      %1353 = vmatmul.mubr.bf16.gmra.mxu0 %v1306
      %v1354 = vpop.f32.mrf.mxu0
      %v1355 = vadd.f32 0.0, %v1354
      %v1356 = vpop.f32.mrf.mxu0
      %v1357 = vadd.f32 0.0, %v1356
      %v1358 = vpop.f32.mrf.mxu0
      %v1359 = vadd.f32 0.0, %v1358
      %v1360 = vpop.f32.mrf.mxu0
      %v1361 = vadd.f32 0.0, %v1360
      %1362 = vmatprep.mubr.bf16.mxu0 0
      %1363 = vmatmul.mubr.bf16.gmra.mxu0 %v1309
      %v1364 = vpop.f32.mrf.mxu0
      %v1365 = vadd.f32 0.0, %v1364
      %v1366 = vpop.f32.mrf.mxu0
      %v1367 = vadd.f32 0.0, %v1366
      %v1368 = vpop.f32.mrf.mxu0
      %v1369 = vadd.f32 0.0, %v1368
      %v1370 = vpop.f32.mrf.mxu0
      %v1371 = vadd.f32 0.0, %v1370
      %1372 = vdwg.mxu0
      %1373 = vmatprep.subr.bf16.mxu0 0
      %1374 = vmatpush1.bf16.msra.mxu0 0
      %1375 = vmatprep.subr.bf16.mxu0 0
      %1376 = vmatpush1.bf16.msra.mxu0 0
      %1377 = vmatprep.subr.bf16.mxu0 0
      %1378 = vmatpush1.bf16.msra.mxu0 0
      %1379 = vmatprep.subr.bf16.mxu0 0
      %1380 = vmatpush1.bf16.msra.mxu0 0
      %1381 = vmatprep.subr.bf16.mxu0 0
      %1382 = vmatpush1.bf16.msra.mxu0 0
      %1383 = vmatprep.subr.bf16.mxu0 0
      %1384 = vmatpush1.bf16.msra.mxu0 0
      %1385 = vmatprep.subr.bf16.mxu0 0
      %1386 = vmatpush1.bf16.msra.mxu0 0
      %1387 = vmatprep.subr.bf16.mxu0 0
      %1388 = vmatpush1.bf16.msra.mxu0 %v1318
      %1389 = vmatprep.subr.bf16.mxu0 0
      %1390 = vmatpush2.bf16.msra.mxu0 0
      %1391 = vmatprep.subr.bf16.mxu0 0
      %1392 = vmatpush2.bf16.msra.mxu0 0
      %1393 = vmatprep.subr.bf16.mxu0 0
      %1394 = vmatpush2.bf16.msra.mxu0 0
      %1395 = vmatprep.subr.bf16.mxu0 0
      %1396 = vmatpush2.bf16.msra.mxu0 0
      %1397 = vmatprep.subr.bf16.mxu0 0
      %1398 = vmatpush2.bf16.msra.mxu0 0
      %1399 = vmatprep.subr.bf16.mxu0 0
      %1400 = vmatpush2.bf16.msra.mxu0 0
      %1401 = vmatprep.subr.bf16.mxu0 0
      %1402 = vmatpush2.bf16.msra.mxu0 0
      %1403 = vmatprep.subr.bf16.mxu0 0
      %1404 = vmatpush2.bf16.msra.mxu0 0
      %1405 = vmatprep.mubr.bf16.mxu0 0
      %1406 = vmatmul.mubr.bf16.gmra.mxu0 %v1306
      %v1407 = vpop.f32.mrf.mxu0
      %v1408 = vadd.f32 0.0, %v1407
      %v1409 = vpop.f32.mrf.mxu0
      %v1410 = vpop.f32.mrf.mxu0
      %v1411 = vadd.f32 0.0, %v1410
      %v1412 = vpop.f32.mrf.mxu0
      %1413 = vmatprep.mubr.bf16.mxu0 0
      %1414 = vmatmul.mubr.bf16.gmra.mxu0 %v1309
      %v1415 = vpop.f32.mrf.mxu0
      %v1416 = vadd.f32 0.0, %v1415
      %v1417 = vpop.f32.mrf.mxu0
      %v1418 = vpop.f32.mrf.mxu0
      %v1419 = vadd.f32 0.0, %v1418
      %v1420 = vpop.f32.mrf.mxu0
      %1421 = vdwg.mxu0
      %v1422 = vadd.f32 %v1213, %v1355
      %v1423 = vadd.f32 %v1215, %v1357
      %v1424 = vadd.f32 %v1266, %v1408
      %v1425 = vadd.f32 %v1217, %v1359
      %v1426 = vadd.f32 %v1219, %v1361
      %v1427 = vadd.f32 %v1269, %v1411
      %v1428 = vadd.f32 %v1223, %v1365
      %v1429 = vadd.f32 %v1225, %v1367
      %v1430 = vadd.f32 %v1274, %v1416
      %v1431 = vadd.f32 %v1227, %v1369
      %v1432 = vadd.f32 %v1229, %v1371
      %v1433 = vadd.f32 %v1277, %v1419
      %v1434 = vld [vmem:[%s665] sm:$0xf]
      %v1435 = vld [vmem:[%s665 + $0x4] sm:$0xf]
      %v1436 = vld [vmem:[%s665 + $0x8] sm:$0xf]
      %v1437 = vld [vmem:[%s665 + $0xc] sm:$0xf]
      %v1442 = vunpack.c.l.b16 %v1434
      %v1443 = vunpack.c.l.b16 %v1435
      %v1444 = vunpack.c.l.b16 %v1436
      %v1445 = vunpack.c.l.b16 %v1437
      %v1446 = vpack.c.b16 %v1443, %v1442
      %v1447 = vpack.c.b16 %v1445, %v1444
      %1448 = vrot.lane.b32.xlu0 %v1021, 110
      %v1449 = vpop.permute.xlu0 %1448
      %1450 = vrot.lane.b32.xlu0 %v1022, 110
      %v1451 = vpop.permute.xlu0 %1450
      %1452 = vrot.lane.b32.xlu0 %v1023, 110
      %v1453 = vpop.permute.xlu0 %1452
      %1454 = vrot.lane.b32.xlu0 %v1024, 110
      %v1455 = vpop.permute.xlu0 %1454
      %v1456 = vsel %vm688, %v1449, %v1451
      %v1457 = vsel %vm688, %v1451, %v1453
      %v1458 = vsel %vm688, %v1453, %v1455
      %v1460 = vsel %vm263, %v1446, 0
      %v1463 = vsel %vm263, %v1447, 0
      %v1466 = vsel %vm270, %v1456, 0
      %v1469 = vsel %vm270, %v1457, 0
      %v1472 = vsel %vm270, %v1458, 0
      %1474 = vmatprep.subr.bf16.mxu0 0
      %1475 = vmatpush1.bf16.msra.mxu0 0
      %1476 = vmatprep.subr.bf16.mxu0 0
      %1477 = vmatpush1.bf16.msra.mxu0 0
      %1478 = vmatprep.subr.bf16.mxu0 0
      %1479 = vmatpush1.bf16.msra.mxu0 0
      %1480 = vmatprep.subr.bf16.mxu0 0
      %1481 = vmatpush1.bf16.msra.mxu0 0
      %1482 = vmatprep.subr.bf16.mxu0 0
      %1483 = vmatpush1.bf16.msra.mxu0 0
      %1484 = vmatprep.subr.bf16.mxu0 0
      %1485 = vmatpush1.bf16.msra.mxu0 0
      %1486 = vmatprep.subr.bf16.mxu0 0
      %1487 = vmatpush1.bf16.msra.mxu0 0
      %1488 = vmatprep.subr.bf16.mxu0 %v1469
      %1489 = vmatpush1.bf16.msra.mxu0 %v1466
      %1490 = vmatprep.subr.bf16.mxu0 0
      %1491 = vmatpush2.bf16.msra.mxu0 0
      %1492 = vmatprep.subr.bf16.mxu0 0
      %1493 = vmatpush2.bf16.msra.mxu0 0
      %1494 = vmatprep.subr.bf16.mxu0 0
      %1495 = vmatpush2.bf16.msra.mxu0 0
      %1496 = vmatprep.subr.bf16.mxu0 0
      %1497 = vmatpush2.bf16.msra.mxu0 0
      %1498 = vmatprep.subr.bf16.mxu0 0
      %1499 = vmatpush2.bf16.msra.mxu0 0
      %1500 = vmatprep.subr.bf16.mxu0 0
      %1501 = vmatpush2.bf16.msra.mxu0 0
      %1502 = vmatprep.subr.bf16.mxu0 0
      %1503 = vmatpush2.bf16.msra.mxu0 0
      %1504 = vmatprep.subr.bf16.mxu0 0
      %1505 = vmatpush2.bf16.msra.mxu0 0
      %1506 = vmatprep.mubr.bf16.mxu0 0
      %1507 = vmatmul.mubr.bf16.gmra.mxu0 %v1460
      %v1508 = vpop.f32.mrf.mxu0
      %v1509 = vadd.f32 0.0, %v1508
      %v1510 = vpop.f32.mrf.mxu0
      %v1511 = vadd.f32 0.0, %v1510
      %v1512 = vpop.f32.mrf.mxu0
      %v1513 = vadd.f32 0.0, %v1512
      %v1514 = vpop.f32.mrf.mxu0
      %v1515 = vadd.f32 0.0, %v1514
      %1516 = vmatprep.mubr.bf16.mxu0 0
      %1517 = vmatmul.mubr.bf16.gmra.mxu0 %v1463
      %v1518 = vpop.f32.mrf.mxu0
      %v1519 = vadd.f32 0.0, %v1518
      %v1520 = vpop.f32.mrf.mxu0
      %v1521 = vadd.f32 0.0, %v1520
      %v1522 = vpop.f32.mrf.mxu0
      %v1523 = vadd.f32 0.0, %v1522
      %v1524 = vpop.f32.mrf.mxu0
      %v1525 = vadd.f32 0.0, %v1524
      %1526 = vdwg.mxu0
      %1527 = vmatprep.subr.bf16.mxu0 0
      %1528 = vmatpush1.bf16.msra.mxu0 0
      %1529 = vmatprep.subr.bf16.mxu0 0
      %1530 = vmatpush1.bf16.msra.mxu0 0
      %1531 = vmatprep.subr.bf16.mxu0 0
      %1532 = vmatpush1.bf16.msra.mxu0 0
      %1533 = vmatprep.subr.bf16.mxu0 0
      %1534 = vmatpush1.bf16.msra.mxu0 0
      %1535 = vmatprep.subr.bf16.mxu0 0
      %1536 = vmatpush1.bf16.msra.mxu0 0
      %1537 = vmatprep.subr.bf16.mxu0 0
      %1538 = vmatpush1.bf16.msra.mxu0 0
      %1539 = vmatprep.subr.bf16.mxu0 0
      %1540 = vmatpush1.bf16.msra.mxu0 0
      %1541 = vmatprep.subr.bf16.mxu0 0
      %1542 = vmatpush1.bf16.msra.mxu0 %v1472
      %1543 = vmatprep.subr.bf16.mxu0 0
      %1544 = vmatpush2.bf16.msra.mxu0 0
      %1545 = vmatprep.subr.bf16.mxu0 0
      %1546 = vmatpush2.bf16.msra.mxu0 0
      %1547 = vmatprep.subr.bf16.mxu0 0
      %1548 = vmatpush2.bf16.msra.mxu0 0
      %1549 = vmatprep.subr.bf16.mxu0 0
      %1550 = vmatpush2.bf16.msra.mxu0 0
      %1551 = vmatprep.subr.bf16.mxu0 0
      %1552 = vmatpush2.bf16.msra.mxu0 0
      %1553 = vmatprep.subr.bf16.mxu0 0
      %1554 = vmatpush2.bf16.msra.mxu0 0
      %1555 = vmatprep.subr.bf16.mxu0 0
      %1556 = vmatpush2.bf16.msra.mxu0 0
      %1557 = vmatprep.subr.bf16.mxu0 0
      %1558 = vmatpush2.bf16.msra.mxu0 0
      %1559 = vmatprep.mubr.bf16.mxu0 0
      %1560 = vmatmul.mubr.bf16.gmra.mxu0 %v1460
      %v1561 = vpop.f32.mrf.mxu0
      %v1562 = vadd.f32 0.0, %v1561
      %v1563 = vpop.f32.mrf.mxu0
      %v1564 = vpop.f32.mrf.mxu0
      %v1565 = vadd.f32 0.0, %v1564
      %v1566 = vpop.f32.mrf.mxu0
      %1567 = vmatprep.mubr.bf16.mxu0 0
      %1568 = vmatmul.mubr.bf16.gmra.mxu0 %v1463
      %v1569 = vpop.f32.mrf.mxu0
      %v1570 = vadd.f32 0.0, %v1569
      %v1571 = vpop.f32.mrf.mxu0
      %v1572 = vpop.f32.mrf.mxu0
      %v1573 = vadd.f32 0.0, %v1572
      %v1574 = vpop.f32.mrf.mxu0
      %1575 = vdwg.mxu0
      %v1576 = vadd.f32 %v1422, %v1509
      %v1577 = vadd.f32 %v1423, %v1511
      %v1578 = vadd.f32 %v1424, %v1562
      %v1579 = vadd.f32 %v1425, %v1513
      %v1580 = vadd.f32 %v1426, %v1515
      %v1581 = vadd.f32 %v1427, %v1565
      %v1582 = vadd.f32 %v1428, %v1519
      %v1583 = vadd.f32 %v1429, %v1521
      %v1584 = vadd.f32 %v1430, %v1570
      %v1585 = vadd.f32 %v1431, %v1523
      %v1586 = vadd.f32 %v1432, %v1525
      %v1587 = vadd.f32 %v1433, %v1573
      %v1588 = vadd.f32 %v1576, %v824
      %v1589 = vadd.f32 %v1577, %v824
      %v1590 = vadd.f32 %v1578, %v824
      %v1591 = vadd.f32 %v1579, %v829
      %v1592 = vadd.f32 %v1580, %v829
      %v1593 = vadd.f32 %v1581, %v829
      %v1594 = vadd.f32 %v1582, %v834
      %v1595 = vadd.f32 %v1583, %v834
      %v1596 = vadd.f32 %v1584, %v834
      %v1597 = vadd.f32 %v1585, %v839
      %v1598 = vadd.f32 %v1586, %v839
      %v1599 = vadd.f32 %v1587, %v839
      %v1600 = vxor.u32 %v1588, 2147483648
      %v1601 = vxor.u32 %v1589, 2147483648
      %v1602 = vxor.u32 %v1590, 2147483648
      %v1603 = vxor.u32 %v1591, 2147483648
      %v1604 = vxor.u32 %v1592, 2147483648
      %v1605 = vxor.u32 %v1593, 2147483648
      %v1606 = vxor.u32 %v1594, 2147483648
      %v1607 = vxor.u32 %v1595, 2147483648
      %v1608 = vxor.u32 %v1596, 2147483648
      %v1609 = vxor.u32 %v1597, 2147483648
      %v1610 = vxor.u32 %v1598, 2147483648
      %v1611 = vxor.u32 %v1599, 2147483648
      %v1612 = vmul.f32 %v1600, 1.442695
      %v1613 = vpow.pop %v1612
      %v1614 = vmul.f32 %v1601, 1.442695
      %v1615 = vpow.pop %v1614
      %v1616 = vmul.f32 %v1602, 1.442695
      %v1617 = vpow.pop %v1616
      %v1618 = vmul.f32 %v1603, 1.442695
      %v1619 = vpow.pop %v1618
      %v1620 = vmul.f32 %v1604, 1.442695
      %v1621 = vpow.pop %v1620
      %v1622 = vmul.f32 %v1605, 1.442695
      %v1623 = vpow.pop %v1622
      %v1624 = vmul.f32 %v1606, 1.442695
      %v1625 = vpow.pop %v1624
      %v1626 = vmul.f32 %v1607, 1.442695
      %v1627 = vpow.pop %v1626
      %v1628 = vmul.f32 %v1608, 1.442695
      %v1629 = vpow.pop %v1628
      %v1630 = vmul.f32 %v1609, 1.442695
      %v1631 = vpow.pop %v1630
      %v1632 = vmul.f32 %v1610, 1.442695
      %v1633 = vpow.pop %v1632
      %v1634 = vmul.f32 %v1611, 1.442695
      %v1635 = vpow.pop %v1634
      %v1636 = vadd.f32 %v1613, 1.0
      %v1637 = vadd.f32 %v1615, 1.0
      %v1638 = vadd.f32 %v1617, 1.0
      %v1639 = vadd.f32 %v1619, 1.0
      %v1640 = vadd.f32 %v1621, 1.0
      %v1641 = vadd.f32 %v1623, 1.0
      %v1642 = vadd.f32 %v1625, 1.0
      %v1643 = vadd.f32 %v1627, 1.0
      %v1644 = vadd.f32 %v1629, 1.0
      %v1645 = vadd.f32 %v1631, 1.0
      %v1646 = vadd.f32 %v1633, 1.0
      %v1647 = vadd.f32 %v1635, 1.0
      %v1648 = vrcp.pop %v1636
      %v1649 = vmul.f32 1.0, %v1648
      %v1650 = vrcp.pop %v1637
      %v1651 = vmul.f32 1.0, %v1650
      %v1652 = vrcp.pop %v1638
      %v1653 = vmul.f32 1.0, %v1652
      %v1654 = vrcp.pop %v1639
      %v1655 = vmul.f32 1.0, %v1654
      %v1656 = vrcp.pop %v1640
      %v1657 = vmul.f32 1.0, %v1656
      %v1658 = vrcp.pop %v1641
      %v1659 = vmul.f32 1.0, %v1658
      %v1660 = vrcp.pop %v1642
      %v1661 = vmul.f32 1.0, %v1660
      %v1662 = vrcp.pop %v1643
      %v1663 = vmul.f32 1.0, %v1662
      %v1664 = vrcp.pop %v1644
      %v1665 = vmul.f32 1.0, %v1664
      %v1666 = vrcp.pop %v1645
      %v1667 = vmul.f32 1.0, %v1666
      %v1668 = vrcp.pop %v1646
      %v1669 = vmul.f32 1.0, %v1668
      %v1670 = vrcp.pop %v1647
      %v1671 = vmul.f32 1.0, %v1670
      %v1672 = vmul.f32 %v1588, %v1649
      %v1673 = vmul.f32 %v1589, %v1651
      %v1674 = vmul.f32 %v1590, %v1653
      %v1675 = vmul.f32 %v1591, %v1655
      %v1676 = vmul.f32 %v1592, %v1657
      %v1677 = vmul.f32 %v1593, %v1659
      %v1678 = vmul.f32 %v1594, %v1661
      %v1679 = vmul.f32 %v1595, %v1663
      %v1680 = vmul.f32 %v1596, %v1665
      %v1681 = vmul.f32 %v1597, %v1667
      %v1682 = vmul.f32 %v1598, %v1669
      %v1683 = vmul.f32 %v1599, %v1671
      %v1684 = vmul.f32 %v1672, %v941
      %v1685 = vmul.f32 %v1673, %v945
      %v1686 = vmul.f32 %v1674, %v949
      %v1687 = vmul.f32 %v1675, %v941
      %v1688 = vmul.f32 %v1676, %v945
      %v1689 = vmul.f32 %v1677, %v949
      %v1690 = vmul.f32 %v1678, %v941
      %v1691 = vmul.f32 %v1679, %v945
      %v1692 = vmul.f32 %v1680, %v949
      %v1693 = vmul.f32 %v1681, %v941
      %v1694 = vmul.f32 %v1682, %v945
      %v1695 = vmul.f32 %v1683, %v949
      %v1696 = vadd.f32 %v1684, %v1685
      %v1697 = vadd.f32 %v1696, %v1686
      %1698 = vadd.xlane.f32.xlu0 %v1697
      %v1699 = vpop.xlane.xlu0 %1698
      %v1700 = vadd.f32 %v1687, %v1688
      %v1701 = vadd.f32 %v1700, %v1689
      %1702 = vadd.xlane.f32.xlu0 %v1701
      %v1703 = vpop.xlane.xlu0 %1702
      %v1704 = vadd.f32 %v1690, %v1691
      %v1705 = vadd.f32 %v1704, %v1692
      %1706 = vadd.xlane.f32.xlu0 %v1705
      %v1707 = vpop.xlane.xlu0 %1706
      %v1708 = vadd.f32 %v1693, %v1694
      %v1709 = vadd.f32 %v1708, %v1695
      %1710 = vadd.xlane.f32.xlu0 %v1709
      %v1711 = vpop.xlane.xlu0 %1710
      %s1712 = scalar_lea.vmem %s204, 32
      %1713 = vst.msk [vmem:[%s1712] sm:$0xff] %vm981, %v1699
      %1714 = vst.msk [vmem:[%s1712 + $0x8] sm:$0xff] %vm981, %v1703
      %1715 = vst.msk [vmem:[%s1712 + $0x10] sm:$0xff] %vm981, %v1707
      %1716 = vst.msk [vmem:[%s1712 + $0x18] sm:$0xff] %vm981, %v1711
      %s1717 = scalar_lea.vmem %s197, 64
      %v1718 = vld [vmem:[%s1717] sm:$0xff]
      %v1719 = vld [vmem:[%s1717 + $0x8] sm:$0xff]
      %v1720 = vld [vmem:[%s1717 + $0x10] sm:$0x33]
      %v1721 = vld [vmem:[%s1717 + $0x18] sm:$0x33]
      %v1722 = vld [vmem:[%s1] sm:$0xf]
      %v1723 = vld [vmem:[%s1 + $0x4] sm:$0xf]
      %v1724 = vld [vmem:[%s1 + $0x8] sm:$0xf]
      %v1725 = vld [vmem:[%s1 + $0xc] sm:$0xf]
      %v1726 = vld [vmem:[%s220] sm:$0xf]
      %v1727 = vld [vmem:[%s220 + $0x4] sm:$0xf]
      %v1728 = vld [vmem:[%s220 + $0x8] sm:$0xf]
      %v1729 = vld [vmem:[%s220 + $0xc] sm:$0xf]
      %v1734 = vunpack.c.l.b16 %v1726
      %v1735 = vunpack.c.l.b16 %v1727
      %v1736 = vunpack.c.l.b16 %v1728
      %v1737 = vunpack.c.l.b16 %v1729
      %v1738 = vpack.c.b16 %v1735, %v1734
      %v1739 = vpack.c.b16 %v1737, %v1736
      %v1744 = vunpack.c.l.b16 %v1718
      %v1745 = vunpack.c.h.b16 %v1718
      %v1746 = vunpack.c.l.b16 %v1719
      %v1747 = vunpack.c.h.b16 %v1719
      %v1748 = vunpack.c.l.b16 %v1720
      %v1749 = vunpack.c.h.b16 %v1720
      %v1750 = vunpack.c.l.b16 %v1721
      %v1751 = vunpack.c.h.b16 %v1721
      %v1752 = vpack.c.b16 %v1748, %v1744
      %v1753 = vpack.c.b16 %v1749, %v1745
      %v1754 = vpack.c.b16 %v1750, %v1746
      %v1755 = vpack.c.b16 %v1751, %v1747
      %1756 = vrot.lane.b32.xlu0 %v1752, 127
      %v1757 = vpop.permute.xlu0 %1756
      %1758 = vrot.lane.b32.xlu0 %v1753, 127
      %v1759 = vpop.permute.xlu0 %1758
      %1760 = vrot.lane.b32.xlu0 %v1754, 127
      %v1761 = vpop.permute.xlu0 %1760
      %1762 = vrot.lane.b32.xlu0 %v1755, 127
      %v1763 = vpop.permute.xlu0 %1762
      %v1764 = vsel %vm259, %v1757, %v1759
      %v1765 = vsel %vm259, %v1759, %v1761
      %v1766 = vsel %vm259, %v1761, %v1763
      %v1768 = vsel %vm263, %v1738, 0
      %v1771 = vsel %vm263, %v1739, 0
      %v1774 = vsel %vm270, %v1764, 0
      %v1777 = vsel %vm270, %v1765, 0
      %v1780 = vsel %vm270, %v1766, 0
      %1782 = vmatprep.subr.bf16.mxu0 0
      %1783 = vmatpush1.bf16.msra.mxu0 0
      %1784 = vmatprep.subr.bf16.mxu0 0
      %1785 = vmatpush1.bf16.msra.mxu0 0
      %1786 = vmatprep.subr.bf16.mxu0 0
      %1787 = vmatpush1.bf16.msra.mxu0 0
      %1788 = vmatprep.subr.bf16.mxu0 0
      %1789 = vmatpush1.bf16.msra.mxu0 0
      %1790 = vmatprep.subr.bf16.mxu0 0
      %1791 = vmatpush1.bf16.msra.mxu0 0
      %1792 = vmatprep.subr.bf16.mxu0 0
      %1793 = vmatpush1.bf16.msra.mxu0 0
      %1794 = vmatprep.subr.bf16.mxu0 0
      %1795 = vmatpush1.bf16.msra.mxu0 0
      %1796 = vmatprep.subr.bf16.mxu0 %v1777
      %1797 = vmatpush1.bf16.msra.mxu0 %v1774
      %1798 = vmatprep.subr.bf16.mxu0 0
      %1799 = vmatpush2.bf16.msra.mxu0 0
      %1800 = vmatprep.subr.bf16.mxu0 0
      %1801 = vmatpush2.bf16.msra.mxu0 0
      %1802 = vmatprep.subr.bf16.mxu0 0
      %1803 = vmatpush2.bf16.msra.mxu0 0
      %1804 = vmatprep.subr.bf16.mxu0 0
      %1805 = vmatpush2.bf16.msra.mxu0 0
      %1806 = vmatprep.subr.bf16.mxu0 0
      %1807 = vmatpush2.bf16.msra.mxu0 0
      %1808 = vmatprep.subr.bf16.mxu0 0
      %1809 = vmatpush2.bf16.msra.mxu0 0
      %1810 = vmatprep.subr.bf16.mxu0 0
      %1811 = vmatpush2.bf16.msra.mxu0 0
      %1812 = vmatprep.subr.bf16.mxu0 0
      %1813 = vmatpush2.bf16.msra.mxu0 0
      %1814 = vmatprep.mubr.bf16.mxu0 0
      %1815 = vmatmul.mubr.bf16.gmra.mxu0 %v1768
      %v1816 = vpop.f32.mrf.mxu0
      %v1817 = vadd.f32 0.0, %v1816
      %v1818 = vpop.f32.mrf.mxu0
      %v1819 = vadd.f32 0.0, %v1818
      %v1820 = vpop.f32.mrf.mxu0
      %v1821 = vadd.f32 0.0, %v1820
      %v1822 = vpop.f32.mrf.mxu0
      %v1823 = vadd.f32 0.0, %v1822
      %1824 = vmatprep.mubr.bf16.mxu0 0
      %1825 = vmatmul.mubr.bf16.gmra.mxu0 %v1771
      %v1826 = vpop.f32.mrf.mxu0
      %v1827 = vadd.f32 0.0, %v1826
      %v1828 = vpop.f32.mrf.mxu0
      %v1829 = vadd.f32 0.0, %v1828
      %v1830 = vpop.f32.mrf.mxu0
      %v1831 = vadd.f32 0.0, %v1830
      %v1832 = vpop.f32.mrf.mxu0
      %v1833 = vadd.f32 0.0, %v1832
      %1834 = vdwg.mxu0
      %1835 = vmatprep.subr.bf16.mxu0 0
      %1836 = vmatpush1.bf16.msra.mxu0 0
      %1837 = vmatprep.subr.bf16.mxu0 0
      %1838 = vmatpush1.bf16.msra.mxu0 0
      %1839 = vmatprep.subr.bf16.mxu0 0
      %1840 = vmatpush1.bf16.msra.mxu0 0
      %1841 = vmatprep.subr.bf16.mxu0 0
      %1842 = vmatpush1.bf16.msra.mxu0 0
      %1843 = vmatprep.subr.bf16.mxu0 0
      %1844 = vmatpush1.bf16.msra.mxu0 0
      %1845 = vmatprep.subr.bf16.mxu0 0
      %1846 = vmatpush1.bf16.msra.mxu0 0
      %1847 = vmatprep.subr.bf16.mxu0 0
      %1848 = vmatpush1.bf16.msra.mxu0 0
      %1849 = vmatprep.subr.bf16.mxu0 0
      %1850 = vmatpush1.bf16.msra.mxu0 %v1780
      %1851 = vmatprep.subr.bf16.mxu0 0
      %1852 = vmatpush2.bf16.msra.mxu0 0
      %1853 = vmatprep.subr.bf16.mxu0 0
      %1854 = vmatpush2.bf16.msra.mxu0 0
      %1855 = vmatprep.subr.bf16.mxu0 0
      %1856 = vmatpush2.bf16.msra.mxu0 0
      %1857 = vmatprep.subr.bf16.mxu0 0
      %1858 = vmatpush2.bf16.msra.mxu0 0
      %1859 = vmatprep.subr.bf16.mxu0 0
      %1860 = vmatpush2.bf16.msra.mxu0 0
      %1861 = vmatprep.subr.bf16.mxu0 0
      %1862 = vmatpush2.bf16.msra.mxu0 0
      %1863 = vmatprep.subr.bf16.mxu0 0
      %1864 = vmatpush2.bf16.msra.mxu0 0
      %1865 = vmatprep.subr.bf16.mxu0 0
      %1866 = vmatpush2.bf16.msra.mxu0 0
      %1867 = vmatprep.mubr.bf16.mxu0 0
      %1868 = vmatmul.mubr.bf16.gmra.mxu0 %v1768
      %v1869 = vpop.f32.mrf.mxu0
      %v1870 = vadd.f32 0.0, %v1869
      %v1871 = vpop.f32.mrf.mxu0
      %v1872 = vpop.f32.mrf.mxu0
      %v1873 = vadd.f32 0.0, %v1872
      %v1874 = vpop.f32.mrf.mxu0
      %1875 = vmatprep.mubr.bf16.mxu0 0
      %1876 = vmatmul.mubr.bf16.gmra.mxu0 %v1771
      %v1877 = vpop.f32.mrf.mxu0
      %v1878 = vadd.f32 0.0, %v1877
      %v1879 = vpop.f32.mrf.mxu0
      %v1880 = vpop.f32.mrf.mxu0
      %v1881 = vadd.f32 0.0, %v1880
      %v1882 = vpop.f32.mrf.mxu0
      %1883 = vdwg.mxu0
      %v1888 = vunpack.c.l.b16 %v1722
      %v1889 = vunpack.c.l.b16 %v1723
      %v1890 = vunpack.c.l.b16 %v1724
      %v1891 = vunpack.c.l.b16 %v1725
      %v1892 = vpack.c.b16 %v1889, %v1888
      %v1893 = vpack.c.b16 %v1891, %v1890
      %v1895 = vsel %vm263, %v1892, 0
      %v1898 = vsel %vm263, %v1893, 0
      %v1901 = vsel %vm270, %v1752, 0
      %v1904 = vsel %vm270, %v1753, 0
      %v1907 = vsel %vm270, %v1754, 0
      %1909 = vmatprep.subr.bf16.mxu0 0
      %1910 = vmatpush1.bf16.msra.mxu0 0
      %1911 = vmatprep.subr.bf16.mxu0 0
      %1912 = vmatpush1.bf16.msra.mxu0 0
      %1913 = vmatprep.subr.bf16.mxu0 0
      %1914 = vmatpush1.bf16.msra.mxu0 0
      %1915 = vmatprep.subr.bf16.mxu0 0
      %1916 = vmatpush1.bf16.msra.mxu0 0
      %1917 = vmatprep.subr.bf16.mxu0 0
      %1918 = vmatpush1.bf16.msra.mxu0 0
      %1919 = vmatprep.subr.bf16.mxu0 0
      %1920 = vmatpush1.bf16.msra.mxu0 0
      %1921 = vmatprep.subr.bf16.mxu0 0
      %1922 = vmatpush1.bf16.msra.mxu0 0
      %1923 = vmatprep.subr.bf16.mxu0 %v1904
      %1924 = vmatpush1.bf16.msra.mxu0 %v1901
      %1925 = vmatprep.subr.bf16.mxu0 0
      %1926 = vmatpush2.bf16.msra.mxu0 0
      %1927 = vmatprep.subr.bf16.mxu0 0
      %1928 = vmatpush2.bf16.msra.mxu0 0
      %1929 = vmatprep.subr.bf16.mxu0 0
      %1930 = vmatpush2.bf16.msra.mxu0 0
      %1931 = vmatprep.subr.bf16.mxu0 0
      %1932 = vmatpush2.bf16.msra.mxu0 0
      %1933 = vmatprep.subr.bf16.mxu0 0
      %1934 = vmatpush2.bf16.msra.mxu0 0
      %1935 = vmatprep.subr.bf16.mxu0 0
      %1936 = vmatpush2.bf16.msra.mxu0 0
      %1937 = vmatprep.subr.bf16.mxu0 0
      %1938 = vmatpush2.bf16.msra.mxu0 0
      %1939 = vmatprep.subr.bf16.mxu0 0
      %1940 = vmatpush2.bf16.msra.mxu0 0
      %1941 = vmatprep.mubr.bf16.mxu0 0
      %1942 = vmatmul.mubr.bf16.gmra.mxu0 %v1895
      %v1943 = vpop.f32.mrf.mxu0
      %v1944 = vadd.f32 %v1817, %v1943
      %v1945 = vpop.f32.mrf.mxu0
      %v1946 = vadd.f32 %v1819, %v1945
      %v1947 = vpop.f32.mrf.mxu0
      %v1948 = vadd.f32 %v1821, %v1947
      %v1949 = vpop.f32.mrf.mxu0
      %v1950 = vadd.f32 %v1823, %v1949
      %1951 = vmatprep.mubr.bf16.mxu0 0
      %1952 = vmatmul.mubr.bf16.gmra.mxu0 %v1898
      %v1953 = vpop.f32.mrf.mxu0
      %v1954 = vadd.f32 %v1827, %v1953
      %v1955 = vpop.f32.mrf.mxu0
      %v1956 = vadd.f32 %v1829, %v1955
      %v1957 = vpop.f32.mrf.mxu0
      %v1958 = vadd.f32 %v1831, %v1957
      %v1959 = vpop.f32.mrf.mxu0
      %v1960 = vadd.f32 %v1833, %v1959
      %1961 = vdwg.mxu0
      %1962 = vmatprep.subr.bf16.mxu0 0
      %1963 = vmatpush1.bf16.msra.mxu0 0
      %1964 = vmatprep.subr.bf16.mxu0 0
      %1965 = vmatpush1.bf16.msra.mxu0 0
      %1966 = vmatprep.subr.bf16.mxu0 0
      %1967 = vmatpush1.bf16.msra.mxu0 0
      %1968 = vmatprep.subr.bf16.mxu0 0
      %1969 = vmatpush1.bf16.msra.mxu0 0
      %1970 = vmatprep.subr.bf16.mxu0 0
      %1971 = vmatpush1.bf16.msra.mxu0 0
      %1972 = vmatprep.subr.bf16.mxu0 0
      %1973 = vmatpush1.bf16.msra.mxu0 0
      %1974 = vmatprep.subr.bf16.mxu0 0
      %1975 = vmatpush1.bf16.msra.mxu0 0
      %1976 = vmatprep.subr.bf16.mxu0 0
      %1977 = vmatpush1.bf16.msra.mxu0 %v1907
      %1978 = vmatprep.subr.bf16.mxu0 0
      %1979 = vmatpush2.bf16.msra.mxu0 0
      %1980 = vmatprep.subr.bf16.mxu0 0
      %1981 = vmatpush2.bf16.msra.mxu0 0
      %1982 = vmatprep.subr.bf16.mxu0 0
      %1983 = vmatpush2.bf16.msra.mxu0 0
      %1984 = vmatprep.subr.bf16.mxu0 0
      %1985 = vmatpush2.bf16.msra.mxu0 0
      %1986 = vmatprep.subr.bf16.mxu0 0
      %1987 = vmatpush2.bf16.msra.mxu0 0
      %1988 = vmatprep.subr.bf16.mxu0 0
      %1989 = vmatpush2.bf16.msra.mxu0 0
      %1990 = vmatprep.subr.bf16.mxu0 0
      %1991 = vmatpush2.bf16.msra.mxu0 0
      %1992 = vmatprep.subr.bf16.mxu0 0
      %1993 = vmatpush2.bf16.msra.mxu0 0
      %1994 = vmatprep.mubr.bf16.mxu0 0
      %1995 = vmatmul.mubr.bf16.gmra.mxu0 %v1895
      %v1996 = vpop.f32.mrf.mxu0
      %v1997 = vadd.f32 %v1870, %v1996
      %v1998 = vpop.f32.mrf.mxu0
      %v1999 = vpop.f32.mrf.mxu0
      %v2000 = vadd.f32 %v1873, %v1999
      %v2001 = vpop.f32.mrf.mxu0
      %2002 = vmatprep.mubr.bf16.mxu0 0
      %2003 = vmatmul.mubr.bf16.gmra.mxu0 %v1898
      %v2004 = vpop.f32.mrf.mxu0
      %v2005 = vadd.f32 %v1878, %v2004
      %v2006 = vpop.f32.mrf.mxu0
      %v2007 = vpop.f32.mrf.mxu0
      %v2008 = vadd.f32 %v1881, %v2007
      %v2009 = vpop.f32.mrf.mxu0
      %2010 = vdwg.mxu0
      %v2011 = vld [vmem:[%s509] sm:$0xf]
      %v2012 = vld [vmem:[%s509 + $0x4] sm:$0xf]
      %v2013 = vld [vmem:[%s509 + $0x8] sm:$0xf]
      %v2014 = vld [vmem:[%s509 + $0xc] sm:$0xf]
      %v2019 = vunpack.c.l.b16 %v2011
      %v2020 = vunpack.c.l.b16 %v2012
      %v2021 = vunpack.c.l.b16 %v2013
      %v2022 = vunpack.c.l.b16 %v2014
      %v2023 = vpack.c.b16 %v2020, %v2019
      %v2024 = vpack.c.b16 %v2022, %v2021
      %2025 = vrot.lane.b32.xlu0 %v1752, 111
      %v2026 = vpop.permute.xlu0 %2025
      %2027 = vrot.lane.b32.xlu0 %v1753, 111
      %v2028 = vpop.permute.xlu0 %2027
      %2029 = vrot.lane.b32.xlu0 %v1754, 111
      %v2030 = vpop.permute.xlu0 %2029
      %2031 = vrot.lane.b32.xlu0 %v1755, 111
      %v2032 = vpop.permute.xlu0 %2031
      %v2033 = vsel %vm532, %v2026, %v2028
      %v2034 = vsel %vm532, %v2028, %v2030
      %v2035 = vsel %vm532, %v2030, %v2032
      %v2037 = vsel %vm263, %v2023, 0
      %v2040 = vsel %vm263, %v2024, 0
      %v2043 = vsel %vm270, %v2033, 0
      %v2046 = vsel %vm270, %v2034, 0
      %v2049 = vsel %vm270, %v2035, 0
      %2051 = vmatprep.subr.bf16.mxu0 0
      %2052 = vmatpush1.bf16.msra.mxu0 0
      %2053 = vmatprep.subr.bf16.mxu0 0
      %2054 = vmatpush1.bf16.msra.mxu0 0
      %2055 = vmatprep.subr.bf16.mxu0 0
      %2056 = vmatpush1.bf16.msra.mxu0 0
      %2057 = vmatprep.subr.bf16.mxu0 0
      %2058 = vmatpush1.bf16.msra.mxu0 0
      %2059 = vmatprep.subr.bf16.mxu0 0
      %2060 = vmatpush1.bf16.msra.mxu0 0
      %2061 = vmatprep.subr.bf16.mxu0 0
      %2062 = vmatpush1.bf16.msra.mxu0 0
      %2063 = vmatprep.subr.bf16.mxu0 0
      %2064 = vmatpush1.bf16.msra.mxu0 0
      %2065 = vmatprep.subr.bf16.mxu0 %v2046
      %2066 = vmatpush1.bf16.msra.mxu0 %v2043
      %2067 = vmatprep.subr.bf16.mxu0 0
      %2068 = vmatpush2.bf16.msra.mxu0 0
      %2069 = vmatprep.subr.bf16.mxu0 0
      %2070 = vmatpush2.bf16.msra.mxu0 0
      %2071 = vmatprep.subr.bf16.mxu0 0
      %2072 = vmatpush2.bf16.msra.mxu0 0
      %2073 = vmatprep.subr.bf16.mxu0 0
      %2074 = vmatpush2.bf16.msra.mxu0 0
      %2075 = vmatprep.subr.bf16.mxu0 0
      %2076 = vmatpush2.bf16.msra.mxu0 0
      %2077 = vmatprep.subr.bf16.mxu0 0
      %2078 = vmatpush2.bf16.msra.mxu0 0
      %2079 = vmatprep.subr.bf16.mxu0 0
      %2080 = vmatpush2.bf16.msra.mxu0 0
      %2081 = vmatprep.subr.bf16.mxu0 0
      %2082 = vmatpush2.bf16.msra.mxu0 0
      %2083 = vmatprep.mubr.bf16.mxu0 0
      %2084 = vmatmul.mubr.bf16.gmra.mxu0 %v2037
      %v2085 = vpop.f32.mrf.mxu0
      %v2086 = vadd.f32 0.0, %v2085
      %v2087 = vpop.f32.mrf.mxu0
      %v2088 = vadd.f32 0.0, %v2087
      %v2089 = vpop.f32.mrf.mxu0
      %v2090 = vadd.f32 0.0, %v2089
      %v2091 = vpop.f32.mrf.mxu0
      %v2092 = vadd.f32 0.0, %v2091
      %2093 = vmatprep.mubr.bf16.mxu0 0
      %2094 = vmatmul.mubr.bf16.gmra.mxu0 %v2040
      %v2095 = vpop.f32.mrf.mxu0
      %v2096 = vadd.f32 0.0, %v2095
      %v2097 = vpop.f32.mrf.mxu0
      %v2098 = vadd.f32 0.0, %v2097
      %v2099 = vpop.f32.mrf.mxu0
      %v2100 = vadd.f32 0.0, %v2099
      %v2101 = vpop.f32.mrf.mxu0
      %v2102 = vadd.f32 0.0, %v2101
      %2103 = vdwg.mxu0
      %2104 = vmatprep.subr.bf16.mxu0 0
      %2105 = vmatpush1.bf16.msra.mxu0 0
      %2106 = vmatprep.subr.bf16.mxu0 0
      %2107 = vmatpush1.bf16.msra.mxu0 0
      %2108 = vmatprep.subr.bf16.mxu0 0
      %2109 = vmatpush1.bf16.msra.mxu0 0
      %2110 = vmatprep.subr.bf16.mxu0 0
      %2111 = vmatpush1.bf16.msra.mxu0 0
      %2112 = vmatprep.subr.bf16.mxu0 0
      %2113 = vmatpush1.bf16.msra.mxu0 0
      %2114 = vmatprep.subr.bf16.mxu0 0
      %2115 = vmatpush1.bf16.msra.mxu0 0
      %2116 = vmatprep.subr.bf16.mxu0 0
      %2117 = vmatpush1.bf16.msra.mxu0 0
      %2118 = vmatprep.subr.bf16.mxu0 0
      %2119 = vmatpush1.bf16.msra.mxu0 %v2049
      %2120 = vmatprep.subr.bf16.mxu0 0
      %2121 = vmatpush2.bf16.msra.mxu0 0
      %2122 = vmatprep.subr.bf16.mxu0 0
      %2123 = vmatpush2.bf16.msra.mxu0 0
      %2124 = vmatprep.subr.bf16.mxu0 0
      %2125 = vmatpush2.bf16.msra.mxu0 0
      %2126 = vmatprep.subr.bf16.mxu0 0
      %2127 = vmatpush2.bf16.msra.mxu0 0
      %2128 = vmatprep.subr.bf16.mxu0 0
      %2129 = vmatpush2.bf16.msra.mxu0 0
      %2130 = vmatprep.subr.bf16.mxu0 0
      %2131 = vmatpush2.bf16.msra.mxu0 0
      %2132 = vmatprep.subr.bf16.mxu0 0
      %2133 = vmatpush2.bf16.msra.mxu0 0
      %2134 = vmatprep.subr.bf16.mxu0 0
      %2135 = vmatpush2.bf16.msra.mxu0 0
      %2136 = vmatprep.mubr.bf16.mxu0 0
      %2137 = vmatmul.mubr.bf16.gmra.mxu0 %v2037
      %v2138 = vpop.f32.mrf.mxu0
      %v2139 = vadd.f32 0.0, %v2138
      %v2140 = vpop.f32.mrf.mxu0
      %v2141 = vpop.f32.mrf.mxu0
      %v2142 = vadd.f32 0.0, %v2141
      %v2143 = vpop.f32.mrf.mxu0
      %2144 = vmatprep.mubr.bf16.mxu0 0
      %2145 = vmatmul.mubr.bf16.gmra.mxu0 %v2040
      %v2146 = vpop.f32.mrf.mxu0
      %v2147 = vadd.f32 0.0, %v2146
      %v2148 = vpop.f32.mrf.mxu0
      %v2149 = vpop.f32.mrf.mxu0
      %v2150 = vadd.f32 0.0, %v2149
      %v2151 = vpop.f32.mrf.mxu0
      %2152 = vdwg.mxu0
      %v2153 = vadd.f32 %v1944, %v2086
      %v2154 = vadd.f32 %v1946, %v2088
      %v2155 = vadd.f32 %v1997, %v2139
      %v2156 = vadd.f32 %v1948, %v2090
      %v2157 = vadd.f32 %v1950, %v2092
      %v2158 = vadd.f32 %v2000, %v2142
      %v2159 = vadd.f32 %v1954, %v2096
      %v2160 = vadd.f32 %v1956, %v2098
      %v2161 = vadd.f32 %v2005, %v2147
      %v2162 = vadd.f32 %v1958, %v2100
      %v2163 = vadd.f32 %v1960, %v2102
      %v2164 = vadd.f32 %v2008, %v2150
      %v2165 = vld [vmem:[%s665] sm:$0xf]
      %v2166 = vld [vmem:[%s665 + $0x4] sm:$0xf]
      %v2167 = vld [vmem:[%s665 + $0x8] sm:$0xf]
      %v2168 = vld [vmem:[%s665 + $0xc] sm:$0xf]
      %v2173 = vunpack.c.l.b16 %v2165
      %v2174 = vunpack.c.l.b16 %v2166
      %v2175 = vunpack.c.l.b16 %v2167
      %v2176 = vunpack.c.l.b16 %v2168
      %v2177 = vpack.c.b16 %v2174, %v2173
      %v2178 = vpack.c.b16 %v2176, %v2175
      %2179 = vrot.lane.b32.xlu0 %v1752, 110
      %v2180 = vpop.permute.xlu0 %2179
      %2181 = vrot.lane.b32.xlu0 %v1753, 110
      %v2182 = vpop.permute.xlu0 %2181
      %2183 = vrot.lane.b32.xlu0 %v1754, 110
      %v2184 = vpop.permute.xlu0 %2183
      %2185 = vrot.lane.b32.xlu0 %v1755, 110
      %v2186 = vpop.permute.xlu0 %2185
      %v2187 = vsel %vm688, %v2180, %v2182
      %v2188 = vsel %vm688, %v2182, %v2184
      %v2189 = vsel %vm688, %v2184, %v2186
      %v2191 = vsel %vm263, %v2177, 0
      %v2194 = vsel %vm263, %v2178, 0
      %v2197 = vsel %vm270, %v2187, 0
      %v2200 = vsel %vm270, %v2188, 0
      %v2203 = vsel %vm270, %v2189, 0
      %2205 = vmatprep.subr.bf16.mxu0 0
      %2206 = vmatpush1.bf16.msra.mxu0 0
      %2207 = vmatprep.subr.bf16.mxu0 0
      %2208 = vmatpush1.bf16.msra.mxu0 0
      %2209 = vmatprep.subr.bf16.mxu0 0
      %2210 = vmatpush1.bf16.msra.mxu0 0
      %2211 = vmatprep.subr.bf16.mxu0 0
      %2212 = vmatpush1.bf16.msra.mxu0 0
      %2213 = vmatprep.subr.bf16.mxu0 0
      %2214 = vmatpush1.bf16.msra.mxu0 0
      %2215 = vmatprep.subr.bf16.mxu0 0
      %2216 = vmatpush1.bf16.msra.mxu0 0
      %2217 = vmatprep.subr.bf16.mxu0 0
      %2218 = vmatpush1.bf16.msra.mxu0 0
      %2219 = vmatprep.subr.bf16.mxu0 %v2200
      %2220 = vmatpush1.bf16.msra.mxu0 %v2197
      %2221 = vmatprep.subr.bf16.mxu0 0
      %2222 = vmatpush2.bf16.msra.mxu0 0
      %2223 = vmatprep.subr.bf16.mxu0 0
      %2224 = vmatpush2.bf16.msra.mxu0 0
      %2225 = vmatprep.subr.bf16.mxu0 0
      %2226 = vmatpush2.bf16.msra.mxu0 0
      %2227 = vmatprep.subr.bf16.mxu0 0
      %2228 = vmatpush2.bf16.msra.mxu0 0
      %2229 = vmatprep.subr.bf16.mxu0 0
      %2230 = vmatpush2.bf16.msra.mxu0 0
      %2231 = vmatprep.subr.bf16.mxu0 0
      %2232 = vmatpush2.bf16.msra.mxu0 0
      %2233 = vmatprep.subr.bf16.mxu0 0
      %2234 = vmatpush2.bf16.msra.mxu0 0
      %2235 = vmatprep.subr.bf16.mxu0 0
      %2236 = vmatpush2.bf16.msra.mxu0 0
      %2237 = vmatprep.mubr.bf16.mxu0 0
      %2238 = vmatmul.mubr.bf16.gmra.mxu0 %v2191
      %v2239 = vpop.f32.mrf.mxu0
      %v2240 = vadd.f32 0.0, %v2239
      %v2241 = vpop.f32.mrf.mxu0
      %v2242 = vadd.f32 0.0, %v2241
      %v2243 = vpop.f32.mrf.mxu0
      %v2244 = vadd.f32 0.0, %v2243
      %v2245 = vpop.f32.mrf.mxu0
      %v2246 = vadd.f32 0.0, %v2245
      %2247 = vmatprep.mubr.bf16.mxu0 0
      %2248 = vmatmul.mubr.bf16.gmra.mxu0 %v2194
      %v2249 = vpop.f32.mrf.mxu0
      %v2250 = vadd.f32 0.0, %v2249
      %v2251 = vpop.f32.mrf.mxu0
      %v2252 = vadd.f32 0.0, %v2251
      %v2253 = vpop.f32.mrf.mxu0
      %v2254 = vadd.f32 0.0, %v2253
      %v2255 = vpop.f32.mrf.mxu0
      %v2256 = vadd.f32 0.0, %v2255
      %2257 = vdwg.mxu0
      %2258 = vmatprep.subr.bf16.mxu0 0
      %2259 = vmatpush1.bf16.msra.mxu0 0
      %2260 = vmatprep.subr.bf16.mxu0 0
      %2261 = vmatpush1.bf16.msra.mxu0 0
      %2262 = vmatprep.subr.bf16.mxu0 0
      %2263 = vmatpush1.bf16.msra.mxu0 0
      %2264 = vmatprep.subr.bf16.mxu0 0
      %2265 = vmatpush1.bf16.msra.mxu0 0
      %2266 = vmatprep.subr.bf16.mxu0 0
      %2267 = vmatpush1.bf16.msra.mxu0 0
      %2268 = vmatprep.subr.bf16.mxu0 0
      %2269 = vmatpush1.bf16.msra.mxu0 0
      %2270 = vmatprep.subr.bf16.mxu0 0
      %2271 = vmatpush1.bf16.msra.mxu0 0
      %2272 = vmatprep.subr.bf16.mxu0 0
      %2273 = vmatpush1.bf16.msra.mxu0 %v2203
      %2274 = vmatprep.subr.bf16.mxu0 0
      %2275 = vmatpush2.bf16.msra.mxu0 0
      %2276 = vmatprep.subr.bf16.mxu0 0
      %2277 = vmatpush2.bf16.msra.mxu0 0
      %2278 = vmatprep.subr.bf16.mxu0 0
      %2279 = vmatpush2.bf16.msra.mxu0 0
      %2280 = vmatprep.subr.bf16.mxu0 0
      %2281 = vmatpush2.bf16.msra.mxu0 0
      %2282 = vmatprep.subr.bf16.mxu0 0
      %2283 = vmatpush2.bf16.msra.mxu0 0
      %2284 = vmatprep.subr.bf16.mxu0 0
      %2285 = vmatpush2.bf16.msra.mxu0 0
      %2286 = vmatprep.subr.bf16.mxu0 0
      %2287 = vmatpush2.bf16.msra.mxu0 0
      %2288 = vmatprep.subr.bf16.mxu0 0
      %2289 = vmatpush2.bf16.msra.mxu0 0
      %2290 = vmatprep.mubr.bf16.mxu0 0
      %2291 = vmatmul.mubr.bf16.gmra.mxu0 %v2191
      %v2292 = vpop.f32.mrf.mxu0
      %v2293 = vadd.f32 0.0, %v2292
      %v2294 = vpop.f32.mrf.mxu0
      %v2295 = vpop.f32.mrf.mxu0
      %v2296 = vadd.f32 0.0, %v2295
      %v2297 = vpop.f32.mrf.mxu0
      %2298 = vmatprep.mubr.bf16.mxu0 0
      %2299 = vmatmul.mubr.bf16.gmra.mxu0 %v2194
      %v2300 = vpop.f32.mrf.mxu0
      %v2301 = vadd.f32 0.0, %v2300
      %v2302 = vpop.f32.mrf.mxu0
      %v2303 = vpop.f32.mrf.mxu0
      %v2304 = vadd.f32 0.0, %v2303
      %v2305 = vpop.f32.mrf.mxu0
      %2306 = vdwg.mxu0
      %v2307 = vadd.f32 %v2153, %v2240
      %v2308 = vadd.f32 %v2154, %v2242
      %v2309 = vadd.f32 %v2155, %v2293
      %v2310 = vadd.f32 %v2156, %v2244
      %v2311 = vadd.f32 %v2157, %v2246
      %v2312 = vadd.f32 %v2158, %v2296
      %v2313 = vadd.f32 %v2159, %v2250
      %v2314 = vadd.f32 %v2160, %v2252
      %v2315 = vadd.f32 %v2161, %v2301
      %v2316 = vadd.f32 %v2162, %v2254
      %v2317 = vadd.f32 %v2163, %v2256
      %v2318 = vadd.f32 %v2164, %v2304
      %v2319 = vadd.f32 %v2307, %v824
      %v2320 = vadd.f32 %v2308, %v824
      %v2321 = vadd.f32 %v2309, %v824
      %v2322 = vadd.f32 %v2310, %v829
      %v2323 = vadd.f32 %v2311, %v829
      %v2324 = vadd.f32 %v2312, %v829
      %v2325 = vadd.f32 %v2313, %v834
      %v2326 = vadd.f32 %v2314, %v834
      %v2327 = vadd.f32 %v2315, %v834
      %v2328 = vadd.f32 %v2316, %v839
      %v2329 = vadd.f32 %v2317, %v839
      %v2330 = vadd.f32 %v2318, %v839
      %v2331 = vxor.u32 %v2319, 2147483648
      %v2332 = vxor.u32 %v2320, 2147483648
      %v2333 = vxor.u32 %v2321, 2147483648
      %v2334 = vxor.u32 %v2322, 2147483648
      %v2335 = vxor.u32 %v2323, 2147483648
      %v2336 = vxor.u32 %v2324, 2147483648
      %v2337 = vxor.u32 %v2325, 2147483648
      %v2338 = vxor.u32 %v2326, 2147483648
      %v2339 = vxor.u32 %v2327, 2147483648
      %v2340 = vxor.u32 %v2328, 2147483648
      %v2341 = vxor.u32 %v2329, 2147483648
      %v2342 = vxor.u32 %v2330, 2147483648
      %v2343 = vmul.f32 %v2331, 1.442695
      %v2344 = vpow.pop %v2343
      %v2345 = vmul.f32 %v2332, 1.442695
      %v2346 = vpow.pop %v2345
      %v2347 = vmul.f32 %v2333, 1.442695
      %v2348 = vpow.pop %v2347
      %v2349 = vmul.f32 %v2334, 1.442695
      %v2350 = vpow.pop %v2349
      %v2351 = vmul.f32 %v2335, 1.442695
      %v2352 = vpow.pop %v2351
      %v2353 = vmul.f32 %v2336, 1.442695
      %v2354 = vpow.pop %v2353
      %v2355 = vmul.f32 %v2337, 1.442695
      %v2356 = vpow.pop %v2355
      %v2357 = vmul.f32 %v2338, 1.442695
      %v2358 = vpow.pop %v2357
      %v2359 = vmul.f32 %v2339, 1.442695
      %v2360 = vpow.pop %v2359
      %v2361 = vmul.f32 %v2340, 1.442695
      %v2362 = vpow.pop %v2361
      %v2363 = vmul.f32 %v2341, 1.442695
      %v2364 = vpow.pop %v2363
      %v2365 = vmul.f32 %v2342, 1.442695
      %v2366 = vpow.pop %v2365
      %v2367 = vadd.f32 %v2344, 1.0
      %v2368 = vadd.f32 %v2346, 1.0
      %v2369 = vadd.f32 %v2348, 1.0
      %v2370 = vadd.f32 %v2350, 1.0
      %v2371 = vadd.f32 %v2352, 1.0
      %v2372 = vadd.f32 %v2354, 1.0
      %v2373 = vadd.f32 %v2356, 1.0
      %v2374 = vadd.f32 %v2358, 1.0
      %v2375 = vadd.f32 %v2360, 1.0
      %v2376 = vadd.f32 %v2362, 1.0
      %v2377 = vadd.f32 %v2364, 1.0
      %v2378 = vadd.f32 %v2366, 1.0
      %v2379 = vrcp.pop %v2367
      %v2380 = vmul.f32 1.0, %v2379
      %v2381 = vrcp.pop %v2368
      %v2382 = vmul.f32 1.0, %v2381
      %v2383 = vrcp.pop %v2369
      %v2384 = vmul.f32 1.0, %v2383
      %v2385 = vrcp.pop %v2370
      %v2386 = vmul.f32 1.0, %v2385
      %v2387 = vrcp.pop %v2371
      %v2388 = vmul.f32 1.0, %v2387
      %v2389 = vrcp.pop %v2372
      %v2390 = vmul.f32 1.0, %v2389
      %v2391 = vrcp.pop %v2373
      %v2392 = vmul.f32 1.0, %v2391
      %v2393 = vrcp.pop %v2374
      %v2394 = vmul.f32 1.0, %v2393
      %v2395 = vrcp.pop %v2375
      %v2396 = vmul.f32 1.0, %v2395
      %v2397 = vrcp.pop %v2376
      %v2398 = vmul.f32 1.0, %v2397
      %v2399 = vrcp.pop %v2377
      %v2400 = vmul.f32 1.0, %v2399
      %v2401 = vrcp.pop %v2378
      %v2402 = vmul.f32 1.0, %v2401
      %v2403 = vmul.f32 %v2319, %v2380
      %v2404 = vmul.f32 %v2320, %v2382
      %v2405 = vmul.f32 %v2321, %v2384
      %v2406 = vmul.f32 %v2322, %v2386
      %v2407 = vmul.f32 %v2323, %v2388
      %v2408 = vmul.f32 %v2324, %v2390
      %v2409 = vmul.f32 %v2325, %v2392
      %v2410 = vmul.f32 %v2326, %v2394
      %v2411 = vmul.f32 %v2327, %v2396
      %v2412 = vmul.f32 %v2328, %v2398
      %v2413 = vmul.f32 %v2329, %v2400
      %v2414 = vmul.f32 %v2330, %v2402
      %v2415 = vmul.f32 %v2403, %v941
      %v2416 = vmul.f32 %v2404, %v945
      %v2417 = vmul.f32 %v2405, %v949
      %v2418 = vmul.f32 %v2406, %v941
      %v2419 = vmul.f32 %v2407, %v945
      %v2420 = vmul.f32 %v2408, %v949
      %v2421 = vmul.f32 %v2409, %v941
      %v2422 = vmul.f32 %v2410, %v945
      %v2423 = vmul.f32 %v2411, %v949
      %v2424 = vmul.f32 %v2412, %v941
      %v2425 = vmul.f32 %v2413, %v945
      %v2426 = vmul.f32 %v2414, %v949
      %v2427 = vadd.f32 %v2415, %v2416
      %v2428 = vadd.f32 %v2427, %v2417
      %2429 = vadd.xlane.f32.xlu0 %v2428
      %v2430 = vpop.xlane.xlu0 %2429
      %v2431 = vadd.f32 %v2418, %v2419
      %v2432 = vadd.f32 %v2431, %v2420
      %2433 = vadd.xlane.f32.xlu0 %v2432
      %v2434 = vpop.xlane.xlu0 %2433
      %v2435 = vadd.f32 %v2421, %v2422
      %v2436 = vadd.f32 %v2435, %v2423
      %2437 = vadd.xlane.f32.xlu0 %v2436
      %v2438 = vpop.xlane.xlu0 %2437
      %v2439 = vadd.f32 %v2424, %v2425
      %v2440 = vadd.f32 %v2439, %v2426
      %2441 = vadd.xlane.f32.xlu0 %v2440
      %v2442 = vpop.xlane.xlu0 %2441
      %s2443 = scalar_lea.vmem %s204, 64
      %2444 = vst.msk [vmem:[%s2443] sm:$0xff] %vm981, %v2430
      %2445 = vst.msk [vmem:[%s2443 + $0x8] sm:$0xff] %vm981, %v2434
      %2446 = vst.msk [vmem:[%s2443 + $0x10] sm:$0xff] %vm981, %v2438
      %2447 = vst.msk [vmem:[%s2443 + $0x18] sm:$0xff] %vm981, %v2442
      %s2448 = scalar_lea.vmem %s197, 96
      %v2449 = vld [vmem:[%s2448] sm:$0xff]
      %v2450 = vld [vmem:[%s2448 + $0x8] sm:$0xff]
      %v2451 = vld [vmem:[%s2448 + $0x10] sm:$0x33]
      %v2452 = vld [vmem:[%s2448 + $0x18] sm:$0x33]
      %v2453 = vld [vmem:[%s1] sm:$0xf]
      %v2454 = vld [vmem:[%s1 + $0x4] sm:$0xf]
      %v2455 = vld [vmem:[%s1 + $0x8] sm:$0xf]
      %v2456 = vld [vmem:[%s1 + $0xc] sm:$0xf]
      %v2457 = vld [vmem:[%s220] sm:$0xf]
      %v2458 = vld [vmem:[%s220 + $0x4] sm:$0xf]
      %v2459 = vld [vmem:[%s220 + $0x8] sm:$0xf]
      %v2460 = vld [vmem:[%s220 + $0xc] sm:$0xf]
      %v2465 = vunpack.c.l.b16 %v2457
      %v2466 = vunpack.c.l.b16 %v2458
      %v2467 = vunpack.c.l.b16 %v2459
      %v2468 = vunpack.c.l.b16 %v2460
      %v2469 = vpack.c.b16 %v2466, %v2465
      %v2470 = vpack.c.b16 %v2468, %v2467
      %v2475 = vunpack.c.l.b16 %v2449
      %v2476 = vunpack.c.h.b16 %v2449
      %v2477 = vunpack.c.l.b16 %v2450
      %v2478 = vunpack.c.h.b16 %v2450
      %v2479 = vunpack.c.l.b16 %v2451
      %v2480 = vunpack.c.h.b16 %v2451
      %v2481 = vunpack.c.l.b16 %v2452
      %v2482 = vunpack.c.h.b16 %v2452
      %v2483 = vpack.c.b16 %v2479, %v2475
      %v2484 = vpack.c.b16 %v2480, %v2476
      %v2485 = vpack.c.b16 %v2481, %v2477
      %v2486 = vpack.c.b16 %v2482, %v2478
      %2487 = vrot.lane.b32.xlu0 %v2483, 127
      %v2488 = vpop.permute.xlu0 %2487
      %2489 = vrot.lane.b32.xlu0 %v2484, 127
      %v2490 = vpop.permute.xlu0 %2489
      %2491 = vrot.lane.b32.xlu0 %v2485, 127
      %v2492 = vpop.permute.xlu0 %2491
      %2493 = vrot.lane.b32.xlu0 %v2486, 127
      %v2494 = vpop.permute.xlu0 %2493
      %v2495 = vsel %vm259, %v2488, %v2490
      %v2496 = vsel %vm259, %v2490, %v2492
      %v2497 = vsel %vm259, %v2492, %v2494
      %v2499 = vsel %vm263, %v2469, 0
      %v2502 = vsel %vm263, %v2470, 0
      %v2505 = vsel %vm270, %v2495, 0
      %v2508 = vsel %vm270, %v2496, 0
      %v2511 = vsel %vm270, %v2497, 0
      %2513 = vmatprep.subr.bf16.mxu0 0
      %2514 = vmatpush1.bf16.msra.mxu0 0
      %2515 = vmatprep.subr.bf16.mxu0 0
      %2516 = vmatpush1.bf16.msra.mxu0 0
      %2517 = vmatprep.subr.bf16.mxu0 0
      %2518 = vmatpush1.bf16.msra.mxu0 0
      %2519 = vmatprep.subr.bf16.mxu0 0
      %2520 = vmatpush1.bf16.msra.mxu0 0
      %2521 = vmatprep.subr.bf16.mxu0 0
      %2522 = vmatpush1.bf16.msra.mxu0 0
      %2523 = vmatprep.subr.bf16.mxu0 0
      %2524 = vmatpush1.bf16.msra.mxu0 0
      %2525 = vmatprep.subr.bf16.mxu0 0
      %2526 = vmatpush1.bf16.msra.mxu0 0
      %2527 = vmatprep.subr.bf16.mxu0 %v2508
      %2528 = vmatpush1.bf16.msra.mxu0 %v2505
      %2529 = vmatprep.subr.bf16.mxu0 0
      %2530 = vmatpush2.bf16.msra.mxu0 0
      %2531 = vmatprep.subr.bf16.mxu0 0
      %2532 = vmatpush2.bf16.msra.mxu0 0
      %2533 = vmatprep.subr.bf16.mxu0 0
      %2534 = vmatpush2.bf16.msra.mxu0 0
      %2535 = vmatprep.subr.bf16.mxu0 0
      %2536 = vmatpush2.bf16.msra.mxu0 0
      %2537 = vmatprep.subr.bf16.mxu0 0
      %2538 = vmatpush2.bf16.msra.mxu0 0
      %2539 = vmatprep.subr.bf16.mxu0 0
      %2540 = vmatpush2.bf16.msra.mxu0 0
      %2541 = vmatprep.subr.bf16.mxu0 0
      %2542 = vmatpush2.bf16.msra.mxu0 0
      %2543 = vmatprep.subr.bf16.mxu0 0
      %2544 = vmatpush2.bf16.msra.mxu0 0
      %2545 = vmatprep.mubr.bf16.mxu0 0
      %2546 = vmatmul.mubr.bf16.gmra.mxu0 %v2499
      %v2547 = vpop.f32.mrf.mxu0
      %v2548 = vadd.f32 0.0, %v2547
      %v2549 = vpop.f32.mrf.mxu0
      %v2550 = vadd.f32 0.0, %v2549
      %v2551 = vpop.f32.mrf.mxu0
      %v2552 = vadd.f32 0.0, %v2551
      %v2553 = vpop.f32.mrf.mxu0
      %v2554 = vadd.f32 0.0, %v2553
      %2555 = vmatprep.mubr.bf16.mxu0 0
      %2556 = vmatmul.mubr.bf16.gmra.mxu0 %v2502
      %v2557 = vpop.f32.mrf.mxu0
      %v2558 = vadd.f32 0.0, %v2557
      %v2559 = vpop.f32.mrf.mxu0
      %v2560 = vadd.f32 0.0, %v2559
      %v2561 = vpop.f32.mrf.mxu0
      %v2562 = vadd.f32 0.0, %v2561
      %v2563 = vpop.f32.mrf.mxu0
      %v2564 = vadd.f32 0.0, %v2563
      %2565 = vdwg.mxu0
      %2566 = vmatprep.subr.bf16.mxu0 0
      %2567 = vmatpush1.bf16.msra.mxu0 0
      %2568 = vmatprep.subr.bf16.mxu0 0
      %2569 = vmatpush1.bf16.msra.mxu0 0
      %2570 = vmatprep.subr.bf16.mxu0 0
      %2571 = vmatpush1.bf16.msra.mxu0 0
      %2572 = vmatprep.subr.bf16.mxu0 0
      %2573 = vmatpush1.bf16.msra.mxu0 0
      %2574 = vmatprep.subr.bf16.mxu0 0
      %2575 = vmatpush1.bf16.msra.mxu0 0
      %2576 = vmatprep.subr.bf16.mxu0 0
      %2577 = vmatpush1.bf16.msra.mxu0 0
      %2578 = vmatprep.subr.bf16.mxu0 0
      %2579 = vmatpush1.bf16.msra.mxu0 0
      %2580 = vmatprep.subr.bf16.mxu0 0
      %2581 = vmatpush1.bf16.msra.mxu0 %v2511
      %2582 = vmatprep.subr.bf16.mxu0 0
      %2583 = vmatpush2.bf16.msra.mxu0 0
      %2584 = vmatprep.subr.bf16.mxu0 0
      %2585 = vmatpush2.bf16.msra.mxu0 0
      %2586 = vmatprep.subr.bf16.mxu0 0
      %2587 = vmatpush2.bf16.msra.mxu0 0
      %2588 = vmatprep.subr.bf16.mxu0 0
      %2589 = vmatpush2.bf16.msra.mxu0 0
      %2590 = vmatprep.subr.bf16.mxu0 0
      %2591 = vmatpush2.bf16.msra.mxu0 0
      %2592 = vmatprep.subr.bf16.mxu0 0
      %2593 = vmatpush2.bf16.msra.mxu0 0
      %2594 = vmatprep.subr.bf16.mxu0 0
      %2595 = vmatpush2.bf16.msra.mxu0 0
      %2596 = vmatprep.subr.bf16.mxu0 0
      %2597 = vmatpush2.bf16.msra.mxu0 0
      %2598 = vmatprep.mubr.bf16.mxu0 0
      %2599 = vmatmul.mubr.bf16.gmra.mxu0 %v2499
      %v2600 = vpop.f32.mrf.mxu0
      %v2601 = vadd.f32 0.0, %v2600
      %v2602 = vpop.f32.mrf.mxu0
      %v2603 = vpop.f32.mrf.mxu0
      %v2604 = vadd.f32 0.0, %v2603
      %v2605 = vpop.f32.mrf.mxu0
      %2606 = vmatprep.mubr.bf16.mxu0 0
      %2607 = vmatmul.mubr.bf16.gmra.mxu0 %v2502
      %v2608 = vpop.f32.mrf.mxu0
      %v2609 = vadd.f32 0.0, %v2608
      %v2610 = vpop.f32.mrf.mxu0
      %v2611 = vpop.f32.mrf.mxu0
      %v2612 = vadd.f32 0.0, %v2611
      %v2613 = vpop.f32.mrf.mxu0
      %2614 = vdwg.mxu0
      %v2619 = vunpack.c.l.b16 %v2453
      %v2620 = vunpack.c.l.b16 %v2454
      %v2621 = vunpack.c.l.b16 %v2455
      %v2622 = vunpack.c.l.b16 %v2456
      %v2623 = vpack.c.b16 %v2620, %v2619
      %v2624 = vpack.c.b16 %v2622, %v2621
      %v2626 = vsel %vm263, %v2623, 0
      %v2629 = vsel %vm263, %v2624, 0
      %v2632 = vsel %vm270, %v2483, 0
      %v2635 = vsel %vm270, %v2484, 0
      %v2638 = vsel %vm270, %v2485, 0
      %2640 = vmatprep.subr.bf16.mxu0 0
      %2641 = vmatpush1.bf16.msra.mxu0 0
      %2642 = vmatprep.subr.bf16.mxu0 0
      %2643 = vmatpush1.bf16.msra.mxu0 0
      %2644 = vmatprep.subr.bf16.mxu0 0
      %2645 = vmatpush1.bf16.msra.mxu0 0
      %2646 = vmatprep.subr.bf16.mxu0 0
      %2647 = vmatpush1.bf16.msra.mxu0 0
      %2648 = vmatprep.subr.bf16.mxu0 0
      %2649 = vmatpush1.bf16.msra.mxu0 0
      %2650 = vmatprep.subr.bf16.mxu0 0
      %2651 = vmatpush1.bf16.msra.mxu0 0
      %2652 = vmatprep.subr.bf16.mxu0 0
      %2653 = vmatpush1.bf16.msra.mxu0 0
      %2654 = vmatprep.subr.bf16.mxu0 %v2635
      %2655 = vmatpush1.bf16.msra.mxu0 %v2632
      %2656 = vmatprep.subr.bf16.mxu0 0
      %2657 = vmatpush2.bf16.msra.mxu0 0
      %2658 = vmatprep.subr.bf16.mxu0 0
      %2659 = vmatpush2.bf16.msra.mxu0 0
      %2660 = vmatprep.subr.bf16.mxu0 0
      %2661 = vmatpush2.bf16.msra.mxu0 0
      %2662 = vmatprep.subr.bf16.mxu0 0
      %2663 = vmatpush2.bf16.msra.mxu0 0
      %2664 = vmatprep.subr.bf16.mxu0 0
      %2665 = vmatpush2.bf16.msra.mxu0 0
      %2666 = vmatprep.subr.bf16.mxu0 0
      %2667 = vmatpush2.bf16.msra.mxu0 0
      %2668 = vmatprep.subr.bf16.mxu0 0
      %2669 = vmatpush2.bf16.msra.mxu0 0
      %2670 = vmatprep.subr.bf16.mxu0 0
      %2671 = vmatpush2.bf16.msra.mxu0 0
      %2672 = vmatprep.mubr.bf16.mxu0 0
      %2673 = vmatmul.mubr.bf16.gmra.mxu0 %v2626
      %v2674 = vpop.f32.mrf.mxu0
      %v2675 = vadd.f32 %v2548, %v2674
      %v2676 = vpop.f32.mrf.mxu0
      %v2677 = vadd.f32 %v2550, %v2676
      %v2678 = vpop.f32.mrf.mxu0
      %v2679 = vadd.f32 %v2552, %v2678
      %v2680 = vpop.f32.mrf.mxu0
      %v2681 = vadd.f32 %v2554, %v2680
      %2682 = vmatprep.mubr.bf16.mxu0 0
      %2683 = vmatmul.mubr.bf16.gmra.mxu0 %v2629
      %v2684 = vpop.f32.mrf.mxu0
      %v2685 = vadd.f32 %v2558, %v2684
      %v2686 = vpop.f32.mrf.mxu0
      %v2687 = vadd.f32 %v2560, %v2686
      %v2688 = vpop.f32.mrf.mxu0
      %v2689 = vadd.f32 %v2562, %v2688
      %v2690 = vpop.f32.mrf.mxu0
      %v2691 = vadd.f32 %v2564, %v2690
      %2692 = vdwg.mxu0
      %2693 = vmatprep.subr.bf16.mxu0 0
      %2694 = vmatpush1.bf16.msra.mxu0 0
      %2695 = vmatprep.subr.bf16.mxu0 0
      %2696 = vmatpush1.bf16.msra.mxu0 0
      %2697 = vmatprep.subr.bf16.mxu0 0
      %2698 = vmatpush1.bf16.msra.mxu0 0
      %2699 = vmatprep.subr.bf16.mxu0 0
      %2700 = vmatpush1.bf16.msra.mxu0 0
      %2701 = vmatprep.subr.bf16.mxu0 0
      %2702 = vmatpush1.bf16.msra.mxu0 0
      %2703 = vmatprep.subr.bf16.mxu0 0
      %2704 = vmatpush1.bf16.msra.mxu0 0
      %2705 = vmatprep.subr.bf16.mxu0 0
      %2706 = vmatpush1.bf16.msra.mxu0 0
      %2707 = vmatprep.subr.bf16.mxu0 0
      %2708 = vmatpush1.bf16.msra.mxu0 %v2638
      %2709 = vmatprep.subr.bf16.mxu0 0
      %2710 = vmatpush2.bf16.msra.mxu0 0
      %2711 = vmatprep.subr.bf16.mxu0 0
      %2712 = vmatpush2.bf16.msra.mxu0 0
      %2713 = vmatprep.subr.bf16.mxu0 0
      %2714 = vmatpush2.bf16.msra.mxu0 0
      %2715 = vmatprep.subr.bf16.mxu0 0
      %2716 = vmatpush2.bf16.msra.mxu0 0
      %2717 = vmatprep.subr.bf16.mxu0 0
      %2718 = vmatpush2.bf16.msra.mxu0 0
      %2719 = vmatprep.subr.bf16.mxu0 0
      %2720 = vmatpush2.bf16.msra.mxu0 0
      %2721 = vmatprep.subr.bf16.mxu0 0
      %2722 = vmatpush2.bf16.msra.mxu0 0
      %2723 = vmatprep.subr.bf16.mxu0 0
      %2724 = vmatpush2.bf16.msra.mxu0 0
      %2725 = vmatprep.mubr.bf16.mxu0 0
      %2726 = vmatmul.mubr.bf16.gmra.mxu0 %v2626
      %v2727 = vpop.f32.mrf.mxu0
      %v2728 = vadd.f32 %v2601, %v2727
      %v2729 = vpop.f32.mrf.mxu0
      %v2730 = vpop.f32.mrf.mxu0
      %v2731 = vadd.f32 %v2604, %v2730
      %v2732 = vpop.f32.mrf.mxu0
      %2733 = vmatprep.mubr.bf16.mxu0 0
      %2734 = vmatmul.mubr.bf16.gmra.mxu0 %v2629
      %v2735 = vpop.f32.mrf.mxu0
      %v2736 = vadd.f32 %v2609, %v2735
      %v2737 = vpop.f32.mrf.mxu0
      %v2738 = vpop.f32.mrf.mxu0
      %v2739 = vadd.f32 %v2612, %v2738
      %v2740 = vpop.f32.mrf.mxu0
      %2741 = vdwg.mxu0
      %v2742 = vld [vmem:[%s509] sm:$0xf]
      %v2743 = vld [vmem:[%s509 + $0x4] sm:$0xf]
      %v2744 = vld [vmem:[%s509 + $0x8] sm:$0xf]
      %v2745 = vld [vmem:[%s509 + $0xc] sm:$0xf]
      %v2750 = vunpack.c.l.b16 %v2742
      %v2751 = vunpack.c.l.b16 %v2743
      %v2752 = vunpack.c.l.b16 %v2744
      %v2753 = vunpack.c.l.b16 %v2745
      %v2754 = vpack.c.b16 %v2751, %v2750
      %v2755 = vpack.c.b16 %v2753, %v2752
      %2756 = vrot.lane.b32.xlu0 %v2483, 111
      %v2757 = vpop.permute.xlu0 %2756
      %2758 = vrot.lane.b32.xlu0 %v2484, 111
      %v2759 = vpop.permute.xlu0 %2758
      %2760 = vrot.lane.b32.xlu0 %v2485, 111
      %v2761 = vpop.permute.xlu0 %2760
      %2762 = vrot.lane.b32.xlu0 %v2486, 111
      %v2763 = vpop.permute.xlu0 %2762
      %v2764 = vsel %vm532, %v2757, %v2759
      %v2765 = vsel %vm532, %v2759, %v2761
      %v2766 = vsel %vm532, %v2761, %v2763
      %v2768 = vsel %vm263, %v2754, 0
      %v2771 = vsel %vm263, %v2755, 0
      %v2774 = vsel %vm270, %v2764, 0
      %v2777 = vsel %vm270, %v2765, 0
      %v2780 = vsel %vm270, %v2766, 0
      %2782 = vmatprep.subr.bf16.mxu0 0
      %2783 = vmatpush1.bf16.msra.mxu0 0
      %2784 = vmatprep.subr.bf16.mxu0 0
      %2785 = vmatpush1.bf16.msra.mxu0 0
      %2786 = vmatprep.subr.bf16.mxu0 0
      %2787 = vmatpush1.bf16.msra.mxu0 0
      %2788 = vmatprep.subr.bf16.mxu0 0
      %2789 = vmatpush1.bf16.msra.mxu0 0
      %2790 = vmatprep.subr.bf16.mxu0 0
      %2791 = vmatpush1.bf16.msra.mxu0 0
      %2792 = vmatprep.subr.bf16.mxu0 0
      %2793 = vmatpush1.bf16.msra.mxu0 0
      %2794 = vmatprep.subr.bf16.mxu0 0
      %2795 = vmatpush1.bf16.msra.mxu0 0
      %2796 = vmatprep.subr.bf16.mxu0 %v2777
      %2797 = vmatpush1.bf16.msra.mxu0 %v2774
      %2798 = vmatprep.subr.bf16.mxu0 0
      %2799 = vmatpush2.bf16.msra.mxu0 0
      %2800 = vmatprep.subr.bf16.mxu0 0
      %2801 = vmatpush2.bf16.msra.mxu0 0
      %2802 = vmatprep.subr.bf16.mxu0 0
      %2803 = vmatpush2.bf16.msra.mxu0 0
      %2804 = vmatprep.subr.bf16.mxu0 0
      %2805 = vmatpush2.bf16.msra.mxu0 0
      %2806 = vmatprep.subr.bf16.mxu0 0
      %2807 = vmatpush2.bf16.msra.mxu0 0
      %2808 = vmatprep.subr.bf16.mxu0 0
      %2809 = vmatpush2.bf16.msra.mxu0 0
      %2810 = vmatprep.subr.bf16.mxu0 0
      %2811 = vmatpush2.bf16.msra.mxu0 0
      %2812 = vmatprep.subr.bf16.mxu0 0
      %2813 = vmatpush2.bf16.msra.mxu0 0
      %2814 = vmatprep.mubr.bf16.mxu0 0
      %2815 = vmatmul.mubr.bf16.gmra.mxu0 %v2768
      %v2816 = vpop.f32.mrf.mxu0
      %v2817 = vadd.f32 0.0, %v2816
      %v2818 = vpop.f32.mrf.mxu0
      %v2819 = vadd.f32 0.0, %v2818
      %v2820 = vpop.f32.mrf.mxu0
      %v2821 = vadd.f32 0.0, %v2820
      %v2822 = vpop.f32.mrf.mxu0
      %v2823 = vadd.f32 0.0, %v2822
      %2824 = vmatprep.mubr.bf16.mxu0 0
      %2825 = vmatmul.mubr.bf16.gmra.mxu0 %v2771
      %v2826 = vpop.f32.mrf.mxu0
      %v2827 = vadd.f32 0.0, %v2826
      %v2828 = vpop.f32.mrf.mxu0
      %v2829 = vadd.f32 0.0, %v2828
      %v2830 = vpop.f32.mrf.mxu0
      %v2831 = vadd.f32 0.0, %v2830
      %v2832 = vpop.f32.mrf.mxu0
      %v2833 = vadd.f32 0.0, %v2832
      %2834 = vdwg.mxu0
      %2835 = vmatprep.subr.bf16.mxu0 0
      %2836 = vmatpush1.bf16.msra.mxu0 0
      %2837 = vmatprep.subr.bf16.mxu0 0
      %2838 = vmatpush1.bf16.msra.mxu0 0
      %2839 = vmatprep.subr.bf16.mxu0 0
      %2840 = vmatpush1.bf16.msra.mxu0 0
      %2841 = vmatprep.subr.bf16.mxu0 0
      %2842 = vmatpush1.bf16.msra.mxu0 0
      %2843 = vmatprep.subr.bf16.mxu0 0
      %2844 = vmatpush1.bf16.msra.mxu0 0
      %2845 = vmatprep.subr.bf16.mxu0 0
      %2846 = vmatpush1.bf16.msra.mxu0 0
      %2847 = vmatprep.subr.bf16.mxu0 0
      %2848 = vmatpush1.bf16.msra.mxu0 0
      %2849 = vmatprep.subr.bf16.mxu0 0
      %2850 = vmatpush1.bf16.msra.mxu0 %v2780
      %2851 = vmatprep.subr.bf16.mxu0 0
      %2852 = vmatpush2.bf16.msra.mxu0 0
      %2853 = vmatprep.subr.bf16.mxu0 0
      %2854 = vmatpush2.bf16.msra.mxu0 0
      %2855 = vmatprep.subr.bf16.mxu0 0
      %2856 = vmatpush2.bf16.msra.mxu0 0
      %2857 = vmatprep.subr.bf16.mxu0 0
      %2858 = vmatpush2.bf16.msra.mxu0 0
      %2859 = vmatprep.subr.bf16.mxu0 0
      %2860 = vmatpush2.bf16.msra.mxu0 0
      %2861 = vmatprep.subr.bf16.mxu0 0
      %2862 = vmatpush2.bf16.msra.mxu0 0
      %2863 = vmatprep.subr.bf16.mxu0 0
      %2864 = vmatpush2.bf16.msra.mxu0 0
      %2865 = vmatprep.subr.bf16.mxu0 0
      %2866 = vmatpush2.bf16.msra.mxu0 0
      %2867 = vmatprep.mubr.bf16.mxu0 0
      %2868 = vmatmul.mubr.bf16.gmra.mxu0 %v2768
      %v2869 = vpop.f32.mrf.mxu0
      %v2870 = vadd.f32 0.0, %v2869
      %v2871 = vpop.f32.mrf.mxu0
      %v2872 = vpop.f32.mrf.mxu0
      %v2873 = vadd.f32 0.0, %v2872
      %v2874 = vpop.f32.mrf.mxu0
      %2875 = vmatprep.mubr.bf16.mxu0 0
      %2876 = vmatmul.mubr.bf16.gmra.mxu0 %v2771
      %v2877 = vpop.f32.mrf.mxu0
      %v2878 = vadd.f32 0.0, %v2877
      %v2879 = vpop.f32.mrf.mxu0
      %v2880 = vpop.f32.mrf.mxu0
      %v2881 = vadd.f32 0.0, %v2880
      %v2882 = vpop.f32.mrf.mxu0
      %2883 = vdwg.mxu0
      %v2884 = vadd.f32 %v2675, %v2817
      %v2885 = vadd.f32 %v2677, %v2819
      %v2886 = vadd.f32 %v2728, %v2870
      %v2887 = vadd.f32 %v2679, %v2821
      %v2888 = vadd.f32 %v2681, %v2823
      %v2889 = vadd.f32 %v2731, %v2873
      %v2890 = vadd.f32 %v2685, %v2827
      %v2891 = vadd.f32 %v2687, %v2829
      %v2892 = vadd.f32 %v2736, %v2878
      %v2893 = vadd.f32 %v2689, %v2831
      %v2894 = vadd.f32 %v2691, %v2833
      %v2895 = vadd.f32 %v2739, %v2881
      %v2896 = vld [vmem:[%s665] sm:$0xf]
      %v2897 = vld [vmem:[%s665 + $0x4] sm:$0xf]
      %v2898 = vld [vmem:[%s665 + $0x8] sm:$0xf]
      %v2899 = vld [vmem:[%s665 + $0xc] sm:$0xf]
      %v2904 = vunpack.c.l.b16 %v2896
      %v2905 = vunpack.c.l.b16 %v2897
      %v2906 = vunpack.c.l.b16 %v2898
      %v2907 = vunpack.c.l.b16 %v2899
      %v2908 = vpack.c.b16 %v2905, %v2904
      %v2909 = vpack.c.b16 %v2907, %v2906
      %2910 = vrot.lane.b32.xlu0 %v2483, 110
      %v2911 = vpop.permute.xlu0 %2910
      %2912 = vrot.lane.b32.xlu0 %v2484, 110
      %v2913 = vpop.permute.xlu0 %2912
      %2914 = vrot.lane.b32.xlu0 %v2485, 110
      %v2915 = vpop.permute.xlu0 %2914
      %2916 = vrot.lane.b32.xlu0 %v2486, 110
      %v2917 = vpop.permute.xlu0 %2916
      %v2918 = vsel %vm688, %v2911, %v2913
      %v2919 = vsel %vm688, %v2913, %v2915
      %v2920 = vsel %vm688, %v2915, %v2917
      %v2922 = vsel %vm263, %v2908, 0
      %v2925 = vsel %vm263, %v2909, 0
      %v2928 = vsel %vm270, %v2918, 0
      %v2931 = vsel %vm270, %v2919, 0
      %v2934 = vsel %vm270, %v2920, 0
      %2936 = vmatprep.subr.bf16.mxu0 0
      %2937 = vmatpush1.bf16.msra.mxu0 0
      %2938 = vmatprep.subr.bf16.mxu0 0
      %2939 = vmatpush1.bf16.msra.mxu0 0
      %2940 = vmatprep.subr.bf16.mxu0 0
      %2941 = vmatpush1.bf16.msra.mxu0 0
      %2942 = vmatprep.subr.bf16.mxu0 0
      %2943 = vmatpush1.bf16.msra.mxu0 0
      %2944 = vmatprep.subr.bf16.mxu0 0
      %2945 = vmatpush1.bf16.msra.mxu0 0
      %2946 = vmatprep.subr.bf16.mxu0 0
      %2947 = vmatpush1.bf16.msra.mxu0 0
      %2948 = vmatprep.subr.bf16.mxu0 0
      %2949 = vmatpush1.bf16.msra.mxu0 0
      %2950 = vmatprep.subr.bf16.mxu0 %v2931
      %2951 = vmatpush1.bf16.msra.mxu0 %v2928
      %2952 = vmatprep.subr.bf16.mxu0 0
      %2953 = vmatpush2.bf16.msra.mxu0 0
      %2954 = vmatprep.subr.bf16.mxu0 0
      %2955 = vmatpush2.bf16.msra.mxu0 0
      %2956 = vmatprep.subr.bf16.mxu0 0
      %2957 = vmatpush2.bf16.msra.mxu0 0
      %2958 = vmatprep.subr.bf16.mxu0 0
      %2959 = vmatpush2.bf16.msra.mxu0 0
      %2960 = vmatprep.subr.bf16.mxu0 0
      %2961 = vmatpush2.bf16.msra.mxu0 0
      %2962 = vmatprep.subr.bf16.mxu0 0
      %2963 = vmatpush2.bf16.msra.mxu0 0
      %2964 = vmatprep.subr.bf16.mxu0 0
      %2965 = vmatpush2.bf16.msra.mxu0 0
      %2966 = vmatprep.subr.bf16.mxu0 0
      %2967 = vmatpush2.bf16.msra.mxu0 0
      %2968 = vmatprep.mubr.bf16.mxu0 0
      %2969 = vmatmul.mubr.bf16.gmra.mxu0 %v2922
      %v2970 = vpop.f32.mrf.mxu0
      %v2971 = vadd.f32 0.0, %v2970
      %v2972 = vpop.f32.mrf.mxu0
      %v2973 = vadd.f32 0.0, %v2972
      %v2974 = vpop.f32.mrf.mxu0
      %v2975 = vadd.f32 0.0, %v2974
      %v2976 = vpop.f32.mrf.mxu0
      %v2977 = vadd.f32 0.0, %v2976
      %2978 = vmatprep.mubr.bf16.mxu0 0
      %2979 = vmatmul.mubr.bf16.gmra.mxu0 %v2925
      %v2980 = vpop.f32.mrf.mxu0
      %v2981 = vadd.f32 0.0, %v2980
      %v2982 = vpop.f32.mrf.mxu0
      %v2983 = vadd.f32 0.0, %v2982
      %v2984 = vpop.f32.mrf.mxu0
      %v2985 = vadd.f32 0.0, %v2984
      %v2986 = vpop.f32.mrf.mxu0
      %v2987 = vadd.f32 0.0, %v2986
      %2988 = vdwg.mxu0
      %2989 = vmatprep.subr.bf16.mxu0 0
      %2990 = vmatpush1.bf16.msra.mxu0 0
      %2991 = vmatprep.subr.bf16.mxu0 0
      %2992 = vmatpush1.bf16.msra.mxu0 0
      %2993 = vmatprep.subr.bf16.mxu0 0
      %2994 = vmatpush1.bf16.msra.mxu0 0
      %2995 = vmatprep.subr.bf16.mxu0 0
      %2996 = vmatpush1.bf16.msra.mxu0 0
      %2997 = vmatprep.subr.bf16.mxu0 0
      %2998 = vmatpush1.bf16.msra.mxu0 0
      %2999 = vmatprep.subr.bf16.mxu0 0
      %3000 = vmatpush1.bf16.msra.mxu0 0
      %3001 = vmatprep.subr.bf16.mxu0 0
      %3002 = vmatpush1.bf16.msra.mxu0 0
      %3003 = vmatprep.subr.bf16.mxu0 0
      %3004 = vmatpush1.bf16.msra.mxu0 %v2934
      %3005 = vmatprep.subr.bf16.mxu0 0
      %3006 = vmatpush2.bf16.msra.mxu0 0
      %3007 = vmatprep.subr.bf16.mxu0 0
      %3008 = vmatpush2.bf16.msra.mxu0 0
      %3009 = vmatprep.subr.bf16.mxu0 0
      %3010 = vmatpush2.bf16.msra.mxu0 0
      %3011 = vmatprep.subr.bf16.mxu0 0
      %3012 = vmatpush2.bf16.msra.mxu0 0
      %3013 = vmatprep.subr.bf16.mxu0 0
      %3014 = vmatpush2.bf16.msra.mxu0 0
      %3015 = vmatprep.subr.bf16.mxu0 0
      %3016 = vmatpush2.bf16.msra.mxu0 0
      %3017 = vmatprep.subr.bf16.mxu0 0
      %3018 = vmatpush2.bf16.msra.mxu0 0
      %3019 = vmatprep.subr.bf16.mxu0 0
      %3020 = vmatpush2.bf16.msra.mxu0 0
      %3021 = vmatprep.mubr.bf16.mxu0 0
      %3022 = vmatmul.mubr.bf16.gmra.mxu0 %v2922
      %v3023 = vpop.f32.mrf.mxu0
      %v3024 = vadd.f32 0.0, %v3023
      %v3025 = vpop.f32.mrf.mxu0
      %v3026 = vpop.f32.mrf.mxu0
      %v3027 = vadd.f32 0.0, %v3026
      %v3028 = vpop.f32.mrf.mxu0
      %3029 = vmatprep.mubr.bf16.mxu0 0
      %3030 = vmatmul.mubr.bf16.gmra.mxu0 %v2925
      %v3031 = vpop.f32.mrf.mxu0
      %v3032 = vadd.f32 0.0, %v3031
      %v3033 = vpop.f32.mrf.mxu0
      %v3034 = vpop.f32.mrf.mxu0
      %v3035 = vadd.f32 0.0, %v3034
      %v3036 = vpop.f32.mrf.mxu0
      %3037 = vdwg.mxu0
      %v3038 = vadd.f32 %v2884, %v2971
      %v3039 = vadd.f32 %v2885, %v2973
      %v3040 = vadd.f32 %v2886, %v3024
      %v3041 = vadd.f32 %v2887, %v2975
      %v3042 = vadd.f32 %v2888, %v2977
      %v3043 = vadd.f32 %v2889, %v3027
      %v3044 = vadd.f32 %v2890, %v2981
      %v3045 = vadd.f32 %v2891, %v2983
      %v3046 = vadd.f32 %v2892, %v3032
      %v3047 = vadd.f32 %v2893, %v2985
      %v3048 = vadd.f32 %v2894, %v2987
      %v3049 = vadd.f32 %v2895, %v3035
      %v3050 = vadd.f32 %v3038, %v824
      %v3051 = vadd.f32 %v3039, %v824
      %v3052 = vadd.f32 %v3040, %v824
      %v3053 = vadd.f32 %v3041, %v829
      %v3054 = vadd.f32 %v3042, %v829
      %v3055 = vadd.f32 %v3043, %v829
      %v3056 = vadd.f32 %v3044, %v834
      %v3057 = vadd.f32 %v3045, %v834
      %v3058 = vadd.f32 %v3046, %v834
      %v3059 = vadd.f32 %v3047, %v839
      %v3060 = vadd.f32 %v3048, %v839
      %v3061 = vadd.f32 %v3049, %v839
      %v3062 = vxor.u32 %v3050, 2147483648
      %v3063 = vxor.u32 %v3051, 2147483648
      %v3064 = vxor.u32 %v3052, 2147483648
      %v3065 = vxor.u32 %v3053, 2147483648
      %v3066 = vxor.u32 %v3054, 2147483648
      %v3067 = vxor.u32 %v3055, 2147483648
      %v3068 = vxor.u32 %v3056, 2147483648
      %v3069 = vxor.u32 %v3057, 2147483648
      %v3070 = vxor.u32 %v3058, 2147483648
      %v3071 = vxor.u32 %v3059, 2147483648
      %v3072 = vxor.u32 %v3060, 2147483648
      %v3073 = vxor.u32 %v3061, 2147483648
      %v3074 = vmul.f32 %v3062, 1.442695
      %v3075 = vpow.pop %v3074
      %v3076 = vmul.f32 %v3063, 1.442695
      %v3077 = vpow.pop %v3076
      %v3078 = vmul.f32 %v3064, 1.442695
      %v3079 = vpow.pop %v3078
      %v3080 = vmul.f32 %v3065, 1.442695
      %v3081 = vpow.pop %v3080
      %v3082 = vmul.f32 %v3066, 1.442695
      %v3083 = vpow.pop %v3082
      %v3084 = vmul.f32 %v3067, 1.442695
      %v3085 = vpow.pop %v3084
      %v3086 = vmul.f32 %v3068, 1.442695
      %v3087 = vpow.pop %v3086
      %v3088 = vmul.f32 %v3069, 1.442695
      %v3089 = vpow.pop %v3088
      %v3090 = vmul.f32 %v3070, 1.442695
      %v3091 = vpow.pop %v3090
      %v3092 = vmul.f32 %v3071, 1.442695
      %v3093 = vpow.pop %v3092
      %v3094 = vmul.f32 %v3072, 1.442695
      %v3095 = vpow.pop %v3094
      %v3096 = vmul.f32 %v3073, 1.442695
      %v3097 = vpow.pop %v3096
      %v3098 = vadd.f32 %v3075, 1.0
      %v3099 = vadd.f32 %v3077, 1.0
      %v3100 = vadd.f32 %v3079, 1.0
      %v3101 = vadd.f32 %v3081, 1.0
      %v3102 = vadd.f32 %v3083, 1.0
      %v3103 = vadd.f32 %v3085, 1.0
      %v3104 = vadd.f32 %v3087, 1.0
      %v3105 = vadd.f32 %v3089, 1.0
      %v3106 = vadd.f32 %v3091, 1.0
      %v3107 = vadd.f32 %v3093, 1.0
      %v3108 = vadd.f32 %v3095, 1.0
      %v3109 = vadd.f32 %v3097, 1.0
      %v3110 = vrcp.pop %v3098
      %v3111 = vmul.f32 1.0, %v3110
      %v3112 = vrcp.pop %v3099
      %v3113 = vmul.f32 1.0, %v3112
      %v3114 = vrcp.pop %v3100
      %v3115 = vmul.f32 1.0, %v3114
      %v3116 = vrcp.pop %v3101
      %v3117 = vmul.f32 1.0, %v3116
      %v3118 = vrcp.pop %v3102
      %v3119 = vmul.f32 1.0, %v3118
      %v3120 = vrcp.pop %v3103
      %v3121 = vmul.f32 1.0, %v3120
      %v3122 = vrcp.pop %v3104
      %v3123 = vmul.f32 1.0, %v3122
      %v3124 = vrcp.pop %v3105
      %v3125 = vmul.f32 1.0, %v3124
      %v3126 = vrcp.pop %v3106
      %v3127 = vmul.f32 1.0, %v3126
      %v3128 = vrcp.pop %v3107
      %v3129 = vmul.f32 1.0, %v3128
      %v3130 = vrcp.pop %v3108
      %v3131 = vmul.f32 1.0, %v3130
      %v3132 = vrcp.pop %v3109
      %v3133 = vmul.f32 1.0, %v3132
      %v3134 = vmul.f32 %v3050, %v3111
      %v3135 = vmul.f32 %v3051, %v3113
      %v3136 = vmul.f32 %v3052, %v3115
      %v3137 = vmul.f32 %v3053, %v3117
      %v3138 = vmul.f32 %v3054, %v3119
      %v3139 = vmul.f32 %v3055, %v3121
      %v3140 = vmul.f32 %v3056, %v3123
      %v3141 = vmul.f32 %v3057, %v3125
      %v3142 = vmul.f32 %v3058, %v3127
      %v3143 = vmul.f32 %v3059, %v3129
      %v3144 = vmul.f32 %v3060, %v3131
      %v3145 = vmul.f32 %v3061, %v3133
      %v3146 = vmul.f32 %v3134, %v941
      %v3147 = vmul.f32 %v3135, %v945
      %v3148 = vmul.f32 %v3136, %v949
      %v3149 = vmul.f32 %v3137, %v941
      %v3150 = vmul.f32 %v3138, %v945
      %v3151 = vmul.f32 %v3139, %v949
      %v3152 = vmul.f32 %v3140, %v941
      %v3153 = vmul.f32 %v3141, %v945
      %v3154 = vmul.f32 %v3142, %v949
      %v3155 = vmul.f32 %v3143, %v941
      %v3156 = vmul.f32 %v3144, %v945
      %v3157 = vmul.f32 %v3145, %v949
      %v3158 = vadd.f32 %v3146, %v3147
      %v3159 = vadd.f32 %v3158, %v3148
      %3160 = vadd.xlane.f32.xlu0 %v3159
      %v3161 = vpop.xlane.xlu0 %3160
      %v3162 = vadd.f32 %v3149, %v3150
      %v3163 = vadd.f32 %v3162, %v3151
      %3164 = vadd.xlane.f32.xlu0 %v3163
      %v3165 = vpop.xlane.xlu0 %3164
      %v3166 = vadd.f32 %v3152, %v3153
      %v3167 = vadd.f32 %v3166, %v3154
      %3168 = vadd.xlane.f32.xlu0 %v3167
      %v3169 = vpop.xlane.xlu0 %3168
      %v3170 = vadd.f32 %v3155, %v3156
      %v3171 = vadd.f32 %v3170, %v3157
      %3172 = vadd.xlane.f32.xlu0 %v3171
      %v3173 = vpop.xlane.xlu0 %3172
      %s3174 = scalar_lea.vmem %s204, 96
      %3175 = vst.msk [vmem:[%s3174] sm:$0xff] %vm981, %v3161
      %3176 = vst.msk [vmem:[%s3174 + $0x8] sm:$0xff] %vm981, %v3165
      %3177 = vst.msk [vmem:[%s3174 + $0x10] sm:$0xff] %vm981, %v3169
      %3178 = vst.msk [vmem:[%s3174 + $0x18] sm:$0xff] %vm981, %v3173
      %s3179 = scalar_lea.vmem %s197, 128
      %v3180 = vld [vmem:[%s3179] sm:$0xff]
      %v3181 = vld [vmem:[%s3179 + $0x8] sm:$0xff]
      %v3182 = vld [vmem:[%s3179 + $0x10] sm:$0x33]
      %v3183 = vld [vmem:[%s3179 + $0x18] sm:$0x33]
      %v3184 = vld [vmem:[%s1] sm:$0xf]
      %v3185 = vld [vmem:[%s1 + $0x4] sm:$0xf]
      %v3186 = vld [vmem:[%s1 + $0x8] sm:$0xf]
      %v3187 = vld [vmem:[%s1 + $0xc] sm:$0xf]
      %v3188 = vld [vmem:[%s220] sm:$0xf]
      %v3189 = vld [vmem:[%s220 + $0x4] sm:$0xf]
      %v3190 = vld [vmem:[%s220 + $0x8] sm:$0xf]
      %v3191 = vld [vmem:[%s220 + $0xc] sm:$0xf]
      %v3196 = vunpack.c.l.b16 %v3188
      %v3197 = vunpack.c.l.b16 %v3189
      %v3198 = vunpack.c.l.b16 %v3190
      %v3199 = vunpack.c.l.b16 %v3191
      %v3200 = vpack.c.b16 %v3197, %v3196
      %v3201 = vpack.c.b16 %v3199, %v3198
      %v3206 = vunpack.c.l.b16 %v3180
      %v3207 = vunpack.c.h.b16 %v3180
      %v3208 = vunpack.c.l.b16 %v3181
      %v3209 = vunpack.c.h.b16 %v3181
      %v3210 = vunpack.c.l.b16 %v3182
      %v3211 = vunpack.c.h.b16 %v3182
      %v3212 = vunpack.c.l.b16 %v3183
      %v3213 = vunpack.c.h.b16 %v3183
      %v3214 = vpack.c.b16 %v3210, %v3206
      %v3215 = vpack.c.b16 %v3211, %v3207
      %v3216 = vpack.c.b16 %v3212, %v3208
      %v3217 = vpack.c.b16 %v3213, %v3209
      %3218 = vrot.lane.b32.xlu0 %v3214, 127
      %v3219 = vpop.permute.xlu0 %3218
      %3220 = vrot.lane.b32.xlu0 %v3215, 127
      %v3221 = vpop.permute.xlu0 %3220
      %3222 = vrot.lane.b32.xlu0 %v3216, 127
      %v3223 = vpop.permute.xlu0 %3222
      %3224 = vrot.lane.b32.xlu0 %v3217, 127
      %v3225 = vpop.permute.xlu0 %3224
      %v3226 = vsel %vm259, %v3219, %v3221
      %v3227 = vsel %vm259, %v3221, %v3223
      %v3228 = vsel %vm259, %v3223, %v3225
      %v3230 = vsel %vm263, %v3200, 0
      %v3233 = vsel %vm263, %v3201, 0
      %v3236 = vsel %vm270, %v3226, 0
      %v3239 = vsel %vm270, %v3227, 0
      %v3242 = vsel %vm270, %v3228, 0
      %3244 = vmatprep.subr.bf16.mxu0 0
      %3245 = vmatpush1.bf16.msra.mxu0 0
      %3246 = vmatprep.subr.bf16.mxu0 0
      %3247 = vmatpush1.bf16.msra.mxu0 0
      %3248 = vmatprep.subr.bf16.mxu0 0
      %3249 = vmatpush1.bf16.msra.mxu0 0
      %3250 = vmatprep.subr.bf16.mxu0 0
      %3251 = vmatpush1.bf16.msra.mxu0 0
      %3252 = vmatprep.subr.bf16.mxu0 0
      %3253 = vmatpush1.bf16.msra.mxu0 0
      %3254 = vmatprep.subr.bf16.mxu0 0
      %3255 = vmatpush1.bf16.msra.mxu0 0
      %3256 = vmatprep.subr.bf16.mxu0 0
      %3257 = vmatpush1.bf16.msra.mxu0 0
      %3258 = vmatprep.subr.bf16.mxu0 %v3239
      %3259 = vmatpush1.bf16.msra.mxu0 %v3236
      %3260 = vmatprep.subr.bf16.mxu0 0
      %3261 = vmatpush2.bf16.msra.mxu0 0
      %3262 = vmatprep.subr.bf16.mxu0 0
      %3263 = vmatpush2.bf16.msra.mxu0 0
      %3264 = vmatprep.subr.bf16.mxu0 0
      %3265 = vmatpush2.bf16.msra.mxu0 0
      %3266 = vmatprep.subr.bf16.mxu0 0
      %3267 = vmatpush2.bf16.msra.mxu0 0
      %3268 = vmatprep.subr.bf16.mxu0 0
      %3269 = vmatpush2.bf16.msra.mxu0 0
      %3270 = vmatprep.subr.bf16.mxu0 0
      %3271 = vmatpush2.bf16.msra.mxu0 0
      %3272 = vmatprep.subr.bf16.mxu0 0
      %3273 = vmatpush2.bf16.msra.mxu0 0
      %3274 = vmatprep.subr.bf16.mxu0 0
      %3275 = vmatpush2.bf16.msra.mxu0 0
      %3276 = vmatprep.mubr.bf16.mxu0 0
      %3277 = vmatmul.mubr.bf16.gmra.mxu0 %v3230
      %v3278 = vpop.f32.mrf.mxu0
      %v3279 = vadd.f32 0.0, %v3278
      %v3280 = vpop.f32.mrf.mxu0
      %v3281 = vadd.f32 0.0, %v3280
      %v3282 = vpop.f32.mrf.mxu0
      %v3283 = vadd.f32 0.0, %v3282
      %v3284 = vpop.f32.mrf.mxu0
      %v3285 = vadd.f32 0.0, %v3284
      %3286 = vmatprep.mubr.bf16.mxu0 0
      %3287 = vmatmul.mubr.bf16.gmra.mxu0 %v3233
      %v3288 = vpop.f32.mrf.mxu0
      %v3289 = vadd.f32 0.0, %v3288
      %v3290 = vpop.f32.mrf.mxu0
      %v3291 = vadd.f32 0.0, %v3290
      %v3292 = vpop.f32.mrf.mxu0
      %v3293 = vadd.f32 0.0, %v3292
      %v3294 = vpop.f32.mrf.mxu0
      %v3295 = vadd.f32 0.0, %v3294
      %3296 = vdwg.mxu0
      %3297 = vmatprep.subr.bf16.mxu0 0
      %3298 = vmatpush1.bf16.msra.mxu0 0
      %3299 = vmatprep.subr.bf16.mxu0 0
      %3300 = vmatpush1.bf16.msra.mxu0 0
      %3301 = vmatprep.subr.bf16.mxu0 0
      %3302 = vmatpush1.bf16.msra.mxu0 0
      %3303 = vmatprep.subr.bf16.mxu0 0
      %3304 = vmatpush1.bf16.msra.mxu0 0
      %3305 = vmatprep.subr.bf16.mxu0 0
      %3306 = vmatpush1.bf16.msra.mxu0 0
      %3307 = vmatprep.subr.bf16.mxu0 0
      %3308 = vmatpush1.bf16.msra.mxu0 0
      %3309 = vmatprep.subr.bf16.mxu0 0
      %3310 = vmatpush1.bf16.msra.mxu0 0
      %3311 = vmatprep.subr.bf16.mxu0 0
      %3312 = vmatpush1.bf16.msra.mxu0 %v3242
      %3313 = vmatprep.subr.bf16.mxu0 0
      %3314 = vmatpush2.bf16.msra.mxu0 0
      %3315 = vmatprep.subr.bf16.mxu0 0
      %3316 = vmatpush2.bf16.msra.mxu0 0
      %3317 = vmatprep.subr.bf16.mxu0 0
      %3318 = vmatpush2.bf16.msra.mxu0 0
      %3319 = vmatprep.subr.bf16.mxu0 0
      %3320 = vmatpush2.bf16.msra.mxu0 0
      %3321 = vmatprep.subr.bf16.mxu0 0
      %3322 = vmatpush2.bf16.msra.mxu0 0
      %3323 = vmatprep.subr.bf16.mxu0 0
      %3324 = vmatpush2.bf16.msra.mxu0 0
      %3325 = vmatprep.subr.bf16.mxu0 0
      %3326 = vmatpush2.bf16.msra.mxu0 0
      %3327 = vmatprep.subr.bf16.mxu0 0
      %3328 = vmatpush2.bf16.msra.mxu0 0
      %3329 = vmatprep.mubr.bf16.mxu0 0
      %3330 = vmatmul.mubr.bf16.gmra.mxu0 %v3230
      %v3331 = vpop.f32.mrf.mxu0
      %v3332 = vadd.f32 0.0, %v3331
      %v3333 = vpop.f32.mrf.mxu0
      %v3334 = vpop.f32.mrf.mxu0
      %v3335 = vadd.f32 0.0, %v3334
      %v3336 = vpop.f32.mrf.mxu0
      %3337 = vmatprep.mubr.bf16.mxu0 0
      %3338 = vmatmul.mubr.bf16.gmra.mxu0 %v3233
      %v3339 = vpop.f32.mrf.mxu0
      %v3340 = vadd.f32 0.0, %v3339
      %v3341 = vpop.f32.mrf.mxu0
      %v3342 = vpop.f32.mrf.mxu0
      %v3343 = vadd.f32 0.0, %v3342
      %v3344 = vpop.f32.mrf.mxu0
      %3345 = vdwg.mxu0
      %v3350 = vunpack.c.l.b16 %v3184
      %v3351 = vunpack.c.l.b16 %v3185
      %v3352 = vunpack.c.l.b16 %v3186
      %v3353 = vunpack.c.l.b16 %v3187
      %v3354 = vpack.c.b16 %v3351, %v3350
      %v3355 = vpack.c.b16 %v3353, %v3352
      %v3357 = vsel %vm263, %v3354, 0
      %v3360 = vsel %vm263, %v3355, 0
      %v3363 = vsel %vm270, %v3214, 0
      %v3366 = vsel %vm270, %v3215, 0
      %v3369 = vsel %vm270, %v3216, 0
      %3371 = vmatprep.subr.bf16.mxu0 0
      %3372 = vmatpush1.bf16.msra.mxu0 0
      %3373 = vmatprep.subr.bf16.mxu0 0
      %3374 = vmatpush1.bf16.msra.mxu0 0
      %3375 = vmatprep.subr.bf16.mxu0 0
      %3376 = vmatpush1.bf16.msra.mxu0 0
      %3377 = vmatprep.subr.bf16.mxu0 0
      %3378 = vmatpush1.bf16.msra.mxu0 0
      %3379 = vmatprep.subr.bf16.mxu0 0
      %3380 = vmatpush1.bf16.msra.mxu0 0
      %3381 = vmatprep.subr.bf16.mxu0 0
      %3382 = vmatpush1.bf16.msra.mxu0 0
      %3383 = vmatprep.subr.bf16.mxu0 0
      %3384 = vmatpush1.bf16.msra.mxu0 0
      %3385 = vmatprep.subr.bf16.mxu0 %v3366
      %3386 = vmatpush1.bf16.msra.mxu0 %v3363
      %3387 = vmatprep.subr.bf16.mxu0 0
      %3388 = vmatpush2.bf16.msra.mxu0 0
      %3389 = vmatprep.subr.bf16.mxu0 0
      %3390 = vmatpush2.bf16.msra.mxu0 0
      %3391 = vmatprep.subr.bf16.mxu0 0
      %3392 = vmatpush2.bf16.msra.mxu0 0
      %3393 = vmatprep.subr.bf16.mxu0 0
      %3394 = vmatpush2.bf16.msra.mxu0 0
      %3395 = vmatprep.subr.bf16.mxu0 0
      %3396 = vmatpush2.bf16.msra.mxu0 0
      %3397 = vmatprep.subr.bf16.mxu0 0
      %3398 = vmatpush2.bf16.msra.mxu0 0
      %3399 = vmatprep.subr.bf16.mxu0 0
      %3400 = vmatpush2.bf16.msra.mxu0 0
      %3401 = vmatprep.subr.bf16.mxu0 0
      %3402 = vmatpush2.bf16.msra.mxu0 0
      %3403 = vmatprep.mubr.bf16.mxu0 0
      %3404 = vmatmul.mubr.bf16.gmra.mxu0 %v3357
      %v3405 = vpop.f32.mrf.mxu0
      %v3406 = vadd.f32 %v3279, %v3405
      %v3407 = vpop.f32.mrf.mxu0
      %v3408 = vadd.f32 %v3281, %v3407
      %v3409 = vpop.f32.mrf.mxu0
      %v3410 = vadd.f32 %v3283, %v3409
      %v3411 = vpop.f32.mrf.mxu0
      %v3412 = vadd.f32 %v3285, %v3411
      %3413 = vmatprep.mubr.bf16.mxu0 0
      %3414 = vmatmul.mubr.bf16.gmra.mxu0 %v3360
      %v3415 = vpop.f32.mrf.mxu0
      %v3416 = vadd.f32 %v3289, %v3415
      %v3417 = vpop.f32.mrf.mxu0
      %v3418 = vadd.f32 %v3291, %v3417
      %v3419 = vpop.f32.mrf.mxu0
      %v3420 = vadd.f32 %v3293, %v3419
      %v3421 = vpop.f32.mrf.mxu0
      %v3422 = vadd.f32 %v3295, %v3421
      %3423 = vdwg.mxu0
      %3424 = vmatprep.subr.bf16.mxu0 0
      %3425 = vmatpush1.bf16.msra.mxu0 0
      %3426 = vmatprep.subr.bf16.mxu0 0
      %3427 = vmatpush1.bf16.msra.mxu0 0
      %3428 = vmatprep.subr.bf16.mxu0 0
      %3429 = vmatpush1.bf16.msra.mxu0 0
      %3430 = vmatprep.subr.bf16.mxu0 0
      %3431 = vmatpush1.bf16.msra.mxu0 0
      %3432 = vmatprep.subr.bf16.mxu0 0
      %3433 = vmatpush1.bf16.msra.mxu0 0
      %3434 = vmatprep.subr.bf16.mxu0 0
      %3435 = vmatpush1.bf16.msra.mxu0 0
      %3436 = vmatprep.subr.bf16.mxu0 0
      %3437 = vmatpush1.bf16.msra.mxu0 0
      %3438 = vmatprep.subr.bf16.mxu0 0
      %3439 = vmatpush1.bf16.msra.mxu0 %v3369
      %3440 = vmatprep.subr.bf16.mxu0 0
      %3441 = vmatpush2.bf16.msra.mxu0 0
      %3442 = vmatprep.subr.bf16.mxu0 0
      %3443 = vmatpush2.bf16.msra.mxu0 0
      %3444 = vmatprep.subr.bf16.mxu0 0
      %3445 = vmatpush2.bf16.msra.mxu0 0
      %3446 = vmatprep.subr.bf16.mxu0 0
      %3447 = vmatpush2.bf16.msra.mxu0 0
      %3448 = vmatprep.subr.bf16.mxu0 0
      %3449 = vmatpush2.bf16.msra.mxu0 0
      %3450 = vmatprep.subr.bf16.mxu0 0
      %3451 = vmatpush2.bf16.msra.mxu0 0
      %3452 = vmatprep.subr.bf16.mxu0 0
      %3453 = vmatpush2.bf16.msra.mxu0 0
      %3454 = vmatprep.subr.bf16.mxu0 0
      %3455 = vmatpush2.bf16.msra.mxu0 0
      %3456 = vmatprep.mubr.bf16.mxu0 0
      %3457 = vmatmul.mubr.bf16.gmra.mxu0 %v3357
      %v3458 = vpop.f32.mrf.mxu0
      %v3459 = vadd.f32 %v3332, %v3458
      %v3460 = vpop.f32.mrf.mxu0
      %v3461 = vpop.f32.mrf.mxu0
      %v3462 = vadd.f32 %v3335, %v3461
      %v3463 = vpop.f32.mrf.mxu0
      %3464 = vmatprep.mubr.bf16.mxu0 0
      %3465 = vmatmul.mubr.bf16.gmra.mxu0 %v3360
      %v3466 = vpop.f32.mrf.mxu0
      %v3467 = vadd.f32 %v3340, %v3466
      %v3468 = vpop.f32.mrf.mxu0
      %v3469 = vpop.f32.mrf.mxu0
      %v3470 = vadd.f32 %v3343, %v3469
      %v3471 = vpop.f32.mrf.mxu0
      %3472 = vdwg.mxu0
      %v3473 = vld [vmem:[%s509] sm:$0xf]
      %v3474 = vld [vmem:[%s509 + $0x4] sm:$0xf]
      %v3475 = vld [vmem:[%s509 + $0x8] sm:$0xf]
      %v3476 = vld [vmem:[%s509 + $0xc] sm:$0xf]
      %v3481 = vunpack.c.l.b16 %v3473
      %v3482 = vunpack.c.l.b16 %v3474
      %v3483 = vunpack.c.l.b16 %v3475
      %v3484 = vunpack.c.l.b16 %v3476
      %v3485 = vpack.c.b16 %v3482, %v3481
      %v3486 = vpack.c.b16 %v3484, %v3483
      %3487 = vrot.lane.b32.xlu0 %v3214, 111
      %v3488 = vpop.permute.xlu0 %3487
      %3489 = vrot.lane.b32.xlu0 %v3215, 111
      %v3490 = vpop.permute.xlu0 %3489
      %3491 = vrot.lane.b32.xlu0 %v3216, 111
      %v3492 = vpop.permute.xlu0 %3491
      %3493 = vrot.lane.b32.xlu0 %v3217, 111
      %v3494 = vpop.permute.xlu0 %3493
      %v3495 = vsel %vm532, %v3488, %v3490
      %v3496 = vsel %vm532, %v3490, %v3492
      %v3497 = vsel %vm532, %v3492, %v3494
      %v3499 = vsel %vm263, %v3485, 0
      %v3502 = vsel %vm263, %v3486, 0
      %v3505 = vsel %vm270, %v3495, 0
      %v3508 = vsel %vm270, %v3496, 0
      %v3511 = vsel %vm270, %v3497, 0
      %3513 = vmatprep.subr.bf16.mxu0 0
      %3514 = vmatpush1.bf16.msra.mxu0 0
      %3515 = vmatprep.subr.bf16.mxu0 0
      %3516 = vmatpush1.bf16.msra.mxu0 0
      %3517 = vmatprep.subr.bf16.mxu0 0
      %3518 = vmatpush1.bf16.msra.mxu0 0
      %3519 = vmatprep.subr.bf16.mxu0 0
      %3520 = vmatpush1.bf16.msra.mxu0 0
      %3521 = vmatprep.subr.bf16.mxu0 0
      %3522 = vmatpush1.bf16.msra.mxu0 0
      %3523 = vmatprep.subr.bf16.mxu0 0
      %3524 = vmatpush1.bf16.msra.mxu0 0
      %3525 = vmatprep.subr.bf16.mxu0 0
      %3526 = vmatpush1.bf16.msra.mxu0 0
      %3527 = vmatprep.subr.bf16.mxu0 %v3508
      %3528 = vmatpush1.bf16.msra.mxu0 %v3505
      %3529 = vmatprep.subr.bf16.mxu0 0
      %3530 = vmatpush2.bf16.msra.mxu0 0
      %3531 = vmatprep.subr.bf16.mxu0 0
      %3532 = vmatpush2.bf16.msra.mxu0 0
      %3533 = vmatprep.subr.bf16.mxu0 0
      %3534 = vmatpush2.bf16.msra.mxu0 0
      %3535 = vmatprep.subr.bf16.mxu0 0
      %3536 = vmatpush2.bf16.msra.mxu0 0
      %3537 = vmatprep.subr.bf16.mxu0 0
      %3538 = vmatpush2.bf16.msra.mxu0 0
      %3539 = vmatprep.subr.bf16.mxu0 0
      %3540 = vmatpush2.bf16.msra.mxu0 0
      %3541 = vmatprep.subr.bf16.mxu0 0
      %3542 = vmatpush2.bf16.msra.mxu0 0
      %3543 = vmatprep.subr.bf16.mxu0 0
      %3544 = vmatpush2.bf16.msra.mxu0 0
      %3545 = vmatprep.mubr.bf16.mxu0 0
      %3546 = vmatmul.mubr.bf16.gmra.mxu0 %v3499
      %v3547 = vpop.f32.mrf.mxu0
      %v3548 = vadd.f32 0.0, %v3547
      %v3549 = vpop.f32.mrf.mxu0
      %v3550 = vadd.f32 0.0, %v3549
      %v3551 = vpop.f32.mrf.mxu0
      %v3552 = vadd.f32 0.0, %v3551
      %v3553 = vpop.f32.mrf.mxu0
      %v3554 = vadd.f32 0.0, %v3553
      %3555 = vmatprep.mubr.bf16.mxu0 0
      %3556 = vmatmul.mubr.bf16.gmra.mxu0 %v3502
      %v3557 = vpop.f32.mrf.mxu0
      %v3558 = vadd.f32 0.0, %v3557
      %v3559 = vpop.f32.mrf.mxu0
      %v3560 = vadd.f32 0.0, %v3559
      %v3561 = vpop.f32.mrf.mxu0
      %v3562 = vadd.f32 0.0, %v3561
      %v3563 = vpop.f32.mrf.mxu0
      %v3564 = vadd.f32 0.0, %v3563
      %3565 = vdwg.mxu0
      %3566 = vmatprep.subr.bf16.mxu0 0
      %3567 = vmatpush1.bf16.msra.mxu0 0
      %3568 = vmatprep.subr.bf16.mxu0 0
      %3569 = vmatpush1.bf16.msra.mxu0 0
      %3570 = vmatprep.subr.bf16.mxu0 0
      %3571 = vmatpush1.bf16.msra.mxu0 0
      %3572 = vmatprep.subr.bf16.mxu0 0
      %3573 = vmatpush1.bf16.msra.mxu0 0
      %3574 = vmatprep.subr.bf16.mxu0 0
      %3575 = vmatpush1.bf16.msra.mxu0 0
      %3576 = vmatprep.subr.bf16.mxu0 0
      %3577 = vmatpush1.bf16.msra.mxu0 0
      %3578 = vmatprep.subr.bf16.mxu0 0
      %3579 = vmatpush1.bf16.msra.mxu0 0
      %3580 = vmatprep.subr.bf16.mxu0 0
      %3581 = vmatpush1.bf16.msra.mxu0 %v3511
      %3582 = vmatprep.subr.bf16.mxu0 0
      %3583 = vmatpush2.bf16.msra.mxu0 0
      %3584 = vmatprep.subr.bf16.mxu0 0
      %3585 = vmatpush2.bf16.msra.mxu0 0
      %3586 = vmatprep.subr.bf16.mxu0 0
      %3587 = vmatpush2.bf16.msra.mxu0 0
      %3588 = vmatprep.subr.bf16.mxu0 0
      %3589 = vmatpush2.bf16.msra.mxu0 0
      %3590 = vmatprep.subr.bf16.mxu0 0
      %3591 = vmatpush2.bf16.msra.mxu0 0
      %3592 = vmatprep.subr.bf16.mxu0 0
      %3593 = vmatpush2.bf16.msra.mxu0 0
      %3594 = vmatprep.subr.bf16.mxu0 0
      %3595 = vmatpush2.bf16.msra.mxu0 0
      %3596 = vmatprep.subr.bf16.mxu0 0
      %3597 = vmatpush2.bf16.msra.mxu0 0
      %3598 = vmatprep.mubr.bf16.mxu0 0
      %3599 = vmatmul.mubr.bf16.gmra.mxu0 %v3499
      %v3600 = vpop.f32.mrf.mxu0
      %v3601 = vadd.f32 0.0, %v3600
      %v3602 = vpop.f32.mrf.mxu0
      %v3603 = vpop.f32.mrf.mxu0
      %v3604 = vadd.f32 0.0, %v3603
      %v3605 = vpop.f32.mrf.mxu0
      %3606 = vmatprep.mubr.bf16.mxu0 0
      %3607 = vmatmul.mubr.bf16.gmra.mxu0 %v3502
      %v3608 = vpop.f32.mrf.mxu0
      %v3609 = vadd.f32 0.0, %v3608
      %v3610 = vpop.f32.mrf.mxu0
      %v3611 = vpop.f32.mrf.mxu0
      %v3612 = vadd.f32 0.0, %v3611
      %v3613 = vpop.f32.mrf.mxu0
      %3614 = vdwg.mxu0
      %v3615 = vadd.f32 %v3406, %v3548
      %v3616 = vadd.f32 %v3408, %v3550
      %v3617 = vadd.f32 %v3459, %v3601
      %v3618 = vadd.f32 %v3410, %v3552
      %v3619 = vadd.f32 %v3412, %v3554
      %v3620 = vadd.f32 %v3462, %v3604
      %v3621 = vadd.f32 %v3416, %v3558
      %v3622 = vadd.f32 %v3418, %v3560
      %v3623 = vadd.f32 %v3467, %v3609
      %v3624 = vadd.f32 %v3420, %v3562
      %v3625 = vadd.f32 %v3422, %v3564
      %v3626 = vadd.f32 %v3470, %v3612
      %v3627 = vld [vmem:[%s665] sm:$0xf]
      %v3628 = vld [vmem:[%s665 + $0x4] sm:$0xf]
      %v3629 = vld [vmem:[%s665 + $0x8] sm:$0xf]
      %v3630 = vld [vmem:[%s665 + $0xc] sm:$0xf]
      %v3635 = vunpack.c.l.b16 %v3627
      %v3636 = vunpack.c.l.b16 %v3628
      %v3637 = vunpack.c.l.b16 %v3629
      %v3638 = vunpack.c.l.b16 %v3630
      %v3639 = vpack.c.b16 %v3636, %v3635
      %v3640 = vpack.c.b16 %v3638, %v3637
      %3641 = vrot.lane.b32.xlu0 %v3214, 110
      %v3642 = vpop.permute.xlu0 %3641
      %3643 = vrot.lane.b32.xlu0 %v3215, 110
      %v3644 = vpop.permute.xlu0 %3643
      %3645 = vrot.lane.b32.xlu0 %v3216, 110
      %v3646 = vpop.permute.xlu0 %3645
      %3647 = vrot.lane.b32.xlu0 %v3217, 110
      %v3648 = vpop.permute.xlu0 %3647
      %v3649 = vsel %vm688, %v3642, %v3644
      %v3650 = vsel %vm688, %v3644, %v3646
      %v3651 = vsel %vm688, %v3646, %v3648
      %v3653 = vsel %vm263, %v3639, 0
      %v3656 = vsel %vm263, %v3640, 0
      %v3659 = vsel %vm270, %v3649, 0
      %v3662 = vsel %vm270, %v3650, 0
      %v3665 = vsel %vm270, %v3651, 0
      %3667 = vmatprep.subr.bf16.mxu0 0
      %3668 = vmatpush1.bf16.msra.mxu0 0
      %3669 = vmatprep.subr.bf16.mxu0 0
      %3670 = vmatpush1.bf16.msra.mxu0 0
      %3671 = vmatprep.subr.bf16.mxu0 0
      %3672 = vmatpush1.bf16.msra.mxu0 0
      %3673 = vmatprep.subr.bf16.mxu0 0
      %3674 = vmatpush1.bf16.msra.mxu0 0
      %3675 = vmatprep.subr.bf16.mxu0 0
      %3676 = vmatpush1.bf16.msra.mxu0 0
      %3677 = vmatprep.subr.bf16.mxu0 0
      %3678 = vmatpush1.bf16.msra.mxu0 0
      %3679 = vmatprep.subr.bf16.mxu0 0
      %3680 = vmatpush1.bf16.msra.mxu0 0
      %3681 = vmatprep.subr.bf16.mxu0 %v3662
      %3682 = vmatpush1.bf16.msra.mxu0 %v3659
      %3683 = vmatprep.subr.bf16.mxu0 0
      %3684 = vmatpush2.bf16.msra.mxu0 0
      %3685 = vmatprep.subr.bf16.mxu0 0
      %3686 = vmatpush2.bf16.msra.mxu0 0
      %3687 = vmatprep.subr.bf16.mxu0 0
      %3688 = vmatpush2.bf16.msra.mxu0 0
      %3689 = vmatprep.subr.bf16.mxu0 0
      %3690 = vmatpush2.bf16.msra.mxu0 0
      %3691 = vmatprep.subr.bf16.mxu0 0
      %3692 = vmatpush2.bf16.msra.mxu0 0
      %3693 = vmatprep.subr.bf16.mxu0 0
      %3694 = vmatpush2.bf16.msra.mxu0 0
      %3695 = vmatprep.subr.bf16.mxu0 0
      %3696 = vmatpush2.bf16.msra.mxu0 0
      %3697 = vmatprep.subr.bf16.mxu0 0
      %3698 = vmatpush2.bf16.msra.mxu0 0
      %3699 = vmatprep.mubr.bf16.mxu0 0
      %3700 = vmatmul.mubr.bf16.gmra.mxu0 %v3653
      %v3701 = vpop.f32.mrf.mxu0
      %v3702 = vadd.f32 0.0, %v3701
      %v3703 = vpop.f32.mrf.mxu0
      %v3704 = vadd.f32 0.0, %v3703
      %v3705 = vpop.f32.mrf.mxu0
      %v3706 = vadd.f32 0.0, %v3705
      %v3707 = vpop.f32.mrf.mxu0
      %v3708 = vadd.f32 0.0, %v3707
      %3709 = vmatprep.mubr.bf16.mxu0 0
      %3710 = vmatmul.mubr.bf16.gmra.mxu0 %v3656
      %v3711 = vpop.f32.mrf.mxu0
      %v3712 = vadd.f32 0.0, %v3711
      %v3713 = vpop.f32.mrf.mxu0
      %v3714 = vadd.f32 0.0, %v3713
      %v3715 = vpop.f32.mrf.mxu0
      %v3716 = vadd.f32 0.0, %v3715
      %v3717 = vpop.f32.mrf.mxu0
      %v3718 = vadd.f32 0.0, %v3717
      %3719 = vdwg.mxu0
      %3720 = vmatprep.subr.bf16.mxu0 0
      %3721 = vmatpush1.bf16.msra.mxu0 0
      %3722 = vmatprep.subr.bf16.mxu0 0
      %3723 = vmatpush1.bf16.msra.mxu0 0
      %3724 = vmatprep.subr.bf16.mxu0 0
      %3725 = vmatpush1.bf16.msra.mxu0 0
      %3726 = vmatprep.subr.bf16.mxu0 0
      %3727 = vmatpush1.bf16.msra.mxu0 0
      %3728 = vmatprep.subr.bf16.mxu0 0
      %3729 = vmatpush1.bf16.msra.mxu0 0
      %3730 = vmatprep.subr.bf16.mxu0 0
      %3731 = vmatpush1.bf16.msra.mxu0 0
      %3732 = vmatprep.subr.bf16.mxu0 0
      %3733 = vmatpush1.bf16.msra.mxu0 0
      %3734 = vmatprep.subr.bf16.mxu0 0
      %3735 = vmatpush1.bf16.msra.mxu0 %v3665
      %3736 = vmatprep.subr.bf16.mxu0 0
      %3737 = vmatpush2.bf16.msra.mxu0 0
      %3738 = vmatprep.subr.bf16.mxu0 0
      %3739 = vmatpush2.bf16.msra.mxu0 0
      %3740 = vmatprep.subr.bf16.mxu0 0
      %3741 = vmatpush2.bf16.msra.mxu0 0
      %3742 = vmatprep.subr.bf16.mxu0 0
      %3743 = vmatpush2.bf16.msra.mxu0 0
      %3744 = vmatprep.subr.bf16.mxu0 0
      %3745 = vmatpush2.bf16.msra.mxu0 0
      %3746 = vmatprep.subr.bf16.mxu0 0
      %3747 = vmatpush2.bf16.msra.mxu0 0
      %3748 = vmatprep.subr.bf16.mxu0 0
      %3749 = vmatpush2.bf16.msra.mxu0 0
      %3750 = vmatprep.subr.bf16.mxu0 0
      %3751 = vmatpush2.bf16.msra.mxu0 0
      %3752 = vmatprep.mubr.bf16.mxu0 0
      %3753 = vmatmul.mubr.bf16.gmra.mxu0 %v3653
      %v3754 = vpop.f32.mrf.mxu0
      %v3755 = vadd.f32 0.0, %v3754
      %v3756 = vpop.f32.mrf.mxu0
      %v3757 = vpop.f32.mrf.mxu0
      %v3758 = vadd.f32 0.0, %v3757
      %v3759 = vpop.f32.mrf.mxu0
      %3760 = vmatprep.mubr.bf16.mxu0 0
      %3761 = vmatmul.mubr.bf16.gmra.mxu0 %v3656
      %v3762 = vpop.f32.mrf.mxu0
      %v3763 = vadd.f32 0.0, %v3762
      %v3764 = vpop.f32.mrf.mxu0
      %v3765 = vpop.f32.mrf.mxu0
      %v3766 = vadd.f32 0.0, %v3765
      %v3767 = vpop.f32.mrf.mxu0
      %3768 = vdwg.mxu0
      %v3769 = vadd.f32 %v3615, %v3702
      %v3770 = vadd.f32 %v3616, %v3704
      %v3771 = vadd.f32 %v3617, %v3755
      %v3772 = vadd.f32 %v3618, %v3706
      %v3773 = vadd.f32 %v3619, %v3708
      %v3774 = vadd.f32 %v3620, %v3758
      %v3775 = vadd.f32 %v3621, %v3712
      %v3776 = vadd.f32 %v3622, %v3714
      %v3777 = vadd.f32 %v3623, %v3763
      %v3778 = vadd.f32 %v3624, %v3716
      %v3779 = vadd.f32 %v3625, %v3718
      %v3780 = vadd.f32 %v3626, %v3766
      %v3781 = vadd.f32 %v3769, %v824
      %v3782 = vadd.f32 %v3770, %v824
      %v3783 = vadd.f32 %v3771, %v824
      %v3784 = vadd.f32 %v3772, %v829
      %v3785 = vadd.f32 %v3773, %v829
      %v3786 = vadd.f32 %v3774, %v829
      %v3787 = vadd.f32 %v3775, %v834
      %v3788 = vadd.f32 %v3776, %v834
      %v3789 = vadd.f32 %v3777, %v834
      %v3790 = vadd.f32 %v3778, %v839
      %v3791 = vadd.f32 %v3779, %v839
      %v3792 = vadd.f32 %v3780, %v839
      %v3793 = vxor.u32 %v3781, 2147483648
      %v3794 = vxor.u32 %v3782, 2147483648
      %v3795 = vxor.u32 %v3783, 2147483648
      %v3796 = vxor.u32 %v3784, 2147483648
      %v3797 = vxor.u32 %v3785, 2147483648
      %v3798 = vxor.u32 %v3786, 2147483648
      %v3799 = vxor.u32 %v3787, 2147483648
      %v3800 = vxor.u32 %v3788, 2147483648
      %v3801 = vxor.u32 %v3789, 2147483648
      %v3802 = vxor.u32 %v3790, 2147483648
      %v3803 = vxor.u32 %v3791, 2147483648
      %v3804 = vxor.u32 %v3792, 2147483648
      %v3805 = vmul.f32 %v3793, 1.442695
      %v3806 = vpow.pop %v3805
      %v3807 = vmul.f32 %v3794, 1.442695
      %v3808 = vpow.pop %v3807
      %v3809 = vmul.f32 %v3795, 1.442695
      %v3810 = vpow.pop %v3809
      %v3811 = vmul.f32 %v3796, 1.442695
      %v3812 = vpow.pop %v3811
      %v3813 = vmul.f32 %v3797, 1.442695
      %v3814 = vpow.pop %v3813
      %v3815 = vmul.f32 %v3798, 1.442695
      %v3816 = vpow.pop %v3815
      %v3817 = vmul.f32 %v3799, 1.442695
      %v3818 = vpow.pop %v3817
      %v3819 = vmul.f32 %v3800, 1.442695
      %v3820 = vpow.pop %v3819
      %v3821 = vmul.f32 %v3801, 1.442695
      %v3822 = vpow.pop %v3821
      %v3823 = vmul.f32 %v3802, 1.442695
      %v3824 = vpow.pop %v3823
      %v3825 = vmul.f32 %v3803, 1.442695
      %v3826 = vpow.pop %v3825
      %v3827 = vmul.f32 %v3804, 1.442695
      %v3828 = vpow.pop %v3827
      %v3829 = vadd.f32 %v3806, 1.0
      %v3830 = vadd.f32 %v3808, 1.0
      %v3831 = vadd.f32 %v3810, 1.0
      %v3832 = vadd.f32 %v3812, 1.0
      %v3833 = vadd.f32 %v3814, 1.0
      %v3834 = vadd.f32 %v3816, 1.0
      %v3835 = vadd.f32 %v3818, 1.0
      %v3836 = vadd.f32 %v3820, 1.0
      %v3837 = vadd.f32 %v3822, 1.0
      %v3838 = vadd.f32 %v3824, 1.0
      %v3839 = vadd.f32 %v3826, 1.0
      %v3840 = vadd.f32 %v3828, 1.0
      %v3841 = vrcp.pop %v3829
      %v3842 = vmul.f32 1.0, %v3841
      %v3843 = vrcp.pop %v3830
      %v3844 = vmul.f32 1.0, %v3843
      %v3845 = vrcp.pop %v3831
      %v3846 = vmul.f32 1.0, %v3845
      %v3847 = vrcp.pop %v3832
      %v3848 = vmul.f32 1.0, %v3847
      %v3849 = vrcp.pop %v3833
      %v3850 = vmul.f32 1.0, %v3849
      %v3851 = vrcp.pop %v3834
      %v3852 = vmul.f32 1.0, %v3851
      %v3853 = vrcp.pop %v3835
      %v3854 = vmul.f32 1.0, %v3853
      %v3855 = vrcp.pop %v3836
      %v3856 = vmul.f32 1.0, %v3855
      %v3857 = vrcp.pop %v3837
      %v3858 = vmul.f32 1.0, %v3857
      %v3859 = vrcp.pop %v3838
      %v3860 = vmul.f32 1.0, %v3859
      %v3861 = vrcp.pop %v3839
      %v3862 = vmul.f32 1.0, %v3861
      %v3863 = vrcp.pop %v3840
      %v3864 = vmul.f32 1.0, %v3863
      %v3865 = vmul.f32 %v3781, %v3842
      %v3866 = vmul.f32 %v3782, %v3844
      %v3867 = vmul.f32 %v3783, %v3846
      %v3868 = vmul.f32 %v3784, %v3848
      %v3869 = vmul.f32 %v3785, %v3850
      %v3870 = vmul.f32 %v3786, %v3852
      %v3871 = vmul.f32 %v3787, %v3854
      %v3872 = vmul.f32 %v3788, %v3856
      %v3873 = vmul.f32 %v3789, %v3858
      %v3874 = vmul.f32 %v3790, %v3860
      %v3875 = vmul.f32 %v3791, %v3862
      %v3876 = vmul.f32 %v3792, %v3864
      %v3877 = vmul.f32 %v3865, %v941
      %v3878 = vmul.f32 %v3866, %v945
      %v3879 = vmul.f32 %v3867, %v949
      %v3880 = vmul.f32 %v3868, %v941
      %v3881 = vmul.f32 %v3869, %v945
      %v3882 = vmul.f32 %v3870, %v949
      %v3883 = vmul.f32 %v3871, %v941
      %v3884 = vmul.f32 %v3872, %v945
      %v3885 = vmul.f32 %v3873, %v949
      %v3886 = vmul.f32 %v3874, %v941
      %v3887 = vmul.f32 %v3875, %v945
      %v3888 = vmul.f32 %v3876, %v949
      %v3889 = vadd.f32 %v3877, %v3878
      %v3890 = vadd.f32 %v3889, %v3879
      %3891 = vadd.xlane.f32.xlu0 %v3890
      %v3892 = vpop.xlane.xlu0 %3891
      %v3893 = vadd.f32 %v3880, %v3881
      %v3894 = vadd.f32 %v3893, %v3882
      %3895 = vadd.xlane.f32.xlu0 %v3894
      %v3896 = vpop.xlane.xlu0 %3895
      %v3897 = vadd.f32 %v3883, %v3884
      %v3898 = vadd.f32 %v3897, %v3885
      %3899 = vadd.xlane.f32.xlu0 %v3898
      %v3900 = vpop.xlane.xlu0 %3899
      %v3901 = vadd.f32 %v3886, %v3887
      %v3902 = vadd.f32 %v3901, %v3888
      %3903 = vadd.xlane.f32.xlu0 %v3902
      %v3904 = vpop.xlane.xlu0 %3903
      %s3905 = scalar_lea.vmem %s204, 128
      %3906 = vst.msk [vmem:[%s3905] sm:$0xff] %vm981, %v3892
      %3907 = vst.msk [vmem:[%s3905 + $0x8] sm:$0xff] %vm981, %v3896
      %3908 = vst.msk [vmem:[%s3905 + $0x10] sm:$0xff] %vm981, %v3900
      %3909 = vst.msk [vmem:[%s3905 + $0x18] sm:$0xff] %vm981, %v3904
      %s3910 = scalar_lea.vmem %s197, 160
      %v3911 = vld [vmem:[%s3910] sm:$0xff]
      %v3912 = vld [vmem:[%s3910 + $0x8] sm:$0xff]
      %v3913 = vld [vmem:[%s3910 + $0x10] sm:$0x33]
      %v3914 = vld [vmem:[%s3910 + $0x18] sm:$0x33]
      %v3915 = vld [vmem:[%s1] sm:$0xf]
      %v3916 = vld [vmem:[%s1 + $0x4] sm:$0xf]
      %v3917 = vld [vmem:[%s1 + $0x8] sm:$0xf]
      %v3918 = vld [vmem:[%s1 + $0xc] sm:$0xf]
      %v3919 = vld [vmem:[%s220] sm:$0xf]
      %v3920 = vld [vmem:[%s220 + $0x4] sm:$0xf]
      %v3921 = vld [vmem:[%s220 + $0x8] sm:$0xf]
      %v3922 = vld [vmem:[%s220 + $0xc] sm:$0xf]
      %v3927 = vunpack.c.l.b16 %v3919
      %v3928 = vunpack.c.l.b16 %v3920
      %v3929 = vunpack.c.l.b16 %v3921
      %v3930 = vunpack.c.l.b16 %v3922
      %v3931 = vpack.c.b16 %v3928, %v3927
      %v3932 = vpack.c.b16 %v3930, %v3929
      %v3937 = vunpack.c.l.b16 %v3911
      %v3938 = vunpack.c.h.b16 %v3911
      %v3939 = vunpack.c.l.b16 %v3912
      %v3940 = vunpack.c.h.b16 %v3912
      %v3941 = vunpack.c.l.b16 %v3913
      %v3942 = vunpack.c.h.b16 %v3913
      %v3943 = vunpack.c.l.b16 %v3914
      %v3944 = vunpack.c.h.b16 %v3914
      %v3945 = vpack.c.b16 %v3941, %v3937
      %v3946 = vpack.c.b16 %v3942, %v3938
      %v3947 = vpack.c.b16 %v3943, %v3939
      %v3948 = vpack.c.b16 %v3944, %v3940
      %3949 = vrot.lane.b32.xlu0 %v3945, 127
      %v3950 = vpop.permute.xlu0 %3949
      %3951 = vrot.lane.b32.xlu0 %v3946, 127
      %v3952 = vpop.permute.xlu0 %3951
      %3953 = vrot.lane.b32.xlu0 %v3947, 127
      %v3954 = vpop.permute.xlu0 %3953
      %3955 = vrot.lane.b32.xlu0 %v3948, 127
      %v3956 = vpop.permute.xlu0 %3955
      %v3957 = vsel %vm259, %v3950, %v3952
      %v3958 = vsel %vm259, %v3952, %v3954
      %v3959 = vsel %vm259, %v3954, %v3956
      %v3961 = vsel %vm263, %v3931, 0
      %v3964 = vsel %vm263, %v3932, 0
      %v3967 = vsel %vm270, %v3957, 0
      %v3970 = vsel %vm270, %v3958, 0
      %v3973 = vsel %vm270, %v3959, 0
      %3975 = vmatprep.subr.bf16.mxu0 0
      %3976 = vmatpush1.bf16.msra.mxu0 0
      %3977 = vmatprep.subr.bf16.mxu0 0
      %3978 = vmatpush1.bf16.msra.mxu0 0
      %3979 = vmatprep.subr.bf16.mxu0 0
      %3980 = vmatpush1.bf16.msra.mxu0 0
      %3981 = vmatprep.subr.bf16.mxu0 0
      %3982 = vmatpush1.bf16.msra.mxu0 0
      %3983 = vmatprep.subr.bf16.mxu0 0
      %3984 = vmatpush1.bf16.msra.mxu0 0
      %3985 = vmatprep.subr.bf16.mxu0 0
      %3986 = vmatpush1.bf16.msra.mxu0 0
      %3987 = vmatprep.subr.bf16.mxu0 0
      %3988 = vmatpush1.bf16.msra.mxu0 0
      %3989 = vmatprep.subr.bf16.mxu0 %v3970
      %3990 = vmatpush1.bf16.msra.mxu0 %v3967
      %3991 = vmatprep.subr.bf16.mxu0 0
      %3992 = vmatpush2.bf16.msra.mxu0 0
      %3993 = vmatprep.subr.bf16.mxu0 0
      %3994 = vmatpush2.bf16.msra.mxu0 0
      %3995 = vmatprep.subr.bf16.mxu0 0
      %3996 = vmatpush2.bf16.msra.mxu0 0
      %3997 = vmatprep.subr.bf16.mxu0 0
      %3998 = vmatpush2.bf16.msra.mxu0 0
      %3999 = vmatprep.subr.bf16.mxu0 0
      %4000 = vmatpush2.bf16.msra.mxu0 0
      %4001 = vmatprep.subr.bf16.mxu0 0
      %4002 = vmatpush2.bf16.msra.mxu0 0
      %4003 = vmatprep.subr.bf16.mxu0 0
      %4004 = vmatpush2.bf16.msra.mxu0 0
      %4005 = vmatprep.subr.bf16.mxu0 0
      %4006 = vmatpush2.bf16.msra.mxu0 0
      %4007 = vmatprep.mubr.bf16.mxu0 0
      %4008 = vmatmul.mubr.bf16.gmra.mxu0 %v3961
      %v4009 = vpop.f32.mrf.mxu0
      %v4010 = vadd.f32 0.0, %v4009
      %v4011 = vpop.f32.mrf.mxu0
      %v4012 = vadd.f32 0.0, %v4011
      %v4013 = vpop.f32.mrf.mxu0
      %v4014 = vadd.f32 0.0, %v4013
      %v4015 = vpop.f32.mrf.mxu0
      %v4016 = vadd.f32 0.0, %v4015
      %4017 = vmatprep.mubr.bf16.mxu0 0
      %4018 = vmatmul.mubr.bf16.gmra.mxu0 %v3964
      %v4019 = vpop.f32.mrf.mxu0
      %v4020 = vadd.f32 0.0, %v4019
      %v4021 = vpop.f32.mrf.mxu0
      %v4022 = vadd.f32 0.0, %v4021
      %v4023 = vpop.f32.mrf.mxu0
      %v4024 = vadd.f32 0.0, %v4023
      %v4025 = vpop.f32.mrf.mxu0
      %v4026 = vadd.f32 0.0, %v4025
      %4027 = vdwg.mxu0
      %4028 = vmatprep.subr.bf16.mxu0 0
      %4029 = vmatpush1.bf16.msra.mxu0 0
      %4030 = vmatprep.subr.bf16.mxu0 0
      %4031 = vmatpush1.bf16.msra.mxu0 0
      %4032 = vmatprep.subr.bf16.mxu0 0
      %4033 = vmatpush1.bf16.msra.mxu0 0
      %4034 = vmatprep.subr.bf16.mxu0 0
      %4035 = vmatpush1.bf16.msra.mxu0 0
      %4036 = vmatprep.subr.bf16.mxu0 0
      %4037 = vmatpush1.bf16.msra.mxu0 0
      %4038 = vmatprep.subr.bf16.mxu0 0
      %4039 = vmatpush1.bf16.msra.mxu0 0
      %4040 = vmatprep.subr.bf16.mxu0 0
      %4041 = vmatpush1.bf16.msra.mxu0 0
      %4042 = vmatprep.subr.bf16.mxu0 0
      %4043 = vmatpush1.bf16.msra.mxu0 %v3973
      %4044 = vmatprep.subr.bf16.mxu0 0
      %4045 = vmatpush2.bf16.msra.mxu0 0
      %4046 = vmatprep.subr.bf16.mxu0 0
      %4047 = vmatpush2.bf16.msra.mxu0 0
      %4048 = vmatprep.subr.bf16.mxu0 0
      %4049 = vmatpush2.bf16.msra.mxu0 0
      %4050 = vmatprep.subr.bf16.mxu0 0
      %4051 = vmatpush2.bf16.msra.mxu0 0
      %4052 = vmatprep.subr.bf16.mxu0 0
      %4053 = vmatpush2.bf16.msra.mxu0 0
      %4054 = vmatprep.subr.bf16.mxu0 0
      %4055 = vmatpush2.bf16.msra.mxu0 0
      %4056 = vmatprep.subr.bf16.mxu0 0
      %4057 = vmatpush2.bf16.msra.mxu0 0
      %4058 = vmatprep.subr.bf16.mxu0 0
      %4059 = vmatpush2.bf16.msra.mxu0 0
      %4060 = vmatprep.mubr.bf16.mxu0 0
      %4061 = vmatmul.mubr.bf16.gmra.mxu0 %v3961
      %v4062 = vpop.f32.mrf.mxu0
      %v4063 = vadd.f32 0.0, %v4062
      %v4064 = vpop.f32.mrf.mxu0
      %v4065 = vpop.f32.mrf.mxu0
      %v4066 = vadd.f32 0.0, %v4065
      %v4067 = vpop.f32.mrf.mxu0
      %4068 = vmatprep.mubr.bf16.mxu0 0
      %4069 = vmatmul.mubr.bf16.gmra.mxu0 %v3964
      %v4070 = vpop.f32.mrf.mxu0
      %v4071 = vadd.f32 0.0, %v4070
      %v4072 = vpop.f32.mrf.mxu0
      %v4073 = vpop.f32.mrf.mxu0
      %v4074 = vadd.f32 0.0, %v4073
      %v4075 = vpop.f32.mrf.mxu0
      %4076 = vdwg.mxu0
      %v4081 = vunpack.c.l.b16 %v3915
      %v4082 = vunpack.c.l.b16 %v3916
      %v4083 = vunpack.c.l.b16 %v3917
      %v4084 = vunpack.c.l.b16 %v3918
      %v4085 = vpack.c.b16 %v4082, %v4081
      %v4086 = vpack.c.b16 %v4084, %v4083
      %v4088 = vsel %vm263, %v4085, 0
      %v4091 = vsel %vm263, %v4086, 0
      %v4094 = vsel %vm270, %v3945, 0
      %v4097 = vsel %vm270, %v3946, 0
      %v4100 = vsel %vm270, %v3947, 0
      %4102 = vmatprep.subr.bf16.mxu0 0
      %4103 = vmatpush1.bf16.msra.mxu0 0
      %4104 = vmatprep.subr.bf16.mxu0 0
      %4105 = vmatpush1.bf16.msra.mxu0 0
      %4106 = vmatprep.subr.bf16.mxu0 0
      %4107 = vmatpush1.bf16.msra.mxu0 0
      %4108 = vmatprep.subr.bf16.mxu0 0
      %4109 = vmatpush1.bf16.msra.mxu0 0
      %4110 = vmatprep.subr.bf16.mxu0 0
      %4111 = vmatpush1.bf16.msra.mxu0 0
      %4112 = vmatprep.subr.bf16.mxu0 0
      %4113 = vmatpush1.bf16.msra.mxu0 0
      %4114 = vmatprep.subr.bf16.mxu0 0
      %4115 = vmatpush1.bf16.msra.mxu0 0
      %4116 = vmatprep.subr.bf16.mxu0 %v4097
      %4117 = vmatpush1.bf16.msra.mxu0 %v4094
      %4118 = vmatprep.subr.bf16.mxu0 0
      %4119 = vmatpush2.bf16.msra.mxu0 0
      %4120 = vmatprep.subr.bf16.mxu0 0
      %4121 = vmatpush2.bf16.msra.mxu0 0
      %4122 = vmatprep.subr.bf16.mxu0 0
      %4123 = vmatpush2.bf16.msra.mxu0 0
      %4124 = vmatprep.subr.bf16.mxu0 0
      %4125 = vmatpush2.bf16.msra.mxu0 0
      %4126 = vmatprep.subr.bf16.mxu0 0
      %4127 = vmatpush2.bf16.msra.mxu0 0
      %4128 = vmatprep.subr.bf16.mxu0 0
      %4129 = vmatpush2.bf16.msra.mxu0 0
      %4130 = vmatprep.subr.bf16.mxu0 0
      %4131 = vmatpush2.bf16.msra.mxu0 0
      %4132 = vmatprep.subr.bf16.mxu0 0
      %4133 = vmatpush2.bf16.msra.mxu0 0
      %4134 = vmatprep.mubr.bf16.mxu0 0
      %4135 = vmatmul.mubr.bf16.gmra.mxu0 %v4088
      %v4136 = vpop.f32.mrf.mxu0
      %v4137 = vadd.f32 %v4010, %v4136
      %v4138 = vpop.f32.mrf.mxu0
      %v4139 = vadd.f32 %v4012, %v4138
      %v4140 = vpop.f32.mrf.mxu0
      %v4141 = vadd.f32 %v4014, %v4140
      %v4142 = vpop.f32.mrf.mxu0
      %v4143 = vadd.f32 %v4016, %v4142
      %4144 = vmatprep.mubr.bf16.mxu0 0
      %4145 = vmatmul.mubr.bf16.gmra.mxu0 %v4091
      %v4146 = vpop.f32.mrf.mxu0
      %v4147 = vadd.f32 %v4020, %v4146
      %v4148 = vpop.f32.mrf.mxu0
      %v4149 = vadd.f32 %v4022, %v4148
      %v4150 = vpop.f32.mrf.mxu0
      %v4151 = vadd.f32 %v4024, %v4150
      %v4152 = vpop.f32.mrf.mxu0
      %v4153 = vadd.f32 %v4026, %v4152
      %4154 = vdwg.mxu0
      %4155 = vmatprep.subr.bf16.mxu0 0
      %4156 = vmatpush1.bf16.msra.mxu0 0
      %4157 = vmatprep.subr.bf16.mxu0 0
      %4158 = vmatpush1.bf16.msra.mxu0 0
      %4159 = vmatprep.subr.bf16.mxu0 0
      %4160 = vmatpush1.bf16.msra.mxu0 0
      %4161 = vmatprep.subr.bf16.mxu0 0
      %4162 = vmatpush1.bf16.msra.mxu0 0
      %4163 = vmatprep.subr.bf16.mxu0 0
      %4164 = vmatpush1.bf16.msra.mxu0 0
      %4165 = vmatprep.subr.bf16.mxu0 0
      %4166 = vmatpush1.bf16.msra.mxu0 0
      %4167 = vmatprep.subr.bf16.mxu0 0
      %4168 = vmatpush1.bf16.msra.mxu0 0
      %4169 = vmatprep.subr.bf16.mxu0 0
      %4170 = vmatpush1.bf16.msra.mxu0 %v4100
      %4171 = vmatprep.subr.bf16.mxu0 0
      %4172 = vmatpush2.bf16.msra.mxu0 0
      %4173 = vmatprep.subr.bf16.mxu0 0
      %4174 = vmatpush2.bf16.msra.mxu0 0
      %4175 = vmatprep.subr.bf16.mxu0 0
      %4176 = vmatpush2.bf16.msra.mxu0 0
      %4177 = vmatprep.subr.bf16.mxu0 0
      %4178 = vmatpush2.bf16.msra.mxu0 0
      %4179 = vmatprep.subr.bf16.mxu0 0
      %4180 = vmatpush2.bf16.msra.mxu0 0
      %4181 = vmatprep.subr.bf16.mxu0 0
      %4182 = vmatpush2.bf16.msra.mxu0 0
      %4183 = vmatprep.subr.bf16.mxu0 0
      %4184 = vmatpush2.bf16.msra.mxu0 0
      %4185 = vmatprep.subr.bf16.mxu0 0
      %4186 = vmatpush2.bf16.msra.mxu0 0
      %4187 = vmatprep.mubr.bf16.mxu0 0
      %4188 = vmatmul.mubr.bf16.gmra.mxu0 %v4088
      %v4189 = vpop.f32.mrf.mxu0
      %v4190 = vadd.f32 %v4063, %v4189
      %v4191 = vpop.f32.mrf.mxu0
      %v4192 = vpop.f32.mrf.mxu0
      %v4193 = vadd.f32 %v4066, %v4192
      %v4194 = vpop.f32.mrf.mxu0
      %4195 = vmatprep.mubr.bf16.mxu0 0
      %4196 = vmatmul.mubr.bf16.gmra.mxu0 %v4091
      %v4197 = vpop.f32.mrf.mxu0
      %v4198 = vadd.f32 %v4071, %v4197
      %v4199 = vpop.f32.mrf.mxu0
      %v4200 = vpop.f32.mrf.mxu0
      %v4201 = vadd.f32 %v4074, %v4200
      %v4202 = vpop.f32.mrf.mxu0
      %4203 = vdwg.mxu0
      %v4204 = vld [vmem:[%s509] sm:$0xf]
      %v4205 = vld [vmem:[%s509 + $0x4] sm:$0xf]
      %v4206 = vld [vmem:[%s509 + $0x8] sm:$0xf]
      %v4207 = vld [vmem:[%s509 + $0xc] sm:$0xf]
      %v4212 = vunpack.c.l.b16 %v4204
      %v4213 = vunpack.c.l.b16 %v4205
      %v4214 = vunpack.c.l.b16 %v4206
      %v4215 = vunpack.c.l.b16 %v4207
      %v4216 = vpack.c.b16 %v4213, %v4212
      %v4217 = vpack.c.b16 %v4215, %v4214
      %4218 = vrot.lane.b32.xlu0 %v3945, 111
      %v4219 = vpop.permute.xlu0 %4218
      %4220 = vrot.lane.b32.xlu0 %v3946, 111
      %v4221 = vpop.permute.xlu0 %4220
      %4222 = vrot.lane.b32.xlu0 %v3947, 111
      %v4223 = vpop.permute.xlu0 %4222
      %4224 = vrot.lane.b32.xlu0 %v3948, 111
      %v4225 = vpop.permute.xlu0 %4224
      %v4226 = vsel %vm532, %v4219, %v4221
      %v4227 = vsel %vm532, %v4221, %v4223
      %v4228 = vsel %vm532, %v4223, %v4225
      %v4230 = vsel %vm263, %v4216, 0
      %v4233 = vsel %vm263, %v4217, 0
      %v4236 = vsel %vm270, %v4226, 0
      %v4239 = vsel %vm270, %v4227, 0
      %v4242 = vsel %vm270, %v4228, 0
      %4244 = vmatprep.subr.bf16.mxu0 0
      %4245 = vmatpush1.bf16.msra.mxu0 0
      %4246 = vmatprep.subr.bf16.mxu0 0
      %4247 = vmatpush1.bf16.msra.mxu0 0
      %4248 = vmatprep.subr.bf16.mxu0 0
      %4249 = vmatpush1.bf16.msra.mxu0 0
      %4250 = vmatprep.subr.bf16.mxu0 0
      %4251 = vmatpush1.bf16.msra.mxu0 0
      %4252 = vmatprep.subr.bf16.mxu0 0
      %4253 = vmatpush1.bf16.msra.mxu0 0
      %4254 = vmatprep.subr.bf16.mxu0 0
      %4255 = vmatpush1.bf16.msra.mxu0 0
      %4256 = vmatprep.subr.bf16.mxu0 0
      %4257 = vmatpush1.bf16.msra.mxu0 0
      %4258 = vmatprep.subr.bf16.mxu0 %v4239
      %4259 = vmatpush1.bf16.msra.mxu0 %v4236
      %4260 = vmatprep.subr.bf16.mxu0 0
      %4261 = vmatpush2.bf16.msra.mxu0 0
      %4262 = vmatprep.subr.bf16.mxu0 0
      %4263 = vmatpush2.bf16.msra.mxu0 0
      %4264 = vmatprep.subr.bf16.mxu0 0
      %4265 = vmatpush2.bf16.msra.mxu0 0
      %4266 = vmatprep.subr.bf16.mxu0 0
      %4267 = vmatpush2.bf16.msra.mxu0 0
      %4268 = vmatprep.subr.bf16.mxu0 0
      %4269 = vmatpush2.bf16.msra.mxu0 0
      %4270 = vmatprep.subr.bf16.mxu0 0
      %4271 = vmatpush2.bf16.msra.mxu0 0
      %4272 = vmatprep.subr.bf16.mxu0 0
      %4273 = vmatpush2.bf16.msra.mxu0 0
      %4274 = vmatprep.subr.bf16.mxu0 0
      %4275 = vmatpush2.bf16.msra.mxu0 0
      %4276 = vmatprep.mubr.bf16.mxu0 0
      %4277 = vmatmul.mubr.bf16.gmra.mxu0 %v4230
      %v4278 = vpop.f32.mrf.mxu0
      %v4279 = vadd.f32 0.0, %v4278
      %v4280 = vpop.f32.mrf.mxu0
      %v4281 = vadd.f32 0.0, %v4280
      %v4282 = vpop.f32.mrf.mxu0
      %v4283 = vadd.f32 0.0, %v4282
      %v4284 = vpop.f32.mrf.mxu0
      %v4285 = vadd.f32 0.0, %v4284
      %4286 = vmatprep.mubr.bf16.mxu0 0
      %4287 = vmatmul.mubr.bf16.gmra.mxu0 %v4233
      %v4288 = vpop.f32.mrf.mxu0
      %v4289 = vadd.f32 0.0, %v4288
      %v4290 = vpop.f32.mrf.mxu0
      %v4291 = vadd.f32 0.0, %v4290
      %v4292 = vpop.f32.mrf.mxu0
      %v4293 = vadd.f32 0.0, %v4292
      %v4294 = vpop.f32.mrf.mxu0
      %v4295 = vadd.f32 0.0, %v4294
      %4296 = vdwg.mxu0
      %4297 = vmatprep.subr.bf16.mxu0 0
      %4298 = vmatpush1.bf16.msra.mxu0 0
      %4299 = vmatprep.subr.bf16.mxu0 0
      %4300 = vmatpush1.bf16.msra.mxu0 0
      %4301 = vmatprep.subr.bf16.mxu0 0
      %4302 = vmatpush1.bf16.msra.mxu0 0
      %4303 = vmatprep.subr.bf16.mxu0 0
      %4304 = vmatpush1.bf16.msra.mxu0 0
      %4305 = vmatprep.subr.bf16.mxu0 0
      %4306 = vmatpush1.bf16.msra.mxu0 0
      %4307 = vmatprep.subr.bf16.mxu0 0
      %4308 = vmatpush1.bf16.msra.mxu0 0
      %4309 = vmatprep.subr.bf16.mxu0 0
      %4310 = vmatpush1.bf16.msra.mxu0 0
      %4311 = vmatprep.subr.bf16.mxu0 0
      %4312 = vmatpush1.bf16.msra.mxu0 %v4242
      %4313 = vmatprep.subr.bf16.mxu0 0
      %4314 = vmatpush2.bf16.msra.mxu0 0
      %4315 = vmatprep.subr.bf16.mxu0 0
      %4316 = vmatpush2.bf16.msra.mxu0 0
      %4317 = vmatprep.subr.bf16.mxu0 0
      %4318 = vmatpush2.bf16.msra.mxu0 0
      %4319 = vmatprep.subr.bf16.mxu0 0
      %4320 = vmatpush2.bf16.msra.mxu0 0
      %4321 = vmatprep.subr.bf16.mxu0 0
      %4322 = vmatpush2.bf16.msra.mxu0 0
      %4323 = vmatprep.subr.bf16.mxu0 0
      %4324 = vmatpush2.bf16.msra.mxu0 0
      %4325 = vmatprep.subr.bf16.mxu0 0
      %4326 = vmatpush2.bf16.msra.mxu0 0
      %4327 = vmatprep.subr.bf16.mxu0 0
      %4328 = vmatpush2.bf16.msra.mxu0 0
      %4329 = vmatprep.mubr.bf16.mxu0 0
      %4330 = vmatmul.mubr.bf16.gmra.mxu0 %v4230
      %v4331 = vpop.f32.mrf.mxu0
      %v4332 = vadd.f32 0.0, %v4331
      %v4333 = vpop.f32.mrf.mxu0
      %v4334 = vpop.f32.mrf.mxu0
      %v4335 = vadd.f32 0.0, %v4334
      %v4336 = vpop.f32.mrf.mxu0
      %4337 = vmatprep.mubr.bf16.mxu0 0
      %4338 = vmatmul.mubr.bf16.gmra.mxu0 %v4233
      %v4339 = vpop.f32.mrf.mxu0
      %v4340 = vadd.f32 0.0, %v4339
      %v4341 = vpop.f32.mrf.mxu0
      %v4342 = vpop.f32.mrf.mxu0
      %v4343 = vadd.f32 0.0, %v4342
      %v4344 = vpop.f32.mrf.mxu0
      %4345 = vdwg.mxu0
      %v4346 = vadd.f32 %v4137, %v4279
      %v4347 = vadd.f32 %v4139, %v4281
      %v4348 = vadd.f32 %v4190, %v4332
      %v4349 = vadd.f32 %v4141, %v4283
      %v4350 = vadd.f32 %v4143, %v4285
      %v4351 = vadd.f32 %v4193, %v4335
      %v4352 = vadd.f32 %v4147, %v4289
      %v4353 = vadd.f32 %v4149, %v4291
      %v4354 = vadd.f32 %v4198, %v4340
      %v4355 = vadd.f32 %v4151, %v4293
      %v4356 = vadd.f32 %v4153, %v4295
      %v4357 = vadd.f32 %v4201, %v4343
      %v4358 = vld [vmem:[%s665] sm:$0xf]
      %v4359 = vld [vmem:[%s665 + $0x4] sm:$0xf]
      %v4360 = vld [vmem:[%s665 + $0x8] sm:$0xf]
      %v4361 = vld [vmem:[%s665 + $0xc] sm:$0xf]
      %v4366 = vunpack.c.l.b16 %v4358
      %v4367 = vunpack.c.l.b16 %v4359
      %v4368 = vunpack.c.l.b16 %v4360
      %v4369 = vunpack.c.l.b16 %v4361
      %v4370 = vpack.c.b16 %v4367, %v4366
      %v4371 = vpack.c.b16 %v4369, %v4368
      %4372 = vrot.lane.b32.xlu0 %v3945, 110
      %v4373 = vpop.permute.xlu0 %4372
      %4374 = vrot.lane.b32.xlu0 %v3946, 110
      %v4375 = vpop.permute.xlu0 %4374
      %4376 = vrot.lane.b32.xlu0 %v3947, 110
      %v4377 = vpop.permute.xlu0 %4376
      %4378 = vrot.lane.b32.xlu0 %v3948, 110
      %v4379 = vpop.permute.xlu0 %4378
      %v4380 = vsel %vm688, %v4373, %v4375
      %v4381 = vsel %vm688, %v4375, %v4377
      %v4382 = vsel %vm688, %v4377, %v4379
      %v4384 = vsel %vm263, %v4370, 0
      %v4387 = vsel %vm263, %v4371, 0
      %v4390 = vsel %vm270, %v4380, 0
      %v4393 = vsel %vm270, %v4381, 0
      %v4396 = vsel %vm270, %v4382, 0
      %4398 = vmatprep.subr.bf16.mxu0 0
      %4399 = vmatpush1.bf16.msra.mxu0 0
      %4400 = vmatprep.subr.bf16.mxu0 0
      %4401 = vmatpush1.bf16.msra.mxu0 0
      %4402 = vmatprep.subr.bf16.mxu0 0
      %4403 = vmatpush1.bf16.msra.mxu0 0
      %4404 = vmatprep.subr.bf16.mxu0 0
      %4405 = vmatpush1.bf16.msra.mxu0 0
      %4406 = vmatprep.subr.bf16.mxu0 0
      %4407 = vmatpush1.bf16.msra.mxu0 0
      %4408 = vmatprep.subr.bf16.mxu0 0
      %4409 = vmatpush1.bf16.msra.mxu0 0
      %4410 = vmatprep.subr.bf16.mxu0 0
      %4411 = vmatpush1.bf16.msra.mxu0 0
      %4412 = vmatprep.subr.bf16.mxu0 %v4393
      %4413 = vmatpush1.bf16.msra.mxu0 %v4390
      %4414 = vmatprep.subr.bf16.mxu0 0
      %4415 = vmatpush2.bf16.msra.mxu0 0
      %4416 = vmatprep.subr.bf16.mxu0 0
      %4417 = vmatpush2.bf16.msra.mxu0 0
      %4418 = vmatprep.subr.bf16.mxu0 0
      %4419 = vmatpush2.bf16.msra.mxu0 0
      %4420 = vmatprep.subr.bf16.mxu0 0
      %4421 = vmatpush2.bf16.msra.mxu0 0
      %4422 = vmatprep.subr.bf16.mxu0 0
      %4423 = vmatpush2.bf16.msra.mxu0 0
      %4424 = vmatprep.subr.bf16.mxu0 0
      %4425 = vmatpush2.bf16.msra.mxu0 0
      %4426 = vmatprep.subr.bf16.mxu0 0
      %4427 = vmatpush2.bf16.msra.mxu0 0
      %4428 = vmatprep.subr.bf16.mxu0 0
      %4429 = vmatpush2.bf16.msra.mxu0 0
      %4430 = vmatprep.mubr.bf16.mxu0 0
      %4431 = vmatmul.mubr.bf16.gmra.mxu0 %v4384
      %v4432 = vpop.f32.mrf.mxu0
      %v4433 = vadd.f32 0.0, %v4432
      %v4434 = vpop.f32.mrf.mxu0
      %v4435 = vadd.f32 0.0, %v4434
      %v4436 = vpop.f32.mrf.mxu0
      %v4437 = vadd.f32 0.0, %v4436
      %v4438 = vpop.f32.mrf.mxu0
      %v4439 = vadd.f32 0.0, %v4438
      %4440 = vmatprep.mubr.bf16.mxu0 0
      %4441 = vmatmul.mubr.bf16.gmra.mxu0 %v4387
      %v4442 = vpop.f32.mrf.mxu0
      %v4443 = vadd.f32 0.0, %v4442
      %v4444 = vpop.f32.mrf.mxu0
      %v4445 = vadd.f32 0.0, %v4444
      %v4446 = vpop.f32.mrf.mxu0
      %v4447 = vadd.f32 0.0, %v4446
      %v4448 = vpop.f32.mrf.mxu0
      %v4449 = vadd.f32 0.0, %v4448
      %4450 = vdwg.mxu0
      %4451 = vmatprep.subr.bf16.mxu0 0
      %4452 = vmatpush1.bf16.msra.mxu0 0
      %4453 = vmatprep.subr.bf16.mxu0 0
      %4454 = vmatpush1.bf16.msra.mxu0 0
      %4455 = vmatprep.subr.bf16.mxu0 0
      %4456 = vmatpush1.bf16.msra.mxu0 0
      %4457 = vmatprep.subr.bf16.mxu0 0
      %4458 = vmatpush1.bf16.msra.mxu0 0
      %4459 = vmatprep.subr.bf16.mxu0 0
      %4460 = vmatpush1.bf16.msra.mxu0 0
      %4461 = vmatprep.subr.bf16.mxu0 0
      %4462 = vmatpush1.bf16.msra.mxu0 0
      %4463 = vmatprep.subr.bf16.mxu0 0
      %4464 = vmatpush1.bf16.msra.mxu0 0
      %4465 = vmatprep.subr.bf16.mxu0 0
      %4466 = vmatpush1.bf16.msra.mxu0 %v4396
      %4467 = vmatprep.subr.bf16.mxu0 0
      %4468 = vmatpush2.bf16.msra.mxu0 0
      %4469 = vmatprep.subr.bf16.mxu0 0
      %4470 = vmatpush2.bf16.msra.mxu0 0
      %4471 = vmatprep.subr.bf16.mxu0 0
      %4472 = vmatpush2.bf16.msra.mxu0 0
      %4473 = vmatprep.subr.bf16.mxu0 0
      %4474 = vmatpush2.bf16.msra.mxu0 0
      %4475 = vmatprep.subr.bf16.mxu0 0
      %4476 = vmatpush2.bf16.msra.mxu0 0
      %4477 = vmatprep.subr.bf16.mxu0 0
      %4478 = vmatpush2.bf16.msra.mxu0 0
      %4479 = vmatprep.subr.bf16.mxu0 0
      %4480 = vmatpush2.bf16.msra.mxu0 0
      %4481 = vmatprep.subr.bf16.mxu0 0
      %4482 = vmatpush2.bf16.msra.mxu0 0
      %4483 = vmatprep.mubr.bf16.mxu0 0
      %4484 = vmatmul.mubr.bf16.gmra.mxu0 %v4384
      %v4485 = vpop.f32.mrf.mxu0
      %v4486 = vadd.f32 0.0, %v4485
      %v4487 = vpop.f32.mrf.mxu0
      %v4488 = vpop.f32.mrf.mxu0
      %v4489 = vadd.f32 0.0, %v4488
      %v4490 = vpop.f32.mrf.mxu0
      %4491 = vmatprep.mubr.bf16.mxu0 0
      %4492 = vmatmul.mubr.bf16.gmra.mxu0 %v4387
      %v4493 = vpop.f32.mrf.mxu0
      %v4494 = vadd.f32 0.0, %v4493
      %v4495 = vpop.f32.mrf.mxu0
      %v4496 = vpop.f32.mrf.mxu0
      %v4497 = vadd.f32 0.0, %v4496
      %v4498 = vpop.f32.mrf.mxu0
      %4499 = vdwg.mxu0
      %v4500 = vadd.f32 %v4346, %v4433
      %v4501 = vadd.f32 %v4347, %v4435
      %v4502 = vadd.f32 %v4348, %v4486
      %v4503 = vadd.f32 %v4349, %v4437
      %v4504 = vadd.f32 %v4350, %v4439
      %v4505 = vadd.f32 %v4351, %v4489
      %v4506 = vadd.f32 %v4352, %v4443
      %v4507 = vadd.f32 %v4353, %v4445
      %v4508 = vadd.f32 %v4354, %v4494
      %v4509 = vadd.f32 %v4355, %v4447
      %v4510 = vadd.f32 %v4356, %v4449
      %v4511 = vadd.f32 %v4357, %v4497
      %v4512 = vadd.f32 %v4500, %v824
      %v4513 = vadd.f32 %v4501, %v824
      %v4514 = vadd.f32 %v4502, %v824
      %v4515 = vadd.f32 %v4503, %v829
      %v4516 = vadd.f32 %v4504, %v829
      %v4517 = vadd.f32 %v4505, %v829
      %v4518 = vadd.f32 %v4506, %v834
      %v4519 = vadd.f32 %v4507, %v834
      %v4520 = vadd.f32 %v4508, %v834
      %v4521 = vadd.f32 %v4509, %v839
      %v4522 = vadd.f32 %v4510, %v839
      %v4523 = vadd.f32 %v4511, %v839
      %v4524 = vxor.u32 %v4512, 2147483648
      %v4525 = vxor.u32 %v4513, 2147483648
      %v4526 = vxor.u32 %v4514, 2147483648
      %v4527 = vxor.u32 %v4515, 2147483648
      %v4528 = vxor.u32 %v4516, 2147483648
      %v4529 = vxor.u32 %v4517, 2147483648
      %v4530 = vxor.u32 %v4518, 2147483648
      %v4531 = vxor.u32 %v4519, 2147483648
      %v4532 = vxor.u32 %v4520, 2147483648
      %v4533 = vxor.u32 %v4521, 2147483648
      %v4534 = vxor.u32 %v4522, 2147483648
      %v4535 = vxor.u32 %v4523, 2147483648
      %v4536 = vmul.f32 %v4524, 1.442695
      %v4537 = vpow.pop %v4536
      %v4538 = vmul.f32 %v4525, 1.442695
      %v4539 = vpow.pop %v4538
      %v4540 = vmul.f32 %v4526, 1.442695
      %v4541 = vpow.pop %v4540
      %v4542 = vmul.f32 %v4527, 1.442695
      %v4543 = vpow.pop %v4542
      %v4544 = vmul.f32 %v4528, 1.442695
      %v4545 = vpow.pop %v4544
      %v4546 = vmul.f32 %v4529, 1.442695
      %v4547 = vpow.pop %v4546
      %v4548 = vmul.f32 %v4530, 1.442695
      %v4549 = vpow.pop %v4548
      %v4550 = vmul.f32 %v4531, 1.442695
      %v4551 = vpow.pop %v4550
      %v4552 = vmul.f32 %v4532, 1.442695
      %v4553 = vpow.pop %v4552
      %v4554 = vmul.f32 %v4533, 1.442695
      %v4555 = vpow.pop %v4554
      %v4556 = vmul.f32 %v4534, 1.442695
      %v4557 = vpow.pop %v4556
      %v4558 = vmul.f32 %v4535, 1.442695
      %v4559 = vpow.pop %v4558
      %v4560 = vadd.f32 %v4537, 1.0
      %v4561 = vadd.f32 %v4539, 1.0
      %v4562 = vadd.f32 %v4541, 1.0
      %v4563 = vadd.f32 %v4543, 1.0
      %v4564 = vadd.f32 %v4545, 1.0
      %v4565 = vadd.f32 %v4547, 1.0
      %v4566 = vadd.f32 %v4549, 1.0
      %v4567 = vadd.f32 %v4551, 1.0
      %v4568 = vadd.f32 %v4553, 1.0
      %v4569 = vadd.f32 %v4555, 1.0
      %v4570 = vadd.f32 %v4557, 1.0
      %v4571 = vadd.f32 %v4559, 1.0
      %v4572 = vrcp.pop %v4560
      %v4573 = vmul.f32 1.0, %v4572
      %v4574 = vrcp.pop %v4561
      %v4575 = vmul.f32 1.0, %v4574
      %v4576 = vrcp.pop %v4562
      %v4577 = vmul.f32 1.0, %v4576
      %v4578 = vrcp.pop %v4563
      %v4579 = vmul.f32 1.0, %v4578
      %v4580 = vrcp.pop %v4564
      %v4581 = vmul.f32 1.0, %v4580
      %v4582 = vrcp.pop %v4565
      %v4583 = vmul.f32 1.0, %v4582
      %v4584 = vrcp.pop %v4566
      %v4585 = vmul.f32 1.0, %v4584
      %v4586 = vrcp.pop %v4567
      %v4587 = vmul.f32 1.0, %v4586
      %v4588 = vrcp.pop %v4568
      %v4589 = vmul.f32 1.0, %v4588
      %v4590 = vrcp.pop %v4569
      %v4591 = vmul.f32 1.0, %v4590
      %v4592 = vrcp.pop %v4570
      %v4593 = vmul.f32 1.0, %v4592
      %v4594 = vrcp.pop %v4571
      %v4595 = vmul.f32 1.0, %v4594
      %v4596 = vmul.f32 %v4512, %v4573
      %v4597 = vmul.f32 %v4513, %v4575
      %v4598 = vmul.f32 %v4514, %v4577
      %v4599 = vmul.f32 %v4515, %v4579
      %v4600 = vmul.f32 %v4516, %v4581
      %v4601 = vmul.f32 %v4517, %v4583
      %v4602 = vmul.f32 %v4518, %v4585
      %v4603 = vmul.f32 %v4519, %v4587
      %v4604 = vmul.f32 %v4520, %v4589
      %v4605 = vmul.f32 %v4521, %v4591
      %v4606 = vmul.f32 %v4522, %v4593
      %v4607 = vmul.f32 %v4523, %v4595
      %v4608 = vmul.f32 %v4596, %v941
      %v4609 = vmul.f32 %v4597, %v945
      %v4610 = vmul.f32 %v4598, %v949
      %v4611 = vmul.f32 %v4599, %v941
      %v4612 = vmul.f32 %v4600, %v945
      %v4613 = vmul.f32 %v4601, %v949
      %v4614 = vmul.f32 %v4602, %v941
      %v4615 = vmul.f32 %v4603, %v945
      %v4616 = vmul.f32 %v4604, %v949
      %v4617 = vmul.f32 %v4605, %v941
      %v4618 = vmul.f32 %v4606, %v945
      %v4619 = vmul.f32 %v4607, %v949
      %v4620 = vadd.f32 %v4608, %v4609
      %v4621 = vadd.f32 %v4620, %v4610
      %4622 = vadd.xlane.f32.xlu0 %v4621
      %v4623 = vpop.xlane.xlu0 %4622
      %v4624 = vadd.f32 %v4611, %v4612
      %v4625 = vadd.f32 %v4624, %v4613
      %4626 = vadd.xlane.f32.xlu0 %v4625
      %v4627 = vpop.xlane.xlu0 %4626
      %v4628 = vadd.f32 %v4614, %v4615
      %v4629 = vadd.f32 %v4628, %v4616
      %4630 = vadd.xlane.f32.xlu0 %v4629
      %v4631 = vpop.xlane.xlu0 %4630
      %v4632 = vadd.f32 %v4617, %v4618
      %v4633 = vadd.f32 %v4632, %v4619
      %4634 = vadd.xlane.f32.xlu0 %v4633
      %v4635 = vpop.xlane.xlu0 %4634
      %s4636 = scalar_lea.vmem %s204, 160
      %4637 = vst.msk [vmem:[%s4636] sm:$0xff] %vm981, %v4623
      %4638 = vst.msk [vmem:[%s4636 + $0x8] sm:$0xff] %vm981, %v4627
      %4639 = vst.msk [vmem:[%s4636 + $0x10] sm:$0xff] %vm981, %v4631
      %4640 = vst.msk [vmem:[%s4636 + $0x18] sm:$0xff] %vm981, %v4635
      %s4641 = smul.u32 6, %s15
      %p4642 = scmp.lt.s32.totalorder %s4641, 17
      %s4643 = scalar_select %p4642, %s4641, 17
      %s4644 = smul.addr %s4643, 4
      %s4645 = smul.addr %s4644, 8
      %s4646 = scalar_lea.vmem %s4, %s4645
      // Predicated region
      $region37: #{heffann_forward.2} parent=35 // pred_check
        %p4647 = pneg %p122
      $region38: #{heffann_forward.2} parent=35 // pred_check_branch
        %4649 = sbr.rel (%p4647) target = $region40
      $region39: #{heffann_forward.2} parent=35 // pred_region
        %s4650 = smul.u32 6, %s15
      $region40: #{heffann_forward.2} parent=35 // pred_fallthru
        _
    $region36: #{heffann_forward.2} parent=5 // pred_fallthru
      _
    %p4651 = scmp.le.s32.totalorder 2, %s10
    // Predicated region
    $region41: #{heffann_forward.2} parent=5 // pred_check
      %p4652 = pneg %p4651
    $region42: #{heffann_forward.2} parent=5 // pred_check_branch
      %4654 = sbr.rel (%p4652) target = $region44
    $region43: #{heffann_forward.2} parent=5 // pred_region
      %s4655 = ssub.s32 %s10, 2
      // Predicated region
      $region45: #{heffann_forward.2} parent=43 // pred_check
        %p4656 = pneg %p128
      $region46: #{heffann_forward.2} parent=43 // pred_check_branch
        %4658 = sbr.rel (%p4656) target = $region48
      $region47: #{heffann_forward.2} parent=43 // pred_region
        %s4659 = smul.u32 6, %s16
        %p4660 = scmp.lt.s32.totalorder %s4659, 17
        %s4661 = scalar_select %p4660, %s4659, 17
        %s4662 = smul.addr %s4661, 4
        %s4663 = smul.addr %s4662, 8
        %s4664 = scalar_lea.vmem %s4, %s4663
      $region48: #{heffann_forward.2} parent=43 // pred_fallthru
        _
    $region44: #{heffann_forward.2} parent=5 // pred_fallthru
      _
  $region6: #{heffann_forward.2} parent=0 // loop_footer
    %s14 = sadd.s32 1, %s10
  $region7: #{heffann_forward.2} parent=0 // loop_footer_branch
    %9 = sbr.rel target = $region3
  $region8: #{heffann_forward.2} parent=0 // loop_exit
    _

</llo_original>
